<compile_context>
chip_gen: v6e
topology: v6e:2x2x1
jax: 0.10.0
libtpu: 0.0.40
codegen_flags: <defaults>
</compile_context>

<pallas_src>
import functools

import jax
import jax.numpy as jnp
from jax import lax
from jax.experimental import pallas as pl
from jax.experimental.pallas import tpu as pltpu


# ----------------------------------------------------------------------------
# Pallas kernel: T tap-matmuls accumulated in f32 VMEM, fused bias (+ ReLU),
# single dense store of the whole (Mb, Cout) block.
# ----------------------------------------------------------------------------
def _conv_mm_kernel(x_ref, w_ref, b_ref, o_ref, acc_ref, *, taps, apply_relu):
    # x_ref : (T, Mb, Cin)   compute dtype (bf16)
    # w_ref : (T, Cin, Cout) compute dtype (bf16)
    # b_ref : (1, Cout)      f32
    # o_ref : (Mb, Cout)     f32
    # acc_ref: (Mb, Cout)    f32 VMEM scratch
    acc_ref[...] = jnp.zeros_like(acc_ref)

    def body(t, carry):
        acc_ref[...] += jnp.dot(x_ref[t], w_ref[t],
                                preferred_element_type=jnp.float32)
        return carry

    lax.fori_loop(0, taps, body, 0, unroll=True)

    acc = acc_ref[...] + b_ref[...]          # f32 epilogue (v5e: no bf16 VPU)
    if apply_relu:
        acc = jnp.maximum(acc, 0.0)
    o_ref[...] = acc.astype(o_ref.dtype)


# ----------------------------------------------------------------------------
# Conv wrapper: replicate pad + strided tap extraction + one Pallas call.
# ----------------------------------------------------------------------------
def conv2d_pallas(x, w, b, *, stride=1, padding=0, relu=False,
                  compute_dtype=jnp.bfloat16):
    """NHWC conv via a single Pallas call (tap-major im2col + MXU matmuls).

    x: (N, H, W, Cin) f32 ; w: (KH, KW, Cin, Cout) f32 ; b: (Cout,) f32
    Padding is replicate ('edge'), matching PyTorch padding_mode='replicate'.
    """
    x = x.astype(jnp.float32)
    if padding > 0:
        x = jnp.pad(x, ((0, 0), (padding, padding), (padding, padding), (0, 0)),
                    mode="edge")
    N, Hp, Wp, Cin = x.shape
    KH, KW, _, Cout = w.shape
    Ho = (Hp - KH) // stride + 1
    Wo = (Wp - KW) // stride + 1
    M = N * Ho * Wo
    T = KH * KW

    # im2col-lite: one aligned (M, Cin) slab per tap; stride is folded in here
    # so the kernel never computes outputs that would be discarded.
    taps = []
    for kh in range(KH):
        for kw in range(KW):
            v = x[:, kh:kh + stride * Ho:stride, kw:kw + stride * Wo:stride, :]
            taps.append(v.reshape(M, Cin))
    xt = jnp.stack(taps, axis=0).astype(compute_dtype)       # (T, M, Cin)
    wt = w.reshape(T, Cin, Cout).astype(compute_dtype)       # (T, Cin, Cout)
    b2 = b.reshape(1, Cout).astype(jnp.float32)

    # Two "parallel" M blocks (keeps both v7x TensorCores busy) whenever the
    # halves stay sublane-aligned; otherwise a single block.
    gm = 2 if (M % 16 == 0) else 1
    Mb = M // gm
    # TODO(synk): for real image resolutions, tile M further (output-row tiles
    # with a +2 halo) and set vmem_limit_bytes explicitly (v7x has 64 MiB VMEM).

    out = pl.pallas_call(
        functools.partial(_conv_mm_kernel, taps=T, apply_relu=relu),
        out_shape=jax.ShapeDtypeStruct((M, Cout), jnp.float32),
        grid=(gm,),
        in_specs=[
            pl.BlockSpec((T, Mb, Cin), lambda m: (0, m, 0)),
            pl.BlockSpec((T, Cin, Cout), lambda m: (0, 0, 0)),
            pl.BlockSpec((1, Cout), lambda m: (0, 0)),
        ],
        out_specs=pl.BlockSpec((Mb, Cout), lambda m: (m, 0)),
        scratch_shapes=[pltpu.VMEM((Mb, Cout), jnp.float32)],
        compiler_params=pltpu.CompilerParams(
            dimension_semantics=("parallel",)),
    )(xt, wt, b2)

    return out.reshape(N, Ho, Wo, Cout)


# ----------------------------------------------------------------------------
# Glue ops (plain JAX)
# ----------------------------------------------------------------------------
def nearest_resize(x, out_h, out_w):
    """Matches torch F.interpolate(..., mode='nearest'): src = floor(dst*in/out)."""
    _, H, W, _ = x.shape
    idx_h = (jnp.arange(out_h) * H) // out_h
    idx_w = (jnp.arange(out_w) * W) // out_w
    return x[:, idx_h][:, :, idx_w]


# ----------------------------------------------------------------------------
# RelightNet forward (mirrors the PyTorch module)
# ----------------------------------------------------------------------------
def relight_forward(params, input_L, input_R, *, compute_dtype=jnp.bfloat16):
    conv = functools.partial(conv2d_pallas, compute_dtype=compute_dtype)

    # PyTorch inputs are NCHW: input_L (N,1,H,W), input_R (N,3,H,W)
    L = jnp.transpose(input_L, (0, 2, 3, 1)).astype(jnp.float32)
    R = jnp.transpose(input_R, (0, 2, 3, 1)).astype(jnp.float32)
    x = jnp.concatenate([R, L], axis=-1)                     # == cat((R, L), dim=1)

    out0 = conv(x, *params["conv0_1"], padding=1)
    out1 = conv(out0, *params["conv1_1"], stride=2, padding=1, relu=True)
    out2 = conv(out1, *params["conv1_2"], stride=2, padding=1, relu=True)
    out3 = conv(out2, *params["conv1_3"], stride=2, padding=1, relu=True)

    out3_up = nearest_resize(out3, out2.shape[1], out2.shape[2])
    deconv1 = conv(jnp.concatenate([out3_up, out2], axis=-1),
                   *params["deconv1_1"], padding=1, relu=True)

    deconv1_up = nearest_resize(deconv1, out1.shape[1], out1.shape[2])
    deconv2 = conv(jnp.concatenate([deconv1_up, out1], axis=-1),
                   *params["deconv1_2"], padding=1, relu=True)

    deconv2_up = nearest_resize(deconv2, out0.shape[1], out0.shape[2])
    deconv3 = conv(jnp.concatenate([deconv2_up, out0], axis=-1),
                   *params["deconv1_3"], padding=1, relu=True)

    deconv1_rs = nearest_resize(deconv1, R.shape[1], R.shape[2])
    deconv2_rs = nearest_resize(deconv2, R.shape[1], R.shape[2])
    feats_all = jnp.concatenate([deconv1_rs, deconv2_rs, deconv3], axis=-1)

    # Exact algebraic fusion of net2_fusion (1x1 conv, padding=1 replicate, no
    # ReLU) with net2_output (3x3 conv, no padding): a single 3x3 conv over the
    # replicate-padded features with composed weights/bias.  Cout is padded
    # 1 -> 128 with zeros for lane-dense stores, then sliced back.
    w_fus, b_fus = params["fusion"]            # (1,1,3C,C), (C,)
    w_out, b_out = params["output"]            # (3,3,C,1),  (1,)
    w_eff = jnp.einsum("ic,hwco->hwio", w_fus[0, 0], w_out)   # (3,3,3C,1)
    b_eff = b_out + jnp.einsum("c,hwco->o", b_fus, w_out)     # (1,)
    pad_c = 128 - w_eff.shape[-1]
    w_eff = jnp.pad(w_eff, ((0, 0), (0, 0), (0, 0), (0, pad_c)))
    b_eff = jnp.pad(b_eff, ((0, pad_c),))
    output = conv(feats_all, w_eff, b_eff, padding=1)[..., :1]

    return jnp.transpose(output, (0, 3, 1, 2))               # NCHW: (N, 1, H, W)


# ----------------------------------------------------------------------------
# Deterministic parameter init (PyTorch Conv2d default: U(-1/sqrt(fan_in), ..))
# Weights stored as (KH, KW, Cin, Cout).
# ----------------------------------------------------------------------------
def init_params(key, channel=64, ksize=3):
    def conv_init(k, kh, kw, cin, cout):
        kw_key, kb_key = jax.random.split(k)
        bound = 1.0 / float(cin * kh * kw) ** 0.5
        w = jax.random.uniform(kw_key, (kh, kw, cin, cout), jnp.float32,
                               minval=-bound, maxval=bound)
        b = jax.random.uniform(kb_key, (cout,), jnp.float32,
                               minval=-bound, maxval=bound)
        return w, b

    keys = jax.random.split(key, 9)
    c = channel
    return {
        "conv0_1":   conv_init(keys[0], ksize, ksize, 4, c),
        "conv1_1":   conv_init(keys[1], ksize, ksize, c, c),
        "conv1_2":   conv_init(keys[2], ksize, ksize, c, c),
        "conv1_3":   conv_init(keys[3], ksize, ksize, c, c),
        "deconv1_1": conv_init(keys[4], ksize, ksize, 2 * c, c),
        "deconv1_2": conv_init(keys[5], ksize, ksize, 2 * c, c),
        "deconv1_3": conv_init(keys[6], ksize, ksize, 2 * c, c),
        "fusion":    conv_init(keys[7], 1, 1, 3 * c, c),
        "output":    conv_init(keys[8], ksize, ksize, c, 1),
    }


if __name__ == "__main__":
    key = jax.random.PRNGKey(0)
    k_l, k_r, k_p = jax.random.split(key, 3)

    N, H, W = 2, 16, 16
    input_L = jax.random.uniform(k_l, (N, 1, H, W), jnp.float32)
    input_R = jax.random.uniform(k_r, (N, 3, H, W), jnp.float32)
    params = init_params(k_p, channel=64, ksize=3)

    out = relight_forward(params, input_L, input_R)
    out = jax.block_until_ready(out)

    assert out.shape == (N, 1, H, W), out.shape
    assert bool(jnp.all(jnp.isfinite(out)))
    print("KERNEL_OK")
</pallas_src>

<mosaic_0001>
module attributes {stable_mosaic.version = 11 : i64} {
  func.func @_conv_mm_kernel(%arg0: i32, %arg1: memref<9x256x4xbf16, #tpu.memory_space<vmem>>, %arg2: memref<9x4x64xbf16, #tpu.memory_space<vmem>>, %arg3: memref<1x64xf32, #tpu.memory_space<vmem>>, %arg4: memref<256x64xf32, #tpu.memory_space<vmem>>, %arg5: memref<256x64xf32, #tpu.memory_space<vmem>>) attributes {dimension_semantics = [#tpu.dimension_semantics<parallel>], iteration_bounds = array<i64: 2>, scalar_prefetch = 0 : i64, scratch_operands = 1 : i64, tpu.core_type = #tpu.core_type<tc>, window_params = [{transform_indices = @transform_0, window_bounds = array<i64: 9, 256, 4>}, {pipeline_mode = #tpu.pipeline_mode<synchronous>, transform_indices = @transform_1, window_bounds = array<i64: 9, 4, 64>}, {pipeline_mode = #tpu.pipeline_mode<synchronous>, transform_indices = @transform_2, window_bounds = array<i64: 1, 64>}, {transform_indices = @transform_3, window_bounds = array<i64: 256, 64>}]} {
    %cst = arith.constant 0.000000e+00 : f32
    %0 = vector.broadcast %cst : f32 to vector<256x64xf32>
    %c0 = arith.constant 0 : index
    %c0_0 = arith.constant 0 : index
    %1 = vector.load %arg5[%c0, %c0_0] : memref<256x64xf32, #tpu.memory_space<vmem>>, vector<256x64xf32>
    tpu.vector_store %arg5[%c0, %c0_0], %0 {strides = array<i32>} : memref<256x64xf32, #tpu.memory_space<vmem>>, vector<256x64xf32>,
    %c0_i32 = arith.constant 0 : i32
    %c0_1 = arith.constant 0 : index
    %c0_2 = arith.constant 0 : index
    %2 = vector.load %arg5[%c0_1, %c0_2] : memref<256x64xf32, #tpu.memory_space<vmem>>, vector<256x64xf32>
    %3 = arith.index_cast %c0_i32 : i32 to index
    %c0_3 = arith.constant 0 : index
    %c0_4 = arith.constant 0 : index
    %4 = vector.load %arg1[%3, %c0_3, %c0_4] : memref<9x256x4xbf16, #tpu.memory_space<vmem>>, vector<1x256x4xbf16>
    %5 = vector.shape_cast %4 : vector<1x256x4xbf16> to vector<256x4xbf16>
    %6 = arith.index_cast %c0_i32 : i32 to index
    %c0_5 = arith.constant 0 : index
    %c0_6 = arith.constant 0 : index
    %7 = vector.load %arg2[%6, %c0_5, %c0_6] : memref<9x4x64xbf16, #tpu.memory_space<vmem>>, vector<1x4x64xbf16>
    %8 = vector.shape_cast %7 : vector<1x4x64xbf16> to vector<4x64xbf16>
    %cst_7 = arith.constant dense<0.000000e+00> : vector<256x64xf32>
    %9 = tpu.matmul %5, %8, %cst_7 {dimension_numbers = #tpu.dot_dimension_numbers<[1], [0], [0], [1], [0, 0, 1, 1], [], []>} : vector<256x4xbf16>, vector<4x64xbf16>, vector<256x64xf32> -> vector<256x64xf32>
    %10 = arith.addf %2, %9 : vector<256x64xf32>
    %c0_8 = arith.constant 0 : index
    %c0_9 = arith.constant 0 : index
    %11 = vector.load %arg5[%c0_8, %c0_9] : memref<256x64xf32, #tpu.memory_space<vmem>>, vector<256x64xf32>
    tpu.vector_store %arg5[%c0_8, %c0_9], %10 {strides = array<i32>} : memref<256x64xf32, #tpu.memory_space<vmem>>, vector<256x64xf32>,
    %c1_i32 = arith.constant 1 : i32
    %c0_10 = arith.constant 0 : index
    %c0_11 = arith.constant 0 : index
    %12 = vector.load %arg5[%c0_10, %c0_11] : memref<256x64xf32, #tpu.memory_space<vmem>>, vector<256x64xf32>
    %13 = arith.index_cast %c1_i32 : i32 to index
    %c0_12 = arith.constant 0 : index
    %c0_13 = arith.constant 0 : index
    %14 = vector.load %arg1[%13, %c0_12, %c0_13] : memref<9x256x4xbf16, #tpu.memory_space<vmem>>, vector<1x256x4xbf16>
    %15 = vector.shape_cast %14 : vector<1x256x4xbf16> to vector<256x4xbf16>
    %16 = arith.index_cast %c1_i32 : i32 to index
    %c0_14 = arith.constant 0 : index
    %c0_15 = arith.constant 0 : index
    %17 = vector.load %arg2[%16, %c0_14, %c0_15] : memref<9x4x64xbf16, #tpu.memory_space<vmem>>, vector<1x4x64xbf16>
    %18 = vector.shape_cast %17 : vector<1x4x64xbf16> to vector<4x64xbf16>
    %cst_16 = arith.constant dense<0.000000e+00> : vector<256x64xf32>
    %19 = tpu.matmul %15, %18, %cst_16 {dimension_numbers = #tpu.dot_dimension_numbers<[1], [0], [0], [1], [0, 0, 1, 1], [], []>} : vector<256x4xbf16>, vector<4x64xbf16>, vector<256x64xf32> -> vector<256x64xf32>
    %20 = arith.addf %12, %19 : vector<256x64xf32>
    %c0_17 = arith.constant 0 : index
    %c0_18 = arith.constant 0 : index
    %21 = vector.load %arg5[%c0_17, %c0_18] : memref<256x64xf32, #tpu.memory_space<vmem>>, vector<256x64xf32>
    tpu.vector_store %arg5[%c0_17, %c0_18], %20 {strides = array<i32>} : memref<256x64xf32, #tpu.memory_space<vmem>>, vector<256x64xf32>,
    %c2_i32 = arith.constant 2 : i32
    %c0_19 = arith.constant 0 : index
    %c0_20 = arith.constant 0 : index
    %22 = vector.load %arg5[%c0_19, %c0_20] : memref<256x64xf32, #tpu.memory_space<vmem>>, vector<256x64xf32>
    %23 = arith.index_cast %c2_i32 : i32 to index
    %c0_21 = arith.constant 0 : index
    %c0_22 = arith.constant 0 : index
    %24 = vector.load %arg1[%23, %c0_21, %c0_22] : memref<9x256x4xbf16, #tpu.memory_space<vmem>>, vector<1x256x4xbf16>
    %25 = vector.shape_cast %24 : vector<1x256x4xbf16> to vector<256x4xbf16>
    %26 = arith.index_cast %c2_i32 : i32 to index
    %c0_23 = arith.constant 0 : index
    %c0_24 = arith.constant 0 : index
    %27 = vector.load %arg2[%26, %c0_23, %c0_24] : memref<9x4x64xbf16, #tpu.memory_space<vmem>>, vector<1x4x64xbf16>
    %28 = vector.shape_cast %27 : vector<1x4x64xbf16> to vector<4x64xbf16>
    %cst_25 = arith.constant dense<0.000000e+00> : vector<256x64xf32>
    %29 = tpu.matmul %25, %28, %cst_25 {dimension_numbers = #tpu.dot_dimension_numbers<[1], [0], [0], [1], [0, 0, 1, 1], [], []>} : vector<256x4xbf16>, vector<4x64xbf16>, vector<256x64xf32> -> vector<256x64xf32>
    %30 = arith.addf %22, %29 : vector<256x64xf32>
    %c0_26 = arith.constant 0 : index
    %c0_27 = arith.constant 0 : index
    %31 = vector.load %arg5[%c0_26, %c0_27] : memref<256x64xf32, #tpu.memory_space<vmem>>, vector<256x64xf32>
    tpu.vector_store %arg5[%c0_26, %c0_27], %30 {strides = array<i32>} : memref<256x64xf32, #tpu.memory_space<vmem>>, vector<256x64xf32>,
    %c3_i32 = arith.constant 3 : i32
    %c0_28 = arith.constant 0 : index
    %c0_29 = arith.constant 0 : index
    %32 = vector.load %arg5[%c0_28, %c0_29] : memref<256x64xf32, #tpu.memory_space<vmem>>, vector<256x64xf32>
    %33 = arith.index_cast %c3_i32 : i32 to index
    %c0_30 = arith.constant 0 : index
    %c0_31 = arith.constant 0 : index
    %34 = vector.load %arg1[%33, %c0_30, %c0_31] : memref<9x256x4xbf16, #tpu.memory_space<vmem>>, vector<1x256x4xbf16>
    %35 = vector.shape_cast %34 : vector<1x256x4xbf16> to vector<256x4xbf16>
    %36 = arith.index_cast %c3_i32 : i32 to index
    %c0_32 = arith.constant 0 : index
    %c0_33 = arith.constant 0 : index
    %37 = vector.load %arg2[%36, %c0_32, %c0_33] : memref<9x4x64xbf16, #tpu.memory_space<vmem>>, vector<1x4x64xbf16>
    %38 = vector.shape_cast %37 : vector<1x4x64xbf16> to vector<4x64xbf16>
    %cst_34 = arith.constant dense<0.000000e+00> : vector<256x64xf32>
    %39 = tpu.matmul %35, %38, %cst_34 {dimension_numbers = #tpu.dot_dimension_numbers<[1], [0], [0], [1], [0, 0, 1, 1], [], []>} : vector<256x4xbf16>, vector<4x64xbf16>, vector<256x64xf32> -> vector<256x64xf32>
    %40 = arith.addf %32, %39 : vector<256x64xf32>
    %c0_35 = arith.constant 0 : index
    %c0_36 = arith.constant 0 : index
    %41 = vector.load %arg5[%c0_35, %c0_36] : memref<256x64xf32, #tpu.memory_space<vmem>>, vector<256x64xf32>
    tpu.vector_store %arg5[%c0_35, %c0_36], %40 {strides = array<i32>} : memref<256x64xf32, #tpu.memory_space<vmem>>, vector<256x64xf32>,
    %c4_i32 = arith.constant 4 : i32
    %c0_37 = arith.constant 0 : index
    %c0_38 = arith.constant 0 : index
    %42 = vector.load %arg5[%c0_37, %c0_38] : memref<256x64xf32, #tpu.memory_space<vmem>>, vector<256x64xf32>
    %43 = arith.index_cast %c4_i32 : i32 to index
    %c0_39 = arith.constant 0 : index
    %c0_40 = arith.constant 0 : index
    %44 = vector.load %arg1[%43, %c0_39, %c0_40] : memref<9x256x4xbf16, #tpu.memory_space<vmem>>, vector<1x256x4xbf16>
    %45 = vector.shape_cast %44 : vector<1x256x4xbf16> to vector<256x4xbf16>
    %46 = arith.index_cast %c4_i32 : i32 to index
    %c0_41 = arith.constant 0 : index
    %c0_42 = arith.constant 0 : index
    %47 = vector.load %arg2[%46, %c0_41, %c0_42] : memref<9x4x64xbf16, #tpu.memory_space<vmem>>, vector<1x4x64xbf16>
    %48 = vector.shape_cast %47 : vector<1x4x64xbf16> to vector<4x64xbf16>
    %cst_43 = arith.constant dense<0.000000e+00> : vector<256x64xf32>
    %49 = tpu.matmul %45, %48, %cst_43 {dimension_numbers = #tpu.dot_dimension_numbers<[1], [0], [0], [1], [0, 0, 1, 1], [], []>} : vector<256x4xbf16>, vector<4x64xbf16>, vector<256x64xf32> -> vector<256x64xf32>
    %50 = arith.addf %42, %49 : vector<256x64xf32>
    %c0_44 = arith.constant 0 : index
    %c0_45 = arith.constant 0 : index
    %51 = vector.load %arg5[%c0_44, %c0_45] : memref<256x64xf32, #tpu.memory_space<vmem>>, vector<256x64xf32>
    tpu.vector_store %arg5[%c0_44, %c0_45], %50 {strides = array<i32>} : memref<256x64xf32, #tpu.memory_space<vmem>>, vector<256x64xf32>,
    %c5_i32 = arith.constant 5 : i32
    %c0_46 = arith.constant 0 : index
    %c0_47 = arith.constant 0 : index
    %52 = vector.load %arg5[%c0_46, %c0_47] : memref<256x64xf32, #tpu.memory_space<vmem>>, vector<256x64xf32>
    %53 = arith.index_cast %c5_i32 : i32 to index
    %c0_48 = arith.constant 0 : index
    %c0_49 = arith.constant 0 : index
    %54 = vector.load %arg1[%53, %c0_48, %c0_49] : memref<9x256x4xbf16, #tpu.memory_space<vmem>>, vector<1x256x4xbf16>
    %55 = vector.shape_cast %54 : vector<1x256x4xbf16> to vector<256x4xbf16>
    %56 = arith.index_cast %c5_i32 : i32 to index
    %c0_50 = arith.constant 0 : index
    %c0_51 = arith.constant 0 : index
    %57 = vector.load %arg2[%56, %c0_50, %c0_51] : memref<9x4x64xbf16, #tpu.memory_space<vmem>>, vector<1x4x64xbf16>
    %58 = vector.shape_cast %57 : vector<1x4x64xbf16> to vector<4x64xbf16>
    %cst_52 = arith.constant dense<0.000000e+00> : vector<256x64xf32>
    %59 = tpu.matmul %55, %58, %cst_52 {dimension_numbers = #tpu.dot_dimension_numbers<[1], [0], [0], [1], [0, 0, 1, 1], [], []>} : vector<256x4xbf16>, vector<4x64xbf16>, vector<256x64xf32> -> vector<256x64xf32>
    %60 = arith.addf %52, %59 : vector<256x64xf32>
    %c0_53 = arith.constant 0 : index
    %c0_54 = arith.constant 0 : index
    %61 = vector.load %arg5[%c0_53, %c0_54] : memref<256x64xf32, #tpu.memory_space<vmem>>, vector<256x64xf32>
    tpu.vector_store %arg5[%c0_53, %c0_54], %60 {strides = array<i32>} : memref<256x64xf32, #tpu.memory_space<vmem>>, vector<256x64xf32>,
    %c6_i32 = arith.constant 6 : i32
    %c0_55 = arith.constant 0 : index
    %c0_56 = arith.constant 0 : index
    %62 = vector.load %arg5[%c0_55, %c0_56] : memref<256x64xf32, #tpu.memory_space<vmem>>, vector<256x64xf32>
    %63 = arith.index_cast %c6_i32 : i32 to index
    %c0_57 = arith.constant 0 : index
    %c0_58 = arith.constant 0 : index
    %64 = vector.load %arg1[%63, %c0_57, %c0_58] : memref<9x256x4xbf16, #tpu.memory_space<vmem>>, vector<1x256x4xbf16>
    %65 = vector.shape_cast %64 : vector<1x256x4xbf16> to vector<256x4xbf16>
    %66 = arith.index_cast %c6_i32 : i32 to index
    %c0_59 = arith.constant 0 : index
    %c0_60 = arith.constant 0 : index
    %67 = vector.load %arg2[%66, %c0_59, %c0_60] : memref<9x4x64xbf16, #tpu.memory_space<vmem>>, vector<1x4x64xbf16>
    %68 = vector.shape_cast %67 : vector<1x4x64xbf16> to vector<4x64xbf16>
    %cst_61 = arith.constant dense<0.000000e+00> : vector<256x64xf32>
    %69 = tpu.matmul %65, %68, %cst_61 {dimension_numbers = #tpu.dot_dimension_numbers<[1], [0], [0], [1], [0, 0, 1, 1], [], []>} : vector<256x4xbf16>, vector<4x64xbf16>, vector<256x64xf32> -> vector<256x64xf32>
    %70 = arith.addf %62, %69 : vector<256x64xf32>
    %c0_62 = arith.constant 0 : index
    %c0_63 = arith.constant 0 : index
    %71 = vector.load %arg5[%c0_62, %c0_63] : memref<256x64xf32, #tpu.memory_space<vmem>>, vector<256x64xf32>
    tpu.vector_store %arg5[%c0_62, %c0_63], %70 {strides = array<i32>} : memref<256x64xf32, #tpu.memory_space<vmem>>, vector<256x64xf32>,
    %c7_i32 = arith.constant 7 : i32
    %c0_64 = arith.constant 0 : index
    %c0_65 = arith.constant 0 : index
    %72 = vector.load %arg5[%c0_64, %c0_65] : memref<256x64xf32, #tpu.memory_space<vmem>>, vector<256x64xf32>
    %73 = arith.index_cast %c7_i32 : i32 to index
    %c0_66 = arith.constant 0 : index
    %c0_67 = arith.constant 0 : index
    %74 = vector.load %arg1[%73, %c0_66, %c0_67] : memref<9x256x4xbf16, #tpu.memory_space<vmem>>, vector<1x256x4xbf16>
    %75 = vector.shape_cast %74 : vector<1x256x4xbf16> to vector<256x4xbf16>
    %76 = arith.index_cast %c7_i32 : i32 to index
    %c0_68 = arith.constant 0 : index
    %c0_69 = arith.constant 0 : index
    %77 = vector.load %arg2[%76, %c0_68, %c0_69] : memref<9x4x64xbf16, #tpu.memory_space<vmem>>, vector<1x4x64xbf16>
    %78 = vector.shape_cast %77 : vector<1x4x64xbf16> to vector<4x64xbf16>
    %cst_70 = arith.constant dense<0.000000e+00> : vector<256x64xf32>
    %79 = tpu.matmul %75, %78, %cst_70 {dimension_numbers = #tpu.dot_dimension_numbers<[1], [0], [0], [1], [0, 0, 1, 1], [], []>} : vector<256x4xbf16>, vector<4x64xbf16>, vector<256x64xf32> -> vector<256x64xf32>
    %80 = arith.addf %72, %79 : vector<256x64xf32>
    %c0_71 = arith.constant 0 : index
    %c0_72 = arith.constant 0 : index
    %81 = vector.load %arg5[%c0_71, %c0_72] : memref<256x64xf32, #tpu.memory_space<vmem>>, vector<256x64xf32>
    tpu.vector_store %arg5[%c0_71, %c0_72], %80 {strides = array<i32>} : memref<256x64xf32, #tpu.memory_space<vmem>>, vector<256x64xf32>,
    %c8_i32 = arith.constant 8 : i32
    %c0_73 = arith.constant 0 : index
    %c0_74 = arith.constant 0 : index
    %82 = vector.load %arg5[%c0_73, %c0_74] : memref<256x64xf32, #tpu.memory_space<vmem>>, vector<256x64xf32>
    %83 = arith.index_cast %c8_i32 : i32 to index
    %c0_75 = arith.constant 0 : index
    %c0_76 = arith.constant 0 : index
    %84 = vector.load %arg1[%83, %c0_75, %c0_76] : memref<9x256x4xbf16, #tpu.memory_space<vmem>>, vector<1x256x4xbf16>
    %85 = vector.shape_cast %84 : vector<1x256x4xbf16> to vector<256x4xbf16>
    %86 = arith.index_cast %c8_i32 : i32 to index
    %c0_77 = arith.constant 0 : index
    %c0_78 = arith.constant 0 : index
    %87 = vector.load %arg2[%86, %c0_77, %c0_78] : memref<9x4x64xbf16, #tpu.memory_space<vmem>>, vector<1x4x64xbf16>
    %88 = vector.shape_cast %87 : vector<1x4x64xbf16> to vector<4x64xbf16>
    %cst_79 = arith.constant dense<0.000000e+00> : vector<256x64xf32>
    %89 = tpu.matmul %85, %88, %cst_79 {dimension_numbers = #tpu.dot_dimension_numbers<[1], [0], [0], [1], [0, 0, 1, 1], [], []>} : vector<256x4xbf16>, vector<4x64xbf16>, vector<256x64xf32> -> vector<256x64xf32>
    %90 = arith.addf %82, %89 : vector<256x64xf32>
    %c0_80 = arith.constant 0 : index
    %c0_81 = arith.constant 0 : index
    %91 = vector.load %arg5[%c0_80, %c0_81] : memref<256x64xf32, #tpu.memory_space<vmem>>, vector<256x64xf32>
    tpu.vector_store %arg5[%c0_80, %c0_81], %90 {strides = array<i32>} : memref<256x64xf32, #tpu.memory_space<vmem>>, vector<256x64xf32>,
    %c9_i32 = arith.constant 9 : i32
    %c0_82 = arith.constant 0 : index
    %c0_83 = arith.constant 0 : index
    %92 = vector.load %arg5[%c0_82, %c0_83] : memref<256x64xf32, #tpu.memory_space<vmem>>, vector<256x64xf32>
    %c0_84 = arith.constant 0 : index
    %c0_85 = arith.constant 0 : index
    %93 = vector.load %arg3[%c0_84, %c0_85] : memref<1x64xf32, #tpu.memory_space<vmem>>, vector<1x64xf32>
    %94 = vector.broadcast %93 : vector<1x64xf32> to vector<256x64xf32>
    %95 = arith.addf %92, %94 : vector<256x64xf32>
    %c0_86 = arith.constant 0 : index
    %c0_87 = arith.constant 0 : index
    %96 = vector.load %arg4[%c0_86, %c0_87] : memref<256x64xf32, #tpu.memory_space<vmem>>, vector<256x64xf32>
    tpu.vector_store %arg4[%c0_86, %c0_87], %95 {strides = array<i32>} : memref<256x64xf32, #tpu.memory_space<vmem>>, vector<256x64xf32>,
    return
  }
  func.func @transform_0(%arg0: i32) -> (i32, i32, i32) {
    %c0_i32 = arith.constant 0 : i32
    %c0_i32_0 = arith.constant 0 : i32
    %c0_i32_1 = arith.constant 0 : i32
    return %c0_i32, %arg0, %c0_i32_0 : i32, i32, i32
  }
  func.func @transform_1(%arg0: i32) -> (i32, i32, i32) {
    %c0_i32 = arith.constant 0 : i32
    %c0_i32_0 = arith.constant 0 : i32
    %c0_i32_1 = arith.constant 0 : i32
    %c0_i32_2 = arith.constant 0 : i32
    return %c0_i32, %c0_i32_0, %c0_i32_1 : i32, i32, i32
  }
  func.func @transform_2(%arg0: i32) -> (i32, i32) {
    %c0_i32 = arith.constant 0 : i32
    %c0_i32_0 = arith.constant 0 : i32
    %c0_i32_1 = arith.constant 0 : i32
    return %c0_i32, %c0_i32_0 : i32, i32
  }
  func.func @transform_3(%arg0: i32) -> (i32, i32) {
    %c0_i32 = arith.constant 0 : i32
    %c0_i32_0 = arith.constant 0 : i32
    return %arg0, %c0_i32 : i32, i32
  }
}

</mosaic_0001>

<llo_original>
// kernel: tpu_custom_call.1
$region0: #{tpu_custom_call.1}
  #allocation0 [shape = 'u32[]', space=smem, size = 0x4, offset = 0x4, fixed_abs, tag = 'smem constant byte address 0x4 - core index']
  #allocation1 [shape = 'u32[144,128]{1,0:T(1,128)}', space=vmem, size = 0x12000, scoped, tag = 'internal scratch']
  #allocation2 [shape = 'f32[256,64]{1,0:T(8,128)}', space=vmem, size = 0x20000, scoped, tag = 'scratch operand']
  %s0 = inlined_call_operand.vmem [shape: bf16[9,512,4], index: 0, kind: input, shape index: {}]
  %s1 = inlined_call_operand.vmem [shape: bf16[9,4,64], index: 1, kind: input, shape index: {}]
  %s2 = inlined_call_operand.vmem [shape: f32[1,64], index: 2, kind: input, shape index: {}]
  %s3 = inlined_call_operand.vmem [shape: f32[512,64], index: 3, kind: output, shape index: {}]
  %s4 = sld [smem:[#allocation0]]
  $region86: #{tpu_custom_call.1} parent=0
    _
  %s6 = ssub.s32 1, %s4
  %s7 = scalar_select 0, %s6, %s4
  $region1: #{tpu_custom_call.1} parent=0
    #allocation3 [shape = 'u8[1179648]{0}', space=vmem, size = 0x120000, scoped, tag = 'input window, operand 0']
    loop: start=0, step=1, limit=4
    $region2: #{tpu_custom_call.1} parent=1 // loop_pre_header
      _
    $region3: #{tpu_custom_call.1} parent=1 // loop_header
      %s9 = sphi 0, %s13
      %p10 = scmp.ge.s32.totalorder %s9, 4
      %s19 = sphi 0, %s21
      %s22 = sphi 0, %s19
      %s23 = sphi 0, %s22
      %s39 = sphi 0, %s23
      %s43 = sphi 0, %s43
      %s45 = sphi 0, %s43
      %s46 = sphi 0, %s45
      %s60 = sphi 0, %s46
      %s64 = sphi 0, %s64
      %s66 = sphi 0, %s64
      %s67 = sphi 0, %s66
      %s81 = sphi 0, %s67
      %s87 = sphi 0, %s89
      %s90 = sphi 0, %s87
      %s91 = sphi 0, %s90
      %s107 = sphi 0, %s91
    $region4: #{tpu_custom_call.1} parent=1 // loop_header_branch
      %12 = sbr.rel (%p10) target = $region8
    $region5: #{tpu_custom_call.1} parent=1 // loop_body
      %s14 = ssub.s32 %s9, 1
      %s15 = ssub.s32 %s9, 2
      %s16 = sadd.s32 %s9, 1
      %s17 = ssub.s32 %s9, %s16
      %p18 = scmp.eq.s32.totalorder %s17, 0
      %s20 = sadd.s32 %s19, 1
      %s21 = scalar_select %p18, %s19, %s20
      %p24 = pneg %p18
      %p25 = scmp.eq.s32.totalorder %s9, 1
      %p26 = por %p24, %p25
      %p27 = scmp.ne.s32.totalorder %s19, %s22
      %p28 = scmp.eq.s32.totalorder %s9, 0
      %p29 = por %p27, %p28
      %p30 = scmp.ne.s32.totalorder %s19, %s22
      %p31 = scmp.eq.s32.totalorder %s14, 1
      %p32 = por %p30, %p31
      %p33 = scmp.ne.s32.totalorder %s22, %s23
      %p34 = scmp.eq.s32.totalorder %s14, 0
      %p35 = por %p33, %p34
      %p36 = scmp.ne.s32.totalorder %s22, %s23
      %p37 = scmp.eq.s32.totalorder %s15, 1
      %p38 = por %p36, %p37
      %p40 = scmp.ne.s32.totalorder %s23, %s39
      %p41 = scmp.eq.s32.totalorder %s15, 0
      %p42 = por %p40, %p41
      %s44 = sadd.s32 %s43, 1
      %p47 = scmp.eq.s32.totalorder %s9, 1
      %p48 = scmp.ne.s32.totalorder %s43, %s45
      %p49 = scmp.eq.s32.totalorder %s9, 0
      %p50 = por %p48, %p49
      %p51 = scmp.ne.s32.totalorder %s43, %s45
      %p52 = scmp.eq.s32.totalorder %s14, 1
      %p53 = por %p51, %p52
      %p54 = scmp.ne.s32.totalorder %s45, %s46
      %p55 = scmp.eq.s32.totalorder %s14, 0
      %p56 = por %p54, %p55
      %p57 = scmp.ne.s32.totalorder %s45, %s46
      %p58 = scmp.eq.s32.totalorder %s15, 1
      %p59 = por %p57, %p58
      %p61 = scmp.ne.s32.totalorder %s46, %s60
      %p62 = scmp.eq.s32.totalorder %s15, 0
      %p63 = por %p61, %p62
      %s65 = sadd.s32 %s64, 1
      %p68 = scmp.eq.s32.totalorder %s9, 1
      %p69 = scmp.ne.s32.totalorder %s64, %s66
      %p70 = scmp.eq.s32.totalorder %s9, 0
      %p71 = por %p69, %p70
      %p72 = scmp.ne.s32.totalorder %s64, %s66
      %p73 = scmp.eq.s32.totalorder %s14, 1
      %p74 = por %p72, %p73
      %p75 = scmp.ne.s32.totalorder %s66, %s67
      %p76 = scmp.eq.s32.totalorder %s14, 0
      %p77 = por %p75, %p76
      %p78 = scmp.ne.s32.totalorder %s66, %s67
      %p79 = scmp.eq.s32.totalorder %s15, 1
      %p80 = por %p78, %p79
      %p82 = scmp.ne.s32.totalorder %s67, %s81
      %p83 = scmp.eq.s32.totalorder %s15, 0
      %p84 = por %p82, %p83
      %s85 = ssub.s32 %s9, %s16
      %p86 = scmp.eq.s32.totalorder %s85, 0
      %s88 = sadd.s32 %s87, 1
      %s89 = scalar_select %p86, %s87, %s88
      %p92 = pneg %p86
      %p93 = scmp.eq.s32.totalorder %s9, 1
      %p94 = por %p92, %p93
      %p95 = scmp.ne.s32.totalorder %s87, %s90
      %p96 = scmp.eq.s32.totalorder %s9, 0
      %p97 = por %p95, %p96
      %p98 = scmp.ne.s32.totalorder %s87, %s90
      %p99 = scmp.eq.s32.totalorder %s14, 1
      %p100 = por %p98, %p99
      %p101 = scmp.ne.s32.totalorder %s90, %s91
      %p102 = scmp.eq.s32.totalorder %s14, 0
      %p103 = por %p101, %p102
      %p104 = scmp.ne.s32.totalorder %s90, %s91
      %p105 = scmp.eq.s32.totalorder %s15, 1
      %p106 = por %p104, %p105
      %p108 = scmp.ne.s32.totalorder %s91, %s107
      %p109 = scmp.eq.s32.totalorder %s15, 0
      %p110 = por %p108, %p109
      %p111 = scmp.le.s32.totalorder 1, %s9
      %p112 = scmp.lt.s32.totalorder %s9, 3
      %p113 = pnand %p111, %p112
      %p114 = pneg %p113
      // Predicated region
      $region9: #{tpu_custom_call.1} parent=5 // pred_check
        _
      $region10: #{tpu_custom_call.1} parent=5 // pred_check_branch
        %116 = sbr.rel (%p113) target = $region12
      $region11: #{tpu_custom_call.1} parent=5 // pred_region
        %s117 = ssub.s32 %s9, 1
        // Predicated region
        $region13: #{tpu_custom_call.1} parent=11 // pred_check
          %p118 = pneg %p56
        $region14: #{tpu_custom_call.1} parent=11 // pred_check_branch
          %120 = sbr.rel (%p118) target = $region16
        $region15: #{tpu_custom_call.1} parent=11 // pred_region
          _
        $region16: #{tpu_custom_call.1} parent=11 // pred_fallthru
          _
        // Predicated region
        $region17: #{tpu_custom_call.1} parent=11 // pred_check
          %p121 = pneg %p77
        $region18: #{tpu_custom_call.1} parent=11 // pred_check_branch
          %123 = sbr.rel (%p121) target = $region20
        $region19: #{tpu_custom_call.1} parent=11 // pred_region
          _
        $region20: #{tpu_custom_call.1} parent=11 // pred_fallthru
          _
      $region12: #{tpu_custom_call.1} parent=5 // pred_fallthru
        _
      %p124 = scmp.lt.s32.totalorder %s9, 2
      // Predicated region
      $region21: #{tpu_custom_call.1} parent=5 // pred_check
        %p125 = pneg %p124
      $region22: #{tpu_custom_call.1} parent=5 // pred_check_branch
        %127 = sbr.rel (%p125) target = $region24
      $region23: #{tpu_custom_call.1} parent=5 // pred_region
        // Predicated region
        $region25: #{tpu_custom_call.1} parent=23 // pred_check
          %p128 = pneg %p29
        $region26: #{tpu_custom_call.1} parent=23 // pred_check_branch
          %130 = sbr.rel (%p128) target = $region28
        $region27: #{tpu_custom_call.1} parent=23 // pred_region
          %s131 = sand.u32 %s19, 1
          %s132 = sand.u32 %s19, 1
          %s133 = smul.addr %s132, 1152
          %s134 = scalar_lea.vmem [#allocation3], %s133
          %s135 = smul.u32 32, %s9
          %s136 = smul.addr %s135, 4
          %s137 = scalar_lea.vmem %s0, %s136
          // Predicated region
          $region29: #{tpu_custom_call.1} parent=27 // pred_check
            _
          $region30: #{tpu_custom_call.1} parent=27 // pred_check_branch
            %139 = sbr.rel (0) target = $region32
          $region31: #{tpu_custom_call.1} parent=27 // pred_region
            // Predicated region
            $region33: #{tpu_custom_call.1} parent=31 // pred_check
              _
            $region34: #{tpu_custom_call.1} parent=31 // pred_check_branch
              %141 = sbr.rel target = $region36
            $region35: #{tpu_custom_call.1} parent=31 // pred_region
              // Predicated region
              $region48: #{tpu_custom_call.1} parent=35 // pred_check
                _
              $region49: #{tpu_custom_call.1} parent=35 // pred_check_branch
                %731 = sbr.rel (0) target = $region51
              $region50: #{tpu_custom_call.1} parent=35 // pred_region
                loop: start=0, step=1, limit=1
                $region52: #{tpu_custom_call.1} parent=50 // loop_pre_header
                  _
                $region53: #{tpu_custom_call.1} parent=50 // loop_header
                  %s733 = sphi 0, %s737
                  %p734 = scmp.ge.s32.totalorder %s733, 1
                  %s738 = sphi %s137, %s137
                  %s739 = sphi %s134, %s134
                $region54: #{tpu_custom_call.1} parent=50 // loop_header_branch
                  %736 = sbr.rel (%p734) target = $region58
                $region55: #{tpu_custom_call.1} parent=50 // loop_body
                  _
                $region56: #{tpu_custom_call.1} parent=50 // loop_footer
                  %s737 = sadd.s32 1, %s733
                $region57: #{tpu_custom_call.1} parent=50 // loop_footer_branch
                  %732 = sbr.rel target = $region53
                $region58: #{tpu_custom_call.1} parent=50 // loop_exit
                  _
                %s741 = ssub.s32 16, 1
                loop: start=0, step=1, limit=1
                $region59: #{tpu_custom_call.1} parent=50 // loop_pre_header
                  _
                $region60: #{tpu_custom_call.1} parent=50 // loop_header
                  %s743 = sphi 0, %s747
                  %p744 = scmp.ge.s32.totalorder %s743, 1
                  %s748 = sphi %s137, %s137
                  %s749 = sphi %s134, %s134
                $region61: #{tpu_custom_call.1} parent=50 // loop_header_branch
                  %746 = sbr.rel (%p744) target = $region65
                $region62: #{tpu_custom_call.1} parent=50 // loop_body
                  %v750 = vld [vmem:[%s748] sm:%s741]
                  %751 = vst [vmem:[%s749] sm:%s741] %v750
                  %v752 = vld [vmem:[%s748 + $0x4] sm:%s741]
                  %753 = vst [vmem:[%s749 + $0x4] sm:%s741] %v752
                  %v754 = vld [vmem:[%s748 + $0x8] sm:%s741]
                  %755 = vst [vmem:[%s749 + $0x8] sm:%s741] %v754
                  %v756 = vld [vmem:[%s748 + $0xc] sm:%s741]
                  %757 = vst [vmem:[%s749 + $0xc] sm:%s741] %v756
                  %v758 = vld [vmem:[%s748 + $0x10] sm:%s741]
                  %759 = vst [vmem:[%s749 + $0x10] sm:%s741] %v758
                  %v760 = vld [vmem:[%s748 + $0x14] sm:%s741]
                  %761 = vst [vmem:[%s749 + $0x14] sm:%s741] %v760
                  %v762 = vld [vmem:[%s748 + $0x18] sm:%s741]
                  %763 = vst [vmem:[%s749 + $0x18] sm:%s741] %v762
                  %v764 = vld [vmem:[%s748 + $0x1c] sm:%s741]
                  %765 = vst [vmem:[%s749 + $0x1c] sm:%s741] %v764
                  %v766 = vld [vmem:[%s748 + $0x20] sm:%s741]
                  %767 = vst [vmem:[%s749 + $0x20] sm:%s741] %v766
                  %v768 = vld [vmem:[%s748 + $0x24] sm:%s741]
                  %769 = vst [vmem:[%s749 + $0x24] sm:%s741] %v768
                  %v770 = vld [vmem:[%s748 + $0x28] sm:%s741]
                  %771 = vst [vmem:[%s749 + $0x28] sm:%s741] %v770
                  %v772 = vld [vmem:[%s748 + $0x2c] sm:%s741]
                  %773 = vst [vmem:[%s749 + $0x2c] sm:%s741] %v772
                  %v774 = vld [vmem:[%s748 + $0x30] sm:%s741]
                  %775 = vst [vmem:[%s749 + $0x30] sm:%s741] %v774
                  %v776 = vld [vmem:[%s748 + $0x34] sm:%s741]
                  %777 = vst [vmem:[%s749 + $0x34] sm:%s741] %v776
                  %v778 = vld [vmem:[%s748 + $0x38] sm:%s741]
                  %779 = vst [vmem:[%s749 + $0x38] sm:%s741] %v778
                  %v780 = vld [vmem:[%s748 + $0x3c] sm:%s741]
                  %781 = vst [vmem:[%s749 + $0x3c] sm:%s741] %v780
                  %v782 = vld [vmem:[%s748 + $0x40] sm:%s741]
                  %783 = vst [vmem:[%s749 + $0x40] sm:%s741] %v782
                  %v784 = vld [vmem:[%s748 + $0x44] sm:%s741]
                  %785 = vst [vmem:[%s749 + $0x44] sm:%s741] %v784
                  %v786 = vld [vmem:[%s748 + $0x48] sm:%s741]
                  %787 = vst [vmem:[%s749 + $0x48] sm:%s741] %v786
                  %v788 = vld [vmem:[%s748 + $0x4c] sm:%s741]
                  %789 = vst [vmem:[%s749 + $0x4c] sm:%s741] %v788
                  %v790 = vld [vmem:[%s748 + $0x50] sm:%s741]
                  %791 = vst [vmem:[%s749 + $0x50] sm:%s741] %v790
                  %v792 = vld [vmem:[%s748 + $0x54] sm:%s741]
                  %793 = vst [vmem:[%s749 + $0x54] sm:%s741] %v792
                  %v794 = vld [vmem:[%s748 + $0x58] sm:%s741]
                  %795 = vst [vmem:[%s749 + $0x58] sm:%s741] %v794
                  %v796 = vld [vmem:[%s748 + $0x5c] sm:%s741]
                  %797 = vst [vmem:[%s749 + $0x5c] sm:%s741] %v796
                  %v798 = vld [vmem:[%s748 + $0x60] sm:%s741]
                  %799 = vst [vmem:[%s749 + $0x60] sm:%s741] %v798
                  %v800 = vld [vmem:[%s748 + $0x64] sm:%s741]
                  %801 = vst [vmem:[%s749 + $0x64] sm:%s741] %v800
                  %v802 = vld [vmem:[%s748 + $0x68] sm:%s741]
                  %803 = vst [vmem:[%s749 + $0x68] sm:%s741] %v802
                  %v804 = vld [vmem:[%s748 + $0x6c] sm:%s741]
                  %805 = vst [vmem:[%s749 + $0x6c] sm:%s741] %v804
                  %v806 = vld [vmem:[%s748 + $0x70] sm:%s741]
                  %807 = vst [vmem:[%s749 + $0x70] sm:%s741] %v806
                  %v808 = vld [vmem:[%s748 + $0x74] sm:%s741]
                  %809 = vst [vmem:[%s749 + $0x74] sm:%s741] %v808
                  %v810 = vld [vmem:[%s748 + $0x78] sm:%s741]
                  %811 = vst [vmem:[%s749 + $0x78] sm:%s741] %v810
                  %v812 = vld [vmem:[%s748 + $0x7c] sm:%s741]
                  %813 = vst [vmem:[%s749 + $0x7c] sm:%s741] %v812
                  %v814 = vld [vmem:[%s748 + $0x100] sm:%s741]
                  %815 = vst [vmem:[%s749 + $0x80] sm:%s741] %v814
                  %v816 = vld [vmem:[%s748 + $0x104] sm:%s741]
                  %817 = vst [vmem:[%s749 + $0x84] sm:%s741] %v816
                  %v818 = vld [vmem:[%s748 + $0x108] sm:%s741]
                  %819 = vst [vmem:[%s749 + $0x88] sm:%s741] %v818
                  %v820 = vld [vmem:[%s748 + $0x10c] sm:%s741]
                  %821 = vst [vmem:[%s749 + $0x8c] sm:%s741] %v820
                  %v822 = vld [vmem:[%s748 + $0x110] sm:%s741]
                  %823 = vst [vmem:[%s749 + $0x90] sm:%s741] %v822
                  %v824 = vld [vmem:[%s748 + $0x114] sm:%s741]
                  %825 = vst [vmem:[%s749 + $0x94] sm:%s741] %v824
                  %v826 = vld [vmem:[%s748 + $0x118] sm:%s741]
                  %827 = vst [vmem:[%s749 + $0x98] sm:%s741] %v826
                  %v828 = vld [vmem:[%s748 + $0x11c] sm:%s741]
                  %829 = vst [vmem:[%s749 + $0x9c] sm:%s741] %v828
                  %v830 = vld [vmem:[%s748 + $0x120] sm:%s741]
                  %831 = vst [vmem:[%s749 + $0xa0] sm:%s741] %v830
                  %v832 = vld [vmem:[%s748 + $0x124] sm:%s741]
                  %833 = vst [vmem:[%s749 + $0xa4] sm:%s741] %v832
                  %v834 = vld [vmem:[%s748 + $0x128] sm:%s741]
                  %835 = vst [vmem:[%s749 + $0xa8] sm:%s741] %v834
                  %v836 = vld [vmem:[%s748 + $0x12c] sm:%s741]
                  %837 = vst [vmem:[%s749 + $0xac] sm:%s741] %v836
                  %v838 = vld [vmem:[%s748 + $0x130] sm:%s741]
                  %839 = vst [vmem:[%s749 + $0xb0] sm:%s741] %v838
                  %v840 = vld [vmem:[%s748 + $0x134] sm:%s741]
                  %841 = vst [vmem:[%s749 + $0xb4] sm:%s741] %v840
                  %v842 = vld [vmem:[%s748 + $0x138] sm:%s741]
                  %843 = vst [vmem:[%s749 + $0xb8] sm:%s741] %v842
                  %v844 = vld [vmem:[%s748 + $0x13c] sm:%s741]
                  %845 = vst [vmem:[%s749 + $0xbc] sm:%s741] %v844
                  %v846 = vld [vmem:[%s748 + $0x140] sm:%s741]
                  %847 = vst [vmem:[%s749 + $0xc0] sm:%s741] %v846
                  %v848 = vld [vmem:[%s748 + $0x144] sm:%s741]
                  %849 = vst [vmem:[%s749 + $0xc4] sm:%s741] %v848
                  %v850 = vld [vmem:[%s748 + $0x148] sm:%s741]
                  %851 = vst [vmem:[%s749 + $0xc8] sm:%s741] %v850
                  %v852 = vld [vmem:[%s748 + $0x14c] sm:%s741]
                  %853 = vst [vmem:[%s749 + $0xcc] sm:%s741] %v852
                  %v854 = vld [vmem:[%s748 + $0x150] sm:%s741]
                  %855 = vst [vmem:[%s749 + $0xd0] sm:%s741] %v854
                  %v856 = vld [vmem:[%s748 + $0x154] sm:%s741]
                  %857 = vst [vmem:[%s749 + $0xd4] sm:%s741] %v856
                  %v858 = vld [vmem:[%s748 + $0x158] sm:%s741]
                  %859 = vst [vmem:[%s749 + $0xd8] sm:%s741] %v858
                  %v860 = vld [vmem:[%s748 + $0x15c] sm:%s741]
                  %861 = vst [vmem:[%s749 + $0xdc] sm:%s741] %v860
                  %v862 = vld [vmem:[%s748 + $0x160] sm:%s741]
                  %863 = vst [vmem:[%s749 + $0xe0] sm:%s741] %v862
                  %v864 = vld [vmem:[%s748 + $0x164] sm:%s741]
                  %865 = vst [vmem:[%s749 + $0xe4] sm:%s741] %v864
                  %v866 = vld [vmem:[%s748 + $0x168] sm:%s741]
                  %867 = vst [vmem:[%s749 + $0xe8] sm:%s741] %v866
                  %v868 = vld [vmem:[%s748 + $0x16c] sm:%s741]
                  %869 = vst [vmem:[%s749 + $0xec] sm:%s741] %v868
                  %v870 = vld [vmem:[%s748 + $0x170] sm:%s741]
                  %871 = vst [vmem:[%s749 + $0xf0] sm:%s741] %v870
                  %v872 = vld [vmem:[%s748 + $0x174] sm:%s741]
                  %873 = vst [vmem:[%s749 + $0xf4] sm:%s741] %v872
                  %v874 = vld [vmem:[%s748 + $0x178] sm:%s741]
                  %875 = vst [vmem:[%s749 + $0xf8] sm:%s741] %v874
                  %v876 = vld [vmem:[%s748 + $0x17c] sm:%s741]
                  %877 = vst [vmem:[%s749 + $0xfc] sm:%s741] %v876
                  %v878 = vld [vmem:[%s748 + $0x200] sm:%s741]
                  %879 = vst [vmem:[%s749 + $0x100] sm:%s741] %v878
                  %v880 = vld [vmem:[%s748 + $0x204] sm:%s741]
                  %881 = vst [vmem:[%s749 + $0x104] sm:%s741] %v880
                  %v882 = vld [vmem:[%s748 + $0x208] sm:%s741]
                  %883 = vst [vmem:[%s749 + $0x108] sm:%s741] %v882
                  %v884 = vld [vmem:[%s748 + $0x20c] sm:%s741]
                  %885 = vst [vmem:[%s749 + $0x10c] sm:%s741] %v884
                  %v886 = vld [vmem:[%s748 + $0x210] sm:%s741]
                  %887 = vst [vmem:[%s749 + $0x110] sm:%s741] %v886
                  %v888 = vld [vmem:[%s748 + $0x214] sm:%s741]
                  %889 = vst [vmem:[%s749 + $0x114] sm:%s741] %v888
                  %v890 = vld [vmem:[%s748 + $0x218] sm:%s741]
                  %891 = vst [vmem:[%s749 + $0x118] sm:%s741] %v890
                  %v892 = vld [vmem:[%s748 + $0x21c] sm:%s741]
                  %893 = vst [vmem:[%s749 + $0x11c] sm:%s741] %v892
                  %v894 = vld [vmem:[%s748 + $0x220] sm:%s741]
                  %895 = vst [vmem:[%s749 + $0x120] sm:%s741] %v894
                  %v896 = vld [vmem:[%s748 + $0x224] sm:%s741]
                  %897 = vst [vmem:[%s749 + $0x124] sm:%s741] %v896
                  %v898 = vld [vmem:[%s748 + $0x228] sm:%s741]
                  %899 = vst [vmem:[%s749 + $0x128] sm:%s741] %v898
                  %v900 = vld [vmem:[%s748 + $0x22c] sm:%s741]
                  %901 = vst [vmem:[%s749 + $0x12c] sm:%s741] %v900
                  %v902 = vld [vmem:[%s748 + $0x230] sm:%s741]
                  %903 = vst [vmem:[%s749 + $0x130] sm:%s741] %v902
                  %v904 = vld [vmem:[%s748 + $0x234] sm:%s741]
                  %905 = vst [vmem:[%s749 + $0x134] sm:%s741] %v904
                  %v906 = vld [vmem:[%s748 + $0x238] sm:%s741]
                  %907 = vst [vmem:[%s749 + $0x138] sm:%s741] %v906
                  %v908 = vld [vmem:[%s748 + $0x23c] sm:%s741]
                  %909 = vst [vmem:[%s749 + $0x13c] sm:%s741] %v908
                  %v910 = vld [vmem:[%s748 + $0x240] sm:%s741]
                  %911 = vst [vmem:[%s749 + $0x140] sm:%s741] %v910
                  %v912 = vld [vmem:[%s748 + $0x244] sm:%s741]
                  %913 = vst [vmem:[%s749 + $0x144] sm:%s741] %v912
                  %v914 = vld [vmem:[%s748 + $0x248] sm:%s741]
                  %915 = vst [vmem:[%s749 + $0x148] sm:%s741] %v914
                  %v916 = vld [vmem:[%s748 + $0x24c] sm:%s741]
                  %917 = vst [vmem:[%s749 + $0x14c] sm:%s741] %v916
                  %v918 = vld [vmem:[%s748 + $0x250] sm:%s741]
                  %919 = vst [vmem:[%s749 + $0x150] sm:%s741] %v918
                  %v920 = vld [vmem:[%s748 + $0x254] sm:%s741]
                  %921 = vst [vmem:[%s749 + $0x154] sm:%s741] %v920
                  %v922 = vld [vmem:[%s748 + $0x258] sm:%s741]
                  %923 = vst [vmem:[%s749 + $0x158] sm:%s741] %v922
                  %v924 = vld [vmem:[%s748 + $0x25c] sm:%s741]
                  %925 = vst [vmem:[%s749 + $0x15c] sm:%s741] %v924
                  %v926 = vld [vmem:[%s748 + $0x260] sm:%s741]
                  %927 = vst [vmem:[%s749 + $0x160] sm:%s741] %v926
                  %v928 = vld [vmem:[%s748 + $0x264] sm:%s741]
                  %929 = vst [vmem:[%s749 + $0x164] sm:%s741] %v928
                  %v930 = vld [vmem:[%s748 + $0x268] sm:%s741]
                  %931 = vst [vmem:[%s749 + $0x168] sm:%s741] %v930
                  %v932 = vld [vmem:[%s748 + $0x26c] sm:%s741]
                  %933 = vst [vmem:[%s749 + $0x16c] sm:%s741] %v932
                  %v934 = vld [vmem:[%s748 + $0x270] sm:%s741]
                  %935 = vst [vmem:[%s749 + $0x170] sm:%s741] %v934
                  %v936 = vld [vmem:[%s748 + $0x274] sm:%s741]
                  %937 = vst [vmem:[%s749 + $0x174] sm:%s741] %v936
                  %v938 = vld [vmem:[%s748 + $0x278] sm:%s741]
                  %939 = vst [vmem:[%s749 + $0x178] sm:%s741] %v938
                  %v940 = vld [vmem:[%s748 + $0x27c] sm:%s741]
                  %941 = vst [vmem:[%s749 + $0x17c] sm:%s741] %v940
                  %v942 = vld [vmem:[%s748 + $0x300] sm:%s741]
                  %943 = vst [vmem:[%s749 + $0x180] sm:%s741] %v942
                  %v944 = vld [vmem:[%s748 + $0x304] sm:%s741]
                  %945 = vst [vmem:[%s749 + $0x184] sm:%s741] %v944
                  %v946 = vld [vmem:[%s748 + $0x308] sm:%s741]
                  %947 = vst [vmem:[%s749 + $0x188] sm:%s741] %v946
                  %v948 = vld [vmem:[%s748 + $0x30c] sm:%s741]
                  %949 = vst [vmem:[%s749 + $0x18c] sm:%s741] %v948
                  %v950 = vld [vmem:[%s748 + $0x310] sm:%s741]
                  %951 = vst [vmem:[%s749 + $0x190] sm:%s741] %v950
                  %v952 = vld [vmem:[%s748 + $0x314] sm:%s741]
                  %953 = vst [vmem:[%s749 + $0x194] sm:%s741] %v952
                  %v954 = vld [vmem:[%s748 + $0x318] sm:%s741]
                  %955 = vst [vmem:[%s749 + $0x198] sm:%s741] %v954
                  %v956 = vld [vmem:[%s748 + $0x31c] sm:%s741]
                  %957 = vst [vmem:[%s749 + $0x19c] sm:%s741] %v956
                  %v958 = vld [vmem:[%s748 + $0x320] sm:%s741]
                  %959 = vst [vmem:[%s749 + $0x1a0] sm:%s741] %v958
                  %v960 = vld [vmem:[%s748 + $0x324] sm:%s741]
                  %961 = vst [vmem:[%s749 + $0x1a4] sm:%s741] %v960
                  %v962 = vld [vmem:[%s748 + $0x328] sm:%s741]
                  %963 = vst [vmem:[%s749 + $0x1a8] sm:%s741] %v962
                  %v964 = vld [vmem:[%s748 + $0x32c] sm:%s741]
                  %965 = vst [vmem:[%s749 + $0x1ac] sm:%s741] %v964
                  %v966 = vld [vmem:[%s748 + $0x330] sm:%s741]
                  %967 = vst [vmem:[%s749 + $0x1b0] sm:%s741] %v966
                  %v968 = vld [vmem:[%s748 + $0x334] sm:%s741]
                  %969 = vst [vmem:[%s749 + $0x1b4] sm:%s741] %v968
                  %v970 = vld [vmem:[%s748 + $0x338] sm:%s741]
                  %971 = vst [vmem:[%s749 + $0x1b8] sm:%s741] %v970
                  %v972 = vld [vmem:[%s748 + $0x33c] sm:%s741]
                  %973 = vst [vmem:[%s749 + $0x1bc] sm:%s741] %v972
                  %v974 = vld [vmem:[%s748 + $0x340] sm:%s741]
                  %975 = vst [vmem:[%s749 + $0x1c0] sm:%s741] %v974
                  %v976 = vld [vmem:[%s748 + $0x344] sm:%s741]
                  %977 = vst [vmem:[%s749 + $0x1c4] sm:%s741] %v976
                  %v978 = vld [vmem:[%s748 + $0x348] sm:%s741]
                  %979 = vst [vmem:[%s749 + $0x1c8] sm:%s741] %v978
                  %v980 = vld [vmem:[%s748 + $0x34c] sm:%s741]
                  %981 = vst [vmem:[%s749 + $0x1cc] sm:%s741] %v980
                  %v982 = vld [vmem:[%s748 + $0x350] sm:%s741]
                  %983 = vst [vmem:[%s749 + $0x1d0] sm:%s741] %v982
                  %v984 = vld [vmem:[%s748 + $0x354] sm:%s741]
                  %985 = vst [vmem:[%s749 + $0x1d4] sm:%s741] %v984
                  %v986 = vld [vmem:[%s748 + $0x358] sm:%s741]
                  %987 = vst [vmem:[%s749 + $0x1d8] sm:%s741] %v986
                  %v988 = vld [vmem:[%s748 + $0x35c] sm:%s741]
                  %989 = vst [vmem:[%s749 + $0x1dc] sm:%s741] %v988
                  %v990 = vld [vmem:[%s748 + $0x360] sm:%s741]
                  %991 = vst [vmem:[%s749 + $0x1e0] sm:%s741] %v990
                  %v992 = vld [vmem:[%s748 + $0x364] sm:%s741]
                  %993 = vst [vmem:[%s749 + $0x1e4] sm:%s741] %v992
                  %v994 = vld [vmem:[%s748 + $0x368] sm:%s741]
                  %995 = vst [vmem:[%s749 + $0x1e8] sm:%s741] %v994
                  %v996 = vld [vmem:[%s748 + $0x36c] sm:%s741]
                  %997 = vst [vmem:[%s749 + $0x1ec] sm:%s741] %v996
                  %v998 = vld [vmem:[%s748 + $0x370] sm:%s741]
                  %999 = vst [vmem:[%s749 + $0x1f0] sm:%s741] %v998
                  %v1000 = vld [vmem:[%s748 + $0x374] sm:%s741]
                  %1001 = vst [vmem:[%s749 + $0x1f4] sm:%s741] %v1000
                  %v1002 = vld [vmem:[%s748 + $0x378] sm:%s741]
                  %1003 = vst [vmem:[%s749 + $0x1f8] sm:%s741] %v1002
                  %v1004 = vld [vmem:[%s748 + $0x37c] sm:%s741]
                  %1005 = vst [vmem:[%s749 + $0x1fc] sm:%s741] %v1004
                  %v1006 = vld [vmem:[%s748 + $0x400] sm:%s741]
                  %1007 = vst [vmem:[%s749 + $0x200] sm:%s741] %v1006
                  %v1008 = vld [vmem:[%s748 + $0x404] sm:%s741]
                  %1009 = vst [vmem:[%s749 + $0x204] sm:%s741] %v1008
                  %v1010 = vld [vmem:[%s748 + $0x408] sm:%s741]
                  %1011 = vst [vmem:[%s749 + $0x208] sm:%s741] %v1010
                  %v1012 = vld [vmem:[%s748 + $0x40c] sm:%s741]
                  %1013 = vst [vmem:[%s749 + $0x20c] sm:%s741] %v1012
                  %v1014 = vld [vmem:[%s748 + $0x410] sm:%s741]
                  %1015 = vst [vmem:[%s749 + $0x210] sm:%s741] %v1014
                  %v1016 = vld [vmem:[%s748 + $0x414] sm:%s741]
                  %1017 = vst [vmem:[%s749 + $0x214] sm:%s741] %v1016
                  %v1018 = vld [vmem:[%s748 + $0x418] sm:%s741]
                  %1019 = vst [vmem:[%s749 + $0x218] sm:%s741] %v1018
                  %v1020 = vld [vmem:[%s748 + $0x41c] sm:%s741]
                  %1021 = vst [vmem:[%s749 + $0x21c] sm:%s741] %v1020
                  %v1022 = vld [vmem:[%s748 + $0x420] sm:%s741]
                  %1023 = vst [vmem:[%s749 + $0x220] sm:%s741] %v1022
                  %v1024 = vld [vmem:[%s748 + $0x424] sm:%s741]
                  %1025 = vst [vmem:[%s749 + $0x224] sm:%s741] %v1024
                  %v1026 = vld [vmem:[%s748 + $0x428] sm:%s741]
                  %1027 = vst [vmem:[%s749 + $0x228] sm:%s741] %v1026
                  %v1028 = vld [vmem:[%s748 + $0x42c] sm:%s741]
                  %1029 = vst [vmem:[%s749 + $0x22c] sm:%s741] %v1028
                  %v1030 = vld [vmem:[%s748 + $0x430] sm:%s741]
                  %1031 = vst [vmem:[%s749 + $0x230] sm:%s741] %v1030
                  %v1032 = vld [vmem:[%s748 + $0x434] sm:%s741]
                  %1033 = vst [vmem:[%s749 + $0x234] sm:%s741] %v1032
                  %v1034 = vld [vmem:[%s748 + $0x438] sm:%s741]
                  %1035 = vst [vmem:[%s749 + $0x238] sm:%s741] %v1034
                  %v1036 = vld [vmem:[%s748 + $0x43c] sm:%s741]
                  %1037 = vst [vmem:[%s749 + $0x23c] sm:%s741] %v1036
                  %v1038 = vld [vmem:[%s748 + $0x440] sm:%s741]
                  %1039 = vst [vmem:[%s749 + $0x240] sm:%s741] %v1038
                  %v1040 = vld [vmem:[%s748 + $0x444] sm:%s741]
                  %1041 = vst [vmem:[%s749 + $0x244] sm:%s741] %v1040
                  %v1042 = vld [vmem:[%s748 + $0x448] sm:%s741]
                  %1043 = vst [vmem:[%s749 + $0x248] sm:%s741] %v1042
                  %v1044 = vld [vmem:[%s748 + $0x44c] sm:%s741]
                  %1045 = vst [vmem:[%s749 + $0x24c] sm:%s741] %v1044
                  %v1046 = vld [vmem:[%s748 + $0x450] sm:%s741]
                  %1047 = vst [vmem:[%s749 + $0x250] sm:%s741] %v1046
                  %v1048 = vld [vmem:[%s748 + $0x454] sm:%s741]
                  %1049 = vst [vmem:[%s749 + $0x254] sm:%s741] %v1048
                  %v1050 = vld [vmem:[%s748 + $0x458] sm:%s741]
                  %1051 = vst [vmem:[%s749 + $0x258] sm:%s741] %v1050
                  %v1052 = vld [vmem:[%s748 + $0x45c] sm:%s741]
                  %1053 = vst [vmem:[%s749 + $0x25c] sm:%s741] %v1052
                  %v1054 = vld [vmem:[%s748 + $0x460] sm:%s741]
                  %1055 = vst [vmem:[%s749 + $0x260] sm:%s741] %v1054
                  %v1056 = vld [vmem:[%s748 + $0x464] sm:%s741]
                  %1057 = vst [vmem:[%s749 + $0x264] sm:%s741] %v1056
                  %v1058 = vld [vmem:[%s748 + $0x468] sm:%s741]
                  %1059 = vst [vmem:[%s749 + $0x268] sm:%s741] %v1058
                  %v1060 = vld [vmem:[%s748 + $0x46c] sm:%s741]
                  %1061 = vst [vmem:[%s749 + $0x26c] sm:%s741] %v1060
                  %v1062 = vld [vmem:[%s748 + $0x470] sm:%s741]
                  %1063 = vst [vmem:[%s749 + $0x270] sm:%s741] %v1062
                  %v1064 = vld [vmem:[%s748 + $0x474] sm:%s741]
                  %1065 = vst [vmem:[%s749 + $0x274] sm:%s741] %v1064
                  %v1066 = vld [vmem:[%s748 + $0x478] sm:%s741]
                  %1067 = vst [vmem:[%s749 + $0x278] sm:%s741] %v1066
                  %v1068 = vld [vmem:[%s748 + $0x47c] sm:%s741]
                  %1069 = vst [vmem:[%s749 + $0x27c] sm:%s741] %v1068
                  %v1070 = vld [vmem:[%s748 + $0x500] sm:%s741]
                  %1071 = vst [vmem:[%s749 + $0x280] sm:%s741] %v1070
                  %v1072 = vld [vmem:[%s748 + $0x504] sm:%s741]
                  %1073 = vst [vmem:[%s749 + $0x284] sm:%s741] %v1072
                  %v1074 = vld [vmem:[%s748 + $0x508] sm:%s741]
                  %1075 = vst [vmem:[%s749 + $0x288] sm:%s741] %v1074
                  %v1076 = vld [vmem:[%s748 + $0x50c] sm:%s741]
                  %1077 = vst [vmem:[%s749 + $0x28c] sm:%s741] %v1076
                  %v1078 = vld [vmem:[%s748 + $0x510] sm:%s741]
                  %1079 = vst [vmem:[%s749 + $0x290] sm:%s741] %v1078
                  %v1080 = vld [vmem:[%s748 + $0x514] sm:%s741]
                  %1081 = vst [vmem:[%s749 + $0x294] sm:%s741] %v1080
                  %v1082 = vld [vmem:[%s748 + $0x518] sm:%s741]
                  %1083 = vst [vmem:[%s749 + $0x298] sm:%s741] %v1082
                  %v1084 = vld [vmem:[%s748 + $0x51c] sm:%s741]
                  %1085 = vst [vmem:[%s749 + $0x29c] sm:%s741] %v1084
                  %v1086 = vld [vmem:[%s748 + $0x520] sm:%s741]
                  %1087 = vst [vmem:[%s749 + $0x2a0] sm:%s741] %v1086
                  %v1088 = vld [vmem:[%s748 + $0x524] sm:%s741]
                  %1089 = vst [vmem:[%s749 + $0x2a4] sm:%s741] %v1088
                  %v1090 = vld [vmem:[%s748 + $0x528] sm:%s741]
                  %1091 = vst [vmem:[%s749 + $0x2a8] sm:%s741] %v1090
                  %v1092 = vld [vmem:[%s748 + $0x52c] sm:%s741]
                  %1093 = vst [vmem:[%s749 + $0x2ac] sm:%s741] %v1092
                  %v1094 = vld [vmem:[%s748 + $0x530] sm:%s741]
                  %1095 = vst [vmem:[%s749 + $0x2b0] sm:%s741] %v1094
                  %v1096 = vld [vmem:[%s748 + $0x534] sm:%s741]
                  %1097 = vst [vmem:[%s749 + $0x2b4] sm:%s741] %v1096
                  %v1098 = vld [vmem:[%s748 + $0x538] sm:%s741]
                  %1099 = vst [vmem:[%s749 + $0x2b8] sm:%s741] %v1098
                  %v1100 = vld [vmem:[%s748 + $0x53c] sm:%s741]
                  %1101 = vst [vmem:[%s749 + $0x2bc] sm:%s741] %v1100
                  %v1102 = vld [vmem:[%s748 + $0x540] sm:%s741]
                  %1103 = vst [vmem:[%s749 + $0x2c0] sm:%s741] %v1102
                  %v1104 = vld [vmem:[%s748 + $0x544] sm:%s741]
                  %1105 = vst [vmem:[%s749 + $0x2c4] sm:%s741] %v1104
                  %v1106 = vld [vmem:[%s748 + $0x548] sm:%s741]
                  %1107 = vst [vmem:[%s749 + $0x2c8] sm:%s741] %v1106
                  %v1108 = vld [vmem:[%s748 + $0x54c] sm:%s741]
                  %1109 = vst [vmem:[%s749 + $0x2cc] sm:%s741] %v1108
                  %v1110 = vld [vmem:[%s748 + $0x550] sm:%s741]
                  %1111 = vst [vmem:[%s749 + $0x2d0] sm:%s741] %v1110
                  %v1112 = vld [vmem:[%s748 + $0x554] sm:%s741]
                  %1113 = vst [vmem:[%s749 + $0x2d4] sm:%s741] %v1112
                  %v1114 = vld [vmem:[%s748 + $0x558] sm:%s741]
                  %1115 = vst [vmem:[%s749 + $0x2d8] sm:%s741] %v1114
                  %v1116 = vld [vmem:[%s748 + $0x55c] sm:%s741]
                  %1117 = vst [vmem:[%s749 + $0x2dc] sm:%s741] %v1116
                  %v1118 = vld [vmem:[%s748 + $0x560] sm:%s741]
                  %1119 = vst [vmem:[%s749 + $0x2e0] sm:%s741] %v1118
                  %v1120 = vld [vmem:[%s748 + $0x564] sm:%s741]
                  %1121 = vst [vmem:[%s749 + $0x2e4] sm:%s741] %v1120
                  %v1122 = vld [vmem:[%s748 + $0x568] sm:%s741]
                  %1123 = vst [vmem:[%s749 + $0x2e8] sm:%s741] %v1122
                  %v1124 = vld [vmem:[%s748 + $0x56c] sm:%s741]
                  %1125 = vst [vmem:[%s749 + $0x2ec] sm:%s741] %v1124
                  %v1126 = vld [vmem:[%s748 + $0x570] sm:%s741]
                  %1127 = vst [vmem:[%s749 + $0x2f0] sm:%s741] %v1126
                  %v1128 = vld [vmem:[%s748 + $0x574] sm:%s741]
                  %1129 = vst [vmem:[%s749 + $0x2f4] sm:%s741] %v1128
                  %v1130 = vld [vmem:[%s748 + $0x578] sm:%s741]
                  %1131 = vst [vmem:[%s749 + $0x2f8] sm:%s741] %v1130
                  %v1132 = vld [vmem:[%s748 + $0x57c] sm:%s741]
                  %1133 = vst [vmem:[%s749 + $0x2fc] sm:%s741] %v1132
                  %v1134 = vld [vmem:[%s748 + $0x600] sm:%s741]
                  %1135 = vst [vmem:[%s749 + $0x300] sm:%s741] %v1134
                  %v1136 = vld [vmem:[%s748 + $0x604] sm:%s741]
                  %1137 = vst [vmem:[%s749 + $0x304] sm:%s741] %v1136
                  %v1138 = vld [vmem:[%s748 + $0x608] sm:%s741]
                  %1139 = vst [vmem:[%s749 + $0x308] sm:%s741] %v1138
                  %v1140 = vld [vmem:[%s748 + $0x60c] sm:%s741]
                  %1141 = vst [vmem:[%s749 + $0x30c] sm:%s741] %v1140
                  %v1142 = vld [vmem:[%s748 + $0x610] sm:%s741]
                  %1143 = vst [vmem:[%s749 + $0x310] sm:%s741] %v1142
                  %v1144 = vld [vmem:[%s748 + $0x614] sm:%s741]
                  %1145 = vst [vmem:[%s749 + $0x314] sm:%s741] %v1144
                  %v1146 = vld [vmem:[%s748 + $0x618] sm:%s741]
                  %1147 = vst [vmem:[%s749 + $0x318] sm:%s741] %v1146
                  %v1148 = vld [vmem:[%s748 + $0x61c] sm:%s741]
                  %1149 = vst [vmem:[%s749 + $0x31c] sm:%s741] %v1148
                  %v1150 = vld [vmem:[%s748 + $0x620] sm:%s741]
                  %1151 = vst [vmem:[%s749 + $0x320] sm:%s741] %v1150
                  %v1152 = vld [vmem:[%s748 + $0x624] sm:%s741]
                  %1153 = vst [vmem:[%s749 + $0x324] sm:%s741] %v1152
                  %v1154 = vld [vmem:[%s748 + $0x628] sm:%s741]
                  %1155 = vst [vmem:[%s749 + $0x328] sm:%s741] %v1154
                  %v1156 = vld [vmem:[%s748 + $0x62c] sm:%s741]
                  %1157 = vst [vmem:[%s749 + $0x32c] sm:%s741] %v1156
                  %v1158 = vld [vmem:[%s748 + $0x630] sm:%s741]
                  %1159 = vst [vmem:[%s749 + $0x330] sm:%s741] %v1158
                  %v1160 = vld [vmem:[%s748 + $0x634] sm:%s741]
                  %1161 = vst [vmem:[%s749 + $0x334] sm:%s741] %v1160
                  %v1162 = vld [vmem:[%s748 + $0x638] sm:%s741]
                  %1163 = vst [vmem:[%s749 + $0x338] sm:%s741] %v1162
                  %v1164 = vld [vmem:[%s748 + $0x63c] sm:%s741]
                  %1165 = vst [vmem:[%s749 + $0x33c] sm:%s741] %v1164
                  %v1166 = vld [vmem:[%s748 + $0x640] sm:%s741]
                  %1167 = vst [vmem:[%s749 + $0x340] sm:%s741] %v1166
                  %v1168 = vld [vmem:[%s748 + $0x644] sm:%s741]
                  %1169 = vst [vmem:[%s749 + $0x344] sm:%s741] %v1168
                  %v1170 = vld [vmem:[%s748 + $0x648] sm:%s741]
                  %1171 = vst [vmem:[%s749 + $0x348] sm:%s741] %v1170
                  %v1172 = vld [vmem:[%s748 + $0x64c] sm:%s741]
                  %1173 = vst [vmem:[%s749 + $0x34c] sm:%s741] %v1172
                  %v1174 = vld [vmem:[%s748 + $0x650] sm:%s741]
                  %1175 = vst [vmem:[%s749 + $0x350] sm:%s741] %v1174
                  %v1176 = vld [vmem:[%s748 + $0x654] sm:%s741]
                  %1177 = vst [vmem:[%s749 + $0x354] sm:%s741] %v1176
                  %v1178 = vld [vmem:[%s748 + $0x658] sm:%s741]
                  %1179 = vst [vmem:[%s749 + $0x358] sm:%s741] %v1178
                  %v1180 = vld [vmem:[%s748 + $0x65c] sm:%s741]
                  %1181 = vst [vmem:[%s749 + $0x35c] sm:%s741] %v1180
                  %v1182 = vld [vmem:[%s748 + $0x660] sm:%s741]
                  %1183 = vst [vmem:[%s749 + $0x360] sm:%s741] %v1182
                  %v1184 = vld [vmem:[%s748 + $0x664] sm:%s741]
                  %1185 = vst [vmem:[%s749 + $0x364] sm:%s741] %v1184
                  %v1186 = vld [vmem:[%s748 + $0x668] sm:%s741]
                  %1187 = vst [vmem:[%s749 + $0x368] sm:%s741] %v1186
                  %v1188 = vld [vmem:[%s748 + $0x66c] sm:%s741]
                  %1189 = vst [vmem:[%s749 + $0x36c] sm:%s741] %v1188
                  %v1190 = vld [vmem:[%s748 + $0x670] sm:%s741]
                  %1191 = vst [vmem:[%s749 + $0x370] sm:%s741] %v1190
                  %v1192 = vld [vmem:[%s748 + $0x674] sm:%s741]
                  %1193 = vst [vmem:[%s749 + $0x374] sm:%s741] %v1192
                  %v1194 = vld [vmem:[%s748 + $0x678] sm:%s741]
                  %1195 = vst [vmem:[%s749 + $0x378] sm:%s741] %v1194
                  %v1196 = vld [vmem:[%s748 + $0x67c] sm:%s741]
                  %1197 = vst [vmem:[%s749 + $0x37c] sm:%s741] %v1196
                  %v1198 = vld [vmem:[%s748 + $0x700] sm:%s741]
                  %1199 = vst [vmem:[%s749 + $0x380] sm:%s741] %v1198
                  %v1200 = vld [vmem:[%s748 + $0x704] sm:%s741]
                  %1201 = vst [vmem:[%s749 + $0x384] sm:%s741] %v1200
                  %v1202 = vld [vmem:[%s748 + $0x708] sm:%s741]
                  %1203 = vst [vmem:[%s749 + $0x388] sm:%s741] %v1202
                  %v1204 = vld [vmem:[%s748 + $0x70c] sm:%s741]
                  %1205 = vst [vmem:[%s749 + $0x38c] sm:%s741] %v1204
                  %v1206 = vld [vmem:[%s748 + $0x710] sm:%s741]
                  %1207 = vst [vmem:[%s749 + $0x390] sm:%s741] %v1206
                  %v1208 = vld [vmem:[%s748 + $0x714] sm:%s741]
                  %1209 = vst [vmem:[%s749 + $0x394] sm:%s741] %v1208
                  %v1210 = vld [vmem:[%s748 + $0x718] sm:%s741]
                  %1211 = vst [vmem:[%s749 + $0x398] sm:%s741] %v1210
                  %v1212 = vld [vmem:[%s748 + $0x71c] sm:%s741]
                  %1213 = vst [vmem:[%s749 + $0x39c] sm:%s741] %v1212
                  %v1214 = vld [vmem:[%s748 + $0x720] sm:%s741]
                  %1215 = vst [vmem:[%s749 + $0x3a0] sm:%s741] %v1214
                  %v1216 = vld [vmem:[%s748 + $0x724] sm:%s741]
                  %1217 = vst [vmem:[%s749 + $0x3a4] sm:%s741] %v1216
                  %v1218 = vld [vmem:[%s748 + $0x728] sm:%s741]
                  %1219 = vst [vmem:[%s749 + $0x3a8] sm:%s741] %v1218
                  %v1220 = vld [vmem:[%s748 + $0x72c] sm:%s741]
                  %1221 = vst [vmem:[%s749 + $0x3ac] sm:%s741] %v1220
                  %v1222 = vld [vmem:[%s748 + $0x730] sm:%s741]
                  %1223 = vst [vmem:[%s749 + $0x3b0] sm:%s741] %v1222
                  %v1224 = vld [vmem:[%s748 + $0x734] sm:%s741]
                  %1225 = vst [vmem:[%s749 + $0x3b4] sm:%s741] %v1224
                  %v1226 = vld [vmem:[%s748 + $0x738] sm:%s741]
                  %1227 = vst [vmem:[%s749 + $0x3b8] sm:%s741] %v1226
                  %v1228 = vld [vmem:[%s748 + $0x73c] sm:%s741]
                  %1229 = vst [vmem:[%s749 + $0x3bc] sm:%s741] %v1228
                  %v1230 = vld [vmem:[%s748 + $0x740] sm:%s741]
                  %1231 = vst [vmem:[%s749 + $0x3c0] sm:%s741] %v1230
                  %v1232 = vld [vmem:[%s748 + $0x744] sm:%s741]
                  %1233 = vst [vmem:[%s749 + $0x3c4] sm:%s741] %v1232
                  %v1234 = vld [vmem:[%s748 + $0x748] sm:%s741]
                  %1235 = vst [vmem:[%s749 + $0x3c8] sm:%s741] %v1234
                  %v1236 = vld [vmem:[%s748 + $0x74c] sm:%s741]
                  %1237 = vst [vmem:[%s749 + $0x3cc] sm:%s741] %v1236
                  %v1238 = vld [vmem:[%s748 + $0x750] sm:%s741]
                  %1239 = vst [vmem:[%s749 + $0x3d0] sm:%s741] %v1238
                  %v1240 = vld [vmem:[%s748 + $0x754] sm:%s741]
                  %1241 = vst [vmem:[%s749 + $0x3d4] sm:%s741] %v1240
                  %v1242 = vld [vmem:[%s748 + $0x758] sm:%s741]
                  %1243 = vst [vmem:[%s749 + $0x3d8] sm:%s741] %v1242
                  %v1244 = vld [vmem:[%s748 + $0x75c] sm:%s741]
                  %1245 = vst [vmem:[%s749 + $0x3dc] sm:%s741] %v1244
                  %v1246 = vld [vmem:[%s748 + $0x760] sm:%s741]
                  %1247 = vst [vmem:[%s749 + $0x3e0] sm:%s741] %v1246
                  %v1248 = vld [vmem:[%s748 + $0x764] sm:%s741]
                  %1249 = vst [vmem:[%s749 + $0x3e4] sm:%s741] %v1248
                  %v1250 = vld [vmem:[%s748 + $0x768] sm:%s741]
                  %1251 = vst [vmem:[%s749 + $0x3e8] sm:%s741] %v1250
                  %v1252 = vld [vmem:[%s748 + $0x76c] sm:%s741]
                  %1253 = vst [vmem:[%s749 + $0x3ec] sm:%s741] %v1252
                  %v1254 = vld [vmem:[%s748 + $0x770] sm:%s741]
                  %1255 = vst [vmem:[%s749 + $0x3f0] sm:%s741] %v1254
                  %v1256 = vld [vmem:[%s748 + $0x774] sm:%s741]
                  %1257 = vst [vmem:[%s749 + $0x3f4] sm:%s741] %v1256
                  %v1258 = vld [vmem:[%s748 + $0x778] sm:%s741]
                  %1259 = vst [vmem:[%s749 + $0x3f8] sm:%s741] %v1258
                  %v1260 = vld [vmem:[%s748 + $0x77c] sm:%s741]
                  %1261 = vst [vmem:[%s749 + $0x3fc] sm:%s741] %v1260
                  %v1262 = vld [vmem:[%s748 + $0x800] sm:%s741]
                  %1263 = vst [vmem:[%s749 + $0x400] sm:%s741] %v1262
                  %v1264 = vld [vmem:[%s748 + $0x804] sm:%s741]
                  %1265 = vst [vmem:[%s749 + $0x404] sm:%s741] %v1264
                  %v1266 = vld [vmem:[%s748 + $0x808] sm:%s741]
                  %1267 = vst [vmem:[%s749 + $0x408] sm:%s741] %v1266
                  %v1268 = vld [vmem:[%s748 + $0x80c] sm:%s741]
                  %1269 = vst [vmem:[%s749 + $0x40c] sm:%s741] %v1268
                  %v1270 = vld [vmem:[%s748 + $0x810] sm:%s741]
                  %1271 = vst [vmem:[%s749 + $0x410] sm:%s741] %v1270
                  %v1272 = vld [vmem:[%s748 + $0x814] sm:%s741]
                  %1273 = vst [vmem:[%s749 + $0x414] sm:%s741] %v1272
                  %v1274 = vld [vmem:[%s748 + $0x818] sm:%s741]
                  %1275 = vst [vmem:[%s749 + $0x418] sm:%s741] %v1274
                  %v1276 = vld [vmem:[%s748 + $0x81c] sm:%s741]
                  %1277 = vst [vmem:[%s749 + $0x41c] sm:%s741] %v1276
                  %v1278 = vld [vmem:[%s748 + $0x820] sm:%s741]
                  %1279 = vst [vmem:[%s749 + $0x420] sm:%s741] %v1278
                  %v1280 = vld [vmem:[%s748 + $0x824] sm:%s741]
                  %1281 = vst [vmem:[%s749 + $0x424] sm:%s741] %v1280
                  %v1282 = vld [vmem:[%s748 + $0x828] sm:%s741]
                  %1283 = vst [vmem:[%s749 + $0x428] sm:%s741] %v1282
                  %v1284 = vld [vmem:[%s748 + $0x82c] sm:%s741]
                  %1285 = vst [vmem:[%s749 + $0x42c] sm:%s741] %v1284
                  %v1286 = vld [vmem:[%s748 + $0x830] sm:%s741]
                  %1287 = vst [vmem:[%s749 + $0x430] sm:%s741] %v1286
                  %v1288 = vld [vmem:[%s748 + $0x834] sm:%s741]
                  %1289 = vst [vmem:[%s749 + $0x434] sm:%s741] %v1288
                  %v1290 = vld [vmem:[%s748 + $0x838] sm:%s741]
                  %1291 = vst [vmem:[%s749 + $0x438] sm:%s741] %v1290
                  %v1292 = vld [vmem:[%s748 + $0x83c] sm:%s741]
                  %1293 = vst [vmem:[%s749 + $0x43c] sm:%s741] %v1292
                  %v1294 = vld [vmem:[%s748 + $0x840] sm:%s741]
                  %1295 = vst [vmem:[%s749 + $0x440] sm:%s741] %v1294
                  %v1296 = vld [vmem:[%s748 + $0x844] sm:%s741]
                  %1297 = vst [vmem:[%s749 + $0x444] sm:%s741] %v1296
                  %v1298 = vld [vmem:[%s748 + $0x848] sm:%s741]
                  %1299 = vst [vmem:[%s749 + $0x448] sm:%s741] %v1298
                  %v1300 = vld [vmem:[%s748 + $0x84c] sm:%s741]
                  %1301 = vst [vmem:[%s749 + $0x44c] sm:%s741] %v1300
                  %v1302 = vld [vmem:[%s748 + $0x850] sm:%s741]
                  %1303 = vst [vmem:[%s749 + $0x450] sm:%s741] %v1302
                  %v1304 = vld [vmem:[%s748 + $0x854] sm:%s741]
                  %1305 = vst [vmem:[%s749 + $0x454] sm:%s741] %v1304
                  %v1306 = vld [vmem:[%s748 + $0x858] sm:%s741]
                  %1307 = vst [vmem:[%s749 + $0x458] sm:%s741] %v1306
                  %v1308 = vld [vmem:[%s748 + $0x85c] sm:%s741]
                  %1309 = vst [vmem:[%s749 + $0x45c] sm:%s741] %v1308
                  %v1310 = vld [vmem:[%s748 + $0x860] sm:%s741]
                  %1311 = vst [vmem:[%s749 + $0x460] sm:%s741] %v1310
                  %v1312 = vld [vmem:[%s748 + $0x864] sm:%s741]
                  %1313 = vst [vmem:[%s749 + $0x464] sm:%s741] %v1312
                  %v1314 = vld [vmem:[%s748 + $0x868] sm:%s741]
                  %1315 = vst [vmem:[%s749 + $0x468] sm:%s741] %v1314
                  %v1316 = vld [vmem:[%s748 + $0x86c] sm:%s741]
                  %1317 = vst [vmem:[%s749 + $0x46c] sm:%s741] %v1316
                  %v1318 = vld [vmem:[%s748 + $0x870] sm:%s741]
                  %1319 = vst [vmem:[%s749 + $0x470] sm:%s741] %v1318
                  %v1320 = vld [vmem:[%s748 + $0x874] sm:%s741]
                  %1321 = vst [vmem:[%s749 + $0x474] sm:%s741] %v1320
                  %v1322 = vld [vmem:[%s748 + $0x878] sm:%s741]
                  %1323 = vst [vmem:[%s749 + $0x478] sm:%s741] %v1322
                  %v1324 = vld [vmem:[%s748 + $0x87c] sm:%s741]
                  %1325 = vst [vmem:[%s749 + $0x47c] sm:%s741] %v1324
                $region63: #{tpu_custom_call.1} parent=50 // loop_footer
                  %s747 = sadd.s32 1, %s743
                $region64: #{tpu_custom_call.1} parent=50 // loop_footer_branch
                  %742 = sbr.rel target = $region60
                $region65: #{tpu_custom_call.1} parent=50 // loop_exit
                  _
              $region51: #{tpu_custom_call.1} parent=35 // pred_fallthru
                _
            $region36: #{tpu_custom_call.1} parent=31 // pred_fallthru
              _
            // Predicated region
            $region37: #{tpu_custom_call.1} parent=31 // pred_check
              _
            $region38: #{tpu_custom_call.1} parent=31 // pred_check_branch
              %143 = sbr.rel (0) target = $region40
            $region39: #{tpu_custom_call.1} parent=31 // pred_region
              %s145 = ssub.s32 16, 1
              loop: start=0, step=1, limit=1
              $region41: #{tpu_custom_call.1} parent=39 // loop_pre_header
                _
              $region42: #{tpu_custom_call.1} parent=39 // loop_header
                %s147 = sphi 0, %s151
                %p148 = scmp.ge.s32.totalorder %s147, 1
                %s152 = sphi %s137, %s137
                %s153 = sphi %s134, %s134
              $region43: #{tpu_custom_call.1} parent=39 // loop_header_branch
                %150 = sbr.rel (%p148) target = $region47
              $region44: #{tpu_custom_call.1} parent=39 // loop_body
                %v154 = vld [vmem:[%s152] sm:%s145]
                %155 = vst [vmem:[%s153] sm:%s145] %v154
                %v156 = vld [vmem:[%s152 + $0x4] sm:%s145]
                %157 = vst [vmem:[%s153 + $0x4] sm:%s145] %v156
                %v158 = vld [vmem:[%s152 + $0x8] sm:%s145]
                %159 = vst [vmem:[%s153 + $0x8] sm:%s145] %v158
                %v160 = vld [vmem:[%s152 + $0xc] sm:%s145]
                %161 = vst [vmem:[%s153 + $0xc] sm:%s145] %v160
                %v162 = vld [vmem:[%s152 + $0x10] sm:%s145]
                %163 = vst [vmem:[%s153 + $0x10] sm:%s145] %v162
                %v164 = vld [vmem:[%s152 + $0x14] sm:%s145]
                %165 = vst [vmem:[%s153 + $0x14] sm:%s145] %v164
                %v166 = vld [vmem:[%s152 + $0x18] sm:%s145]
                %167 = vst [vmem:[%s153 + $0x18] sm:%s145] %v166
                %v168 = vld [vmem:[%s152 + $0x1c] sm:%s145]
                %169 = vst [vmem:[%s153 + $0x1c] sm:%s145] %v168
                %v170 = vld [vmem:[%s152 + $0x20] sm:%s145]
                %171 = vst [vmem:[%s153 + $0x20] sm:%s145] %v170
                %v172 = vld [vmem:[%s152 + $0x24] sm:%s145]
                %173 = vst [vmem:[%s153 + $0x24] sm:%s145] %v172
                %v174 = vld [vmem:[%s152 + $0x28] sm:%s145]
                %175 = vst [vmem:[%s153 + $0x28] sm:%s145] %v174
                %v176 = vld [vmem:[%s152 + $0x2c] sm:%s145]
                %177 = vst [vmem:[%s153 + $0x2c] sm:%s145] %v176
                %v178 = vld [vmem:[%s152 + $0x30] sm:%s145]
                %179 = vst [vmem:[%s153 + $0x30] sm:%s145] %v178
                %v180 = vld [vmem:[%s152 + $0x34] sm:%s145]
                %181 = vst [vmem:[%s153 + $0x34] sm:%s145] %v180
                %v182 = vld [vmem:[%s152 + $0x38] sm:%s145]
                %183 = vst [vmem:[%s153 + $0x38] sm:%s145] %v182
                %v184 = vld [vmem:[%s152 + $0x3c] sm:%s145]
                %185 = vst [vmem:[%s153 + $0x3c] sm:%s145] %v184
                %v186 = vld [vmem:[%s152 + $0x40] sm:%s145]
                %187 = vst [vmem:[%s153 + $0x40] sm:%s145] %v186
                %v188 = vld [vmem:[%s152 + $0x44] sm:%s145]
                %189 = vst [vmem:[%s153 + $0x44] sm:%s145] %v188
                %v190 = vld [vmem:[%s152 + $0x48] sm:%s145]
                %191 = vst [vmem:[%s153 + $0x48] sm:%s145] %v190
                %v192 = vld [vmem:[%s152 + $0x4c] sm:%s145]
                %193 = vst [vmem:[%s153 + $0x4c] sm:%s145] %v192
                %v194 = vld [vmem:[%s152 + $0x50] sm:%s145]
                %195 = vst [vmem:[%s153 + $0x50] sm:%s145] %v194
                %v196 = vld [vmem:[%s152 + $0x54] sm:%s145]
                %197 = vst [vmem:[%s153 + $0x54] sm:%s145] %v196
                %v198 = vld [vmem:[%s152 + $0x58] sm:%s145]
                %199 = vst [vmem:[%s153 + $0x58] sm:%s145] %v198
                %v200 = vld [vmem:[%s152 + $0x5c] sm:%s145]
                %201 = vst [vmem:[%s153 + $0x5c] sm:%s145] %v200
                %v202 = vld [vmem:[%s152 + $0x60] sm:%s145]
                %203 = vst [vmem:[%s153 + $0x60] sm:%s145] %v202
                %v204 = vld [vmem:[%s152 + $0x64] sm:%s145]
                %205 = vst [vmem:[%s153 + $0x64] sm:%s145] %v204
                %v206 = vld [vmem:[%s152 + $0x68] sm:%s145]
                %207 = vst [vmem:[%s153 + $0x68] sm:%s145] %v206
                %v208 = vld [vmem:[%s152 + $0x6c] sm:%s145]
                %209 = vst [vmem:[%s153 + $0x6c] sm:%s145] %v208
                %v210 = vld [vmem:[%s152 + $0x70] sm:%s145]
                %211 = vst [vmem:[%s153 + $0x70] sm:%s145] %v210
                %v212 = vld [vmem:[%s152 + $0x74] sm:%s145]
                %213 = vst [vmem:[%s153 + $0x74] sm:%s145] %v212
                %v214 = vld [vmem:[%s152 + $0x78] sm:%s145]
                %215 = vst [vmem:[%s153 + $0x78] sm:%s145] %v214
                %v216 = vld [vmem:[%s152 + $0x7c] sm:%s145]
                %217 = vst [vmem:[%s153 + $0x7c] sm:%s145] %v216
                %v218 = vld [vmem:[%s152 + $0x100] sm:%s145]
                %219 = vst [vmem:[%s153 + $0x80] sm:%s145] %v218
                %v220 = vld [vmem:[%s152 + $0x104] sm:%s145]
                %221 = vst [vmem:[%s153 + $0x84] sm:%s145] %v220
                %v222 = vld [vmem:[%s152 + $0x108] sm:%s145]
                %223 = vst [vmem:[%s153 + $0x88] sm:%s145] %v222
                %v224 = vld [vmem:[%s152 + $0x10c] sm:%s145]
                %225 = vst [vmem:[%s153 + $0x8c] sm:%s145] %v224
                %v226 = vld [vmem:[%s152 + $0x110] sm:%s145]
                %227 = vst [vmem:[%s153 + $0x90] sm:%s145] %v226
                %v228 = vld [vmem:[%s152 + $0x114] sm:%s145]
                %229 = vst [vmem:[%s153 + $0x94] sm:%s145] %v228
                %v230 = vld [vmem:[%s152 + $0x118] sm:%s145]
                %231 = vst [vmem:[%s153 + $0x98] sm:%s145] %v230
                %v232 = vld [vmem:[%s152 + $0x11c] sm:%s145]
                %233 = vst [vmem:[%s153 + $0x9c] sm:%s145] %v232
                %v234 = vld [vmem:[%s152 + $0x120] sm:%s145]
                %235 = vst [vmem:[%s153 + $0xa0] sm:%s145] %v234
                %v236 = vld [vmem:[%s152 + $0x124] sm:%s145]
                %237 = vst [vmem:[%s153 + $0xa4] sm:%s145] %v236
                %v238 = vld [vmem:[%s152 + $0x128] sm:%s145]
                %239 = vst [vmem:[%s153 + $0xa8] sm:%s145] %v238
                %v240 = vld [vmem:[%s152 + $0x12c] sm:%s145]
                %241 = vst [vmem:[%s153 + $0xac] sm:%s145] %v240
                %v242 = vld [vmem:[%s152 + $0x130] sm:%s145]
                %243 = vst [vmem:[%s153 + $0xb0] sm:%s145] %v242
                %v244 = vld [vmem:[%s152 + $0x134] sm:%s145]
                %245 = vst [vmem:[%s153 + $0xb4] sm:%s145] %v244
                %v246 = vld [vmem:[%s152 + $0x138] sm:%s145]
                %247 = vst [vmem:[%s153 + $0xb8] sm:%s145] %v246
                %v248 = vld [vmem:[%s152 + $0x13c] sm:%s145]
                %249 = vst [vmem:[%s153 + $0xbc] sm:%s145] %v248
                %v250 = vld [vmem:[%s152 + $0x140] sm:%s145]
                %251 = vst [vmem:[%s153 + $0xc0] sm:%s145] %v250
                %v252 = vld [vmem:[%s152 + $0x144] sm:%s145]
                %253 = vst [vmem:[%s153 + $0xc4] sm:%s145] %v252
                %v254 = vld [vmem:[%s152 + $0x148] sm:%s145]
                %255 = vst [vmem:[%s153 + $0xc8] sm:%s145] %v254
                %v256 = vld [vmem:[%s152 + $0x14c] sm:%s145]
                %257 = vst [vmem:[%s153 + $0xcc] sm:%s145] %v256
                %v258 = vld [vmem:[%s152 + $0x150] sm:%s145]
                %259 = vst [vmem:[%s153 + $0xd0] sm:%s145] %v258
                %v260 = vld [vmem:[%s152 + $0x154] sm:%s145]
                %261 = vst [vmem:[%s153 + $0xd4] sm:%s145] %v260
                %v262 = vld [vmem:[%s152 + $0x158] sm:%s145]
                %263 = vst [vmem:[%s153 + $0xd8] sm:%s145] %v262
                %v264 = vld [vmem:[%s152 + $0x15c] sm:%s145]
                %265 = vst [vmem:[%s153 + $0xdc] sm:%s145] %v264
                %v266 = vld [vmem:[%s152 + $0x160] sm:%s145]
                %267 = vst [vmem:[%s153 + $0xe0] sm:%s145] %v266
                %v268 = vld [vmem:[%s152 + $0x164] sm:%s145]
                %269 = vst [vmem:[%s153 + $0xe4] sm:%s145] %v268
                %v270 = vld [vmem:[%s152 + $0x168] sm:%s145]
                %271 = vst [vmem:[%s153 + $0xe8] sm:%s145] %v270
                %v272 = vld [vmem:[%s152 + $0x16c] sm:%s145]
                %273 = vst [vmem:[%s153 + $0xec] sm:%s145] %v272
                %v274 = vld [vmem:[%s152 + $0x170] sm:%s145]
                %275 = vst [vmem:[%s153 + $0xf0] sm:%s145] %v274
                %v276 = vld [vmem:[%s152 + $0x174] sm:%s145]
                %277 = vst [vmem:[%s153 + $0xf4] sm:%s145] %v276
                %v278 = vld [vmem:[%s152 + $0x178] sm:%s145]
                %279 = vst [vmem:[%s153 + $0xf8] sm:%s145] %v278
                %v280 = vld [vmem:[%s152 + $0x17c] sm:%s145]
                %281 = vst [vmem:[%s153 + $0xfc] sm:%s145] %v280
                %v282 = vld [vmem:[%s152 + $0x200] sm:%s145]
                %283 = vst [vmem:[%s153 + $0x100] sm:%s145] %v282
                %v284 = vld [vmem:[%s152 + $0x204] sm:%s145]
                %285 = vst [vmem:[%s153 + $0x104] sm:%s145] %v284
                %v286 = vld [vmem:[%s152 + $0x208] sm:%s145]
                %287 = vst [vmem:[%s153 + $0x108] sm:%s145] %v286
                %v288 = vld [vmem:[%s152 + $0x20c] sm:%s145]
                %289 = vst [vmem:[%s153 + $0x10c] sm:%s145] %v288
                %v290 = vld [vmem:[%s152 + $0x210] sm:%s145]
                %291 = vst [vmem:[%s153 + $0x110] sm:%s145] %v290
                %v292 = vld [vmem:[%s152 + $0x214] sm:%s145]
                %293 = vst [vmem:[%s153 + $0x114] sm:%s145] %v292
                %v294 = vld [vmem:[%s152 + $0x218] sm:%s145]
                %295 = vst [vmem:[%s153 + $0x118] sm:%s145] %v294
                %v296 = vld [vmem:[%s152 + $0x21c] sm:%s145]
                %297 = vst [vmem:[%s153 + $0x11c] sm:%s145] %v296
                %v298 = vld [vmem:[%s152 + $0x220] sm:%s145]
                %299 = vst [vmem:[%s153 + $0x120] sm:%s145] %v298
                %v300 = vld [vmem:[%s152 + $0x224] sm:%s145]
                %301 = vst [vmem:[%s153 + $0x124] sm:%s145] %v300
                %v302 = vld [vmem:[%s152 + $0x228] sm:%s145]
                %303 = vst [vmem:[%s153 + $0x128] sm:%s145] %v302
                %v304 = vld [vmem:[%s152 + $0x22c] sm:%s145]
                %305 = vst [vmem:[%s153 + $0x12c] sm:%s145] %v304
                %v306 = vld [vmem:[%s152 + $0x230] sm:%s145]
                %307 = vst [vmem:[%s153 + $0x130] sm:%s145] %v306
                %v308 = vld [vmem:[%s152 + $0x234] sm:%s145]
                %309 = vst [vmem:[%s153 + $0x134] sm:%s145] %v308
                %v310 = vld [vmem:[%s152 + $0x238] sm:%s145]
                %311 = vst [vmem:[%s153 + $0x138] sm:%s145] %v310
                %v312 = vld [vmem:[%s152 + $0x23c] sm:%s145]
                %313 = vst [vmem:[%s153 + $0x13c] sm:%s145] %v312
                %v314 = vld [vmem:[%s152 + $0x240] sm:%s145]
                %315 = vst [vmem:[%s153 + $0x140] sm:%s145] %v314
                %v316 = vld [vmem:[%s152 + $0x244] sm:%s145]
                %317 = vst [vmem:[%s153 + $0x144] sm:%s145] %v316
                %v318 = vld [vmem:[%s152 + $0x248] sm:%s145]
                %319 = vst [vmem:[%s153 + $0x148] sm:%s145] %v318
                %v320 = vld [vmem:[%s152 + $0x24c] sm:%s145]
                %321 = vst [vmem:[%s153 + $0x14c] sm:%s145] %v320
                %v322 = vld [vmem:[%s152 + $0x250] sm:%s145]
                %323 = vst [vmem:[%s153 + $0x150] sm:%s145] %v322
                %v324 = vld [vmem:[%s152 + $0x254] sm:%s145]
                %325 = vst [vmem:[%s153 + $0x154] sm:%s145] %v324
                %v326 = vld [vmem:[%s152 + $0x258] sm:%s145]
                %327 = vst [vmem:[%s153 + $0x158] sm:%s145] %v326
                %v328 = vld [vmem:[%s152 + $0x25c] sm:%s145]
                %329 = vst [vmem:[%s153 + $0x15c] sm:%s145] %v328
                %v330 = vld [vmem:[%s152 + $0x260] sm:%s145]
                %331 = vst [vmem:[%s153 + $0x160] sm:%s145] %v330
                %v332 = vld [vmem:[%s152 + $0x264] sm:%s145]
                %333 = vst [vmem:[%s153 + $0x164] sm:%s145] %v332
                %v334 = vld [vmem:[%s152 + $0x268] sm:%s145]
                %335 = vst [vmem:[%s153 + $0x168] sm:%s145] %v334
                %v336 = vld [vmem:[%s152 + $0x26c] sm:%s145]
                %337 = vst [vmem:[%s153 + $0x16c] sm:%s145] %v336
                %v338 = vld [vmem:[%s152 + $0x270] sm:%s145]
                %339 = vst [vmem:[%s153 + $0x170] sm:%s145] %v338
                %v340 = vld [vmem:[%s152 + $0x274] sm:%s145]
                %341 = vst [vmem:[%s153 + $0x174] sm:%s145] %v340
                %v342 = vld [vmem:[%s152 + $0x278] sm:%s145]
                %343 = vst [vmem:[%s153 + $0x178] sm:%s145] %v342
                %v344 = vld [vmem:[%s152 + $0x27c] sm:%s145]
                %345 = vst [vmem:[%s153 + $0x17c] sm:%s145] %v344
                %v346 = vld [vmem:[%s152 + $0x300] sm:%s145]
                %347 = vst [vmem:[%s153 + $0x180] sm:%s145] %v346
                %v348 = vld [vmem:[%s152 + $0x304] sm:%s145]
                %349 = vst [vmem:[%s153 + $0x184] sm:%s145] %v348
                %v350 = vld [vmem:[%s152 + $0x308] sm:%s145]
                %351 = vst [vmem:[%s153 + $0x188] sm:%s145] %v350
                %v352 = vld [vmem:[%s152 + $0x30c] sm:%s145]
                %353 = vst [vmem:[%s153 + $0x18c] sm:%s145] %v352
                %v354 = vld [vmem:[%s152 + $0x310] sm:%s145]
                %355 = vst [vmem:[%s153 + $0x190] sm:%s145] %v354
                %v356 = vld [vmem:[%s152 + $0x314] sm:%s145]
                %357 = vst [vmem:[%s153 + $0x194] sm:%s145] %v356
                %v358 = vld [vmem:[%s152 + $0x318] sm:%s145]
                %359 = vst [vmem:[%s153 + $0x198] sm:%s145] %v358
                %v360 = vld [vmem:[%s152 + $0x31c] sm:%s145]
                %361 = vst [vmem:[%s153 + $0x19c] sm:%s145] %v360
                %v362 = vld [vmem:[%s152 + $0x320] sm:%s145]
                %363 = vst [vmem:[%s153 + $0x1a0] sm:%s145] %v362
                %v364 = vld [vmem:[%s152 + $0x324] sm:%s145]
                %365 = vst [vmem:[%s153 + $0x1a4] sm:%s145] %v364
                %v366 = vld [vmem:[%s152 + $0x328] sm:%s145]
                %367 = vst [vmem:[%s153 + $0x1a8] sm:%s145] %v366
                %v368 = vld [vmem:[%s152 + $0x32c] sm:%s145]
                %369 = vst [vmem:[%s153 + $0x1ac] sm:%s145] %v368
                %v370 = vld [vmem:[%s152 + $0x330] sm:%s145]
                %371 = vst [vmem:[%s153 + $0x1b0] sm:%s145] %v370
                %v372 = vld [vmem:[%s152 + $0x334] sm:%s145]
                %373 = vst [vmem:[%s153 + $0x1b4] sm:%s145] %v372
                %v374 = vld [vmem:[%s152 + $0x338] sm:%s145]
                %375 = vst [vmem:[%s153 + $0x1b8] sm:%s145] %v374
                %v376 = vld [vmem:[%s152 + $0x33c] sm:%s145]
                %377 = vst [vmem:[%s153 + $0x1bc] sm:%s145] %v376
                %v378 = vld [vmem:[%s152 + $0x340] sm:%s145]
                %379 = vst [vmem:[%s153 + $0x1c0] sm:%s145] %v378
                %v380 = vld [vmem:[%s152 + $0x344] sm:%s145]
                %381 = vst [vmem:[%s153 + $0x1c4] sm:%s145] %v380
                %v382 = vld [vmem:[%s152 + $0x348] sm:%s145]
                %383 = vst [vmem:[%s153 + $0x1c8] sm:%s145] %v382
                %v384 = vld [vmem:[%s152 + $0x34c] sm:%s145]
                %385 = vst [vmem:[%s153 + $0x1cc] sm:%s145] %v384
                %v386 = vld [vmem:[%s152 + $0x350] sm:%s145]
                %387 = vst [vmem:[%s153 + $0x1d0] sm:%s145] %v386
                %v388 = vld [vmem:[%s152 + $0x354] sm:%s145]
                %389 = vst [vmem:[%s153 + $0x1d4] sm:%s145] %v388
                %v390 = vld [vmem:[%s152 + $0x358] sm:%s145]
                %391 = vst [vmem:[%s153 + $0x1d8] sm:%s145] %v390
                %v392 = vld [vmem:[%s152 + $0x35c] sm:%s145]
                %393 = vst [vmem:[%s153 + $0x1dc] sm:%s145] %v392
                %v394 = vld [vmem:[%s152 + $0x360] sm:%s145]
                %395 = vst [vmem:[%s153 + $0x1e0] sm:%s145] %v394
                %v396 = vld [vmem:[%s152 + $0x364] sm:%s145]
                %397 = vst [vmem:[%s153 + $0x1e4] sm:%s145] %v396
                %v398 = vld [vmem:[%s152 + $0x368] sm:%s145]
                %399 = vst [vmem:[%s153 + $0x1e8] sm:%s145] %v398
                %v400 = vld [vmem:[%s152 + $0x36c] sm:%s145]
                %401 = vst [vmem:[%s153 + $0x1ec] sm:%s145] %v400
                %v402 = vld [vmem:[%s152 + $0x370] sm:%s145]
                %403 = vst [vmem:[%s153 + $0x1f0] sm:%s145] %v402
                %v404 = vld [vmem:[%s152 + $0x374] sm:%s145]
                %405 = vst [vmem:[%s153 + $0x1f4] sm:%s145] %v404
                %v406 = vld [vmem:[%s152 + $0x378] sm:%s145]
                %407 = vst [vmem:[%s153 + $0x1f8] sm:%s145] %v406
                %v408 = vld [vmem:[%s152 + $0x37c] sm:%s145]
                %409 = vst [vmem:[%s153 + $0x1fc] sm:%s145] %v408
                %v410 = vld [vmem:[%s152 + $0x400] sm:%s145]
                %411 = vst [vmem:[%s153 + $0x200] sm:%s145] %v410
                %v412 = vld [vmem:[%s152 + $0x404] sm:%s145]
                %413 = vst [vmem:[%s153 + $0x204] sm:%s145] %v412
                %v414 = vld [vmem:[%s152 + $0x408] sm:%s145]
                %415 = vst [vmem:[%s153 + $0x208] sm:%s145] %v414
                %v416 = vld [vmem:[%s152 + $0x40c] sm:%s145]
                %417 = vst [vmem:[%s153 + $0x20c] sm:%s145] %v416
                %v418 = vld [vmem:[%s152 + $0x410] sm:%s145]
                %419 = vst [vmem:[%s153 + $0x210] sm:%s145] %v418
                %v420 = vld [vmem:[%s152 + $0x414] sm:%s145]
                %421 = vst [vmem:[%s153 + $0x214] sm:%s145] %v420
                %v422 = vld [vmem:[%s152 + $0x418] sm:%s145]
                %423 = vst [vmem:[%s153 + $0x218] sm:%s145] %v422
                %v424 = vld [vmem:[%s152 + $0x41c] sm:%s145]
                %425 = vst [vmem:[%s153 + $0x21c] sm:%s145] %v424
                %v426 = vld [vmem:[%s152 + $0x420] sm:%s145]
                %427 = vst [vmem:[%s153 + $0x220] sm:%s145] %v426
                %v428 = vld [vmem:[%s152 + $0x424] sm:%s145]
                %429 = vst [vmem:[%s153 + $0x224] sm:%s145] %v428
                %v430 = vld [vmem:[%s152 + $0x428] sm:%s145]
                %431 = vst [vmem:[%s153 + $0x228] sm:%s145] %v430
                %v432 = vld [vmem:[%s152 + $0x42c] sm:%s145]
                %433 = vst [vmem:[%s153 + $0x22c] sm:%s145] %v432
                %v434 = vld [vmem:[%s152 + $0x430] sm:%s145]
                %435 = vst [vmem:[%s153 + $0x230] sm:%s145] %v434
                %v436 = vld [vmem:[%s152 + $0x434] sm:%s145]
                %437 = vst [vmem:[%s153 + $0x234] sm:%s145] %v436
                %v438 = vld [vmem:[%s152 + $0x438] sm:%s145]
                %439 = vst [vmem:[%s153 + $0x238] sm:%s145] %v438
                %v440 = vld [vmem:[%s152 + $0x43c] sm:%s145]
                %441 = vst [vmem:[%s153 + $0x23c] sm:%s145] %v440
                %v442 = vld [vmem:[%s152 + $0x440] sm:%s145]
                %443 = vst [vmem:[%s153 + $0x240] sm:%s145] %v442
                %v444 = vld [vmem:[%s152 + $0x444] sm:%s145]
                %445 = vst [vmem:[%s153 + $0x244] sm:%s145] %v444
                %v446 = vld [vmem:[%s152 + $0x448] sm:%s145]
                %447 = vst [vmem:[%s153 + $0x248] sm:%s145] %v446
                %v448 = vld [vmem:[%s152 + $0x44c] sm:%s145]
                %449 = vst [vmem:[%s153 + $0x24c] sm:%s145] %v448
                %v450 = vld [vmem:[%s152 + $0x450] sm:%s145]
                %451 = vst [vmem:[%s153 + $0x250] sm:%s145] %v450
                %v452 = vld [vmem:[%s152 + $0x454] sm:%s145]
                %453 = vst [vmem:[%s153 + $0x254] sm:%s145] %v452
                %v454 = vld [vmem:[%s152 + $0x458] sm:%s145]
                %455 = vst [vmem:[%s153 + $0x258] sm:%s145] %v454
                %v456 = vld [vmem:[%s152 + $0x45c] sm:%s145]
                %457 = vst [vmem:[%s153 + $0x25c] sm:%s145] %v456
                %v458 = vld [vmem:[%s152 + $0x460] sm:%s145]
                %459 = vst [vmem:[%s153 + $0x260] sm:%s145] %v458
                %v460 = vld [vmem:[%s152 + $0x464] sm:%s145]
                %461 = vst [vmem:[%s153 + $0x264] sm:%s145] %v460
                %v462 = vld [vmem:[%s152 + $0x468] sm:%s145]
                %463 = vst [vmem:[%s153 + $0x268] sm:%s145] %v462
                %v464 = vld [vmem:[%s152 + $0x46c] sm:%s145]
                %465 = vst [vmem:[%s153 + $0x26c] sm:%s145] %v464
                %v466 = vld [vmem:[%s152 + $0x470] sm:%s145]
                %467 = vst [vmem:[%s153 + $0x270] sm:%s145] %v466
                %v468 = vld [vmem:[%s152 + $0x474] sm:%s145]
                %469 = vst [vmem:[%s153 + $0x274] sm:%s145] %v468
                %v470 = vld [vmem:[%s152 + $0x478] sm:%s145]
                %471 = vst [vmem:[%s153 + $0x278] sm:%s145] %v470
                %v472 = vld [vmem:[%s152 + $0x47c] sm:%s145]
                %473 = vst [vmem:[%s153 + $0x27c] sm:%s145] %v472
                %v474 = vld [vmem:[%s152 + $0x500] sm:%s145]
                %475 = vst [vmem:[%s153 + $0x280] sm:%s145] %v474
                %v476 = vld [vmem:[%s152 + $0x504] sm:%s145]
                %477 = vst [vmem:[%s153 + $0x284] sm:%s145] %v476
                %v478 = vld [vmem:[%s152 + $0x508] sm:%s145]
                %479 = vst [vmem:[%s153 + $0x288] sm:%s145] %v478
                %v480 = vld [vmem:[%s152 + $0x50c] sm:%s145]
                %481 = vst [vmem:[%s153 + $0x28c] sm:%s145] %v480
                %v482 = vld [vmem:[%s152 + $0x510] sm:%s145]
                %483 = vst [vmem:[%s153 + $0x290] sm:%s145] %v482
                %v484 = vld [vmem:[%s152 + $0x514] sm:%s145]
                %485 = vst [vmem:[%s153 + $0x294] sm:%s145] %v484
                %v486 = vld [vmem:[%s152 + $0x518] sm:%s145]
                %487 = vst [vmem:[%s153 + $0x298] sm:%s145] %v486
                %v488 = vld [vmem:[%s152 + $0x51c] sm:%s145]
                %489 = vst [vmem:[%s153 + $0x29c] sm:%s145] %v488
                %v490 = vld [vmem:[%s152 + $0x520] sm:%s145]
                %491 = vst [vmem:[%s153 + $0x2a0] sm:%s145] %v490
                %v492 = vld [vmem:[%s152 + $0x524] sm:%s145]
                %493 = vst [vmem:[%s153 + $0x2a4] sm:%s145] %v492
                %v494 = vld [vmem:[%s152 + $0x528] sm:%s145]
                %495 = vst [vmem:[%s153 + $0x2a8] sm:%s145] %v494
                %v496 = vld [vmem:[%s152 + $0x52c] sm:%s145]
                %497 = vst [vmem:[%s153 + $0x2ac] sm:%s145] %v496
                %v498 = vld [vmem:[%s152 + $0x530] sm:%s145]
                %499 = vst [vmem:[%s153 + $0x2b0] sm:%s145] %v498
                %v500 = vld [vmem:[%s152 + $0x534] sm:%s145]
                %501 = vst [vmem:[%s153 + $0x2b4] sm:%s145] %v500
                %v502 = vld [vmem:[%s152 + $0x538] sm:%s145]
                %503 = vst [vmem:[%s153 + $0x2b8] sm:%s145] %v502
                %v504 = vld [vmem:[%s152 + $0x53c] sm:%s145]
                %505 = vst [vmem:[%s153 + $0x2bc] sm:%s145] %v504
                %v506 = vld [vmem:[%s152 + $0x540] sm:%s145]
                %507 = vst [vmem:[%s153 + $0x2c0] sm:%s145] %v506
                %v508 = vld [vmem:[%s152 + $0x544] sm:%s145]
                %509 = vst [vmem:[%s153 + $0x2c4] sm:%s145] %v508
                %v510 = vld [vmem:[%s152 + $0x548] sm:%s145]
                %511 = vst [vmem:[%s153 + $0x2c8] sm:%s145] %v510
                %v512 = vld [vmem:[%s152 + $0x54c] sm:%s145]
                %513 = vst [vmem:[%s153 + $0x2cc] sm:%s145] %v512
                %v514 = vld [vmem:[%s152 + $0x550] sm:%s145]
                %515 = vst [vmem:[%s153 + $0x2d0] sm:%s145] %v514
                %v516 = vld [vmem:[%s152 + $0x554] sm:%s145]
                %517 = vst [vmem:[%s153 + $0x2d4] sm:%s145] %v516
                %v518 = vld [vmem:[%s152 + $0x558] sm:%s145]
                %519 = vst [vmem:[%s153 + $0x2d8] sm:%s145] %v518
                %v520 = vld [vmem:[%s152 + $0x55c] sm:%s145]
                %521 = vst [vmem:[%s153 + $0x2dc] sm:%s145] %v520
                %v522 = vld [vmem:[%s152 + $0x560] sm:%s145]
                %523 = vst [vmem:[%s153 + $0x2e0] sm:%s145] %v522
                %v524 = vld [vmem:[%s152 + $0x564] sm:%s145]
                %525 = vst [vmem:[%s153 + $0x2e4] sm:%s145] %v524
                %v526 = vld [vmem:[%s152 + $0x568] sm:%s145]
                %527 = vst [vmem:[%s153 + $0x2e8] sm:%s145] %v526
                %v528 = vld [vmem:[%s152 + $0x56c] sm:%s145]
                %529 = vst [vmem:[%s153 + $0x2ec] sm:%s145] %v528
                %v530 = vld [vmem:[%s152 + $0x570] sm:%s145]
                %531 = vst [vmem:[%s153 + $0x2f0] sm:%s145] %v530
                %v532 = vld [vmem:[%s152 + $0x574] sm:%s145]
                %533 = vst [vmem:[%s153 + $0x2f4] sm:%s145] %v532
                %v534 = vld [vmem:[%s152 + $0x578] sm:%s145]
                %535 = vst [vmem:[%s153 + $0x2f8] sm:%s145] %v534
                %v536 = vld [vmem:[%s152 + $0x57c] sm:%s145]
                %537 = vst [vmem:[%s153 + $0x2fc] sm:%s145] %v536
                %v538 = vld [vmem:[%s152 + $0x600] sm:%s145]
                %539 = vst [vmem:[%s153 + $0x300] sm:%s145] %v538
                %v540 = vld [vmem:[%s152 + $0x604] sm:%s145]
                %541 = vst [vmem:[%s153 + $0x304] sm:%s145] %v540
                %v542 = vld [vmem:[%s152 + $0x608] sm:%s145]
                %543 = vst [vmem:[%s153 + $0x308] sm:%s145] %v542
                %v544 = vld [vmem:[%s152 + $0x60c] sm:%s145]
                %545 = vst [vmem:[%s153 + $0x30c] sm:%s145] %v544
                %v546 = vld [vmem:[%s152 + $0x610] sm:%s145]
                %547 = vst [vmem:[%s153 + $0x310] sm:%s145] %v546
                %v548 = vld [vmem:[%s152 + $0x614] sm:%s145]
                %549 = vst [vmem:[%s153 + $0x314] sm:%s145] %v548
                %v550 = vld [vmem:[%s152 + $0x618] sm:%s145]
                %551 = vst [vmem:[%s153 + $0x318] sm:%s145] %v550
                %v552 = vld [vmem:[%s152 + $0x61c] sm:%s145]
                %553 = vst [vmem:[%s153 + $0x31c] sm:%s145] %v552
                %v554 = vld [vmem:[%s152 + $0x620] sm:%s145]
                %555 = vst [vmem:[%s153 + $0x320] sm:%s145] %v554
                %v556 = vld [vmem:[%s152 + $0x624] sm:%s145]
                %557 = vst [vmem:[%s153 + $0x324] sm:%s145] %v556
                %v558 = vld [vmem:[%s152 + $0x628] sm:%s145]
                %559 = vst [vmem:[%s153 + $0x328] sm:%s145] %v558
                %v560 = vld [vmem:[%s152 + $0x62c] sm:%s145]
                %561 = vst [vmem:[%s153 + $0x32c] sm:%s145] %v560
                %v562 = vld [vmem:[%s152 + $0x630] sm:%s145]
                %563 = vst [vmem:[%s153 + $0x330] sm:%s145] %v562
                %v564 = vld [vmem:[%s152 + $0x634] sm:%s145]
                %565 = vst [vmem:[%s153 + $0x334] sm:%s145] %v564
                %v566 = vld [vmem:[%s152 + $0x638] sm:%s145]
                %567 = vst [vmem:[%s153 + $0x338] sm:%s145] %v566
                %v568 = vld [vmem:[%s152 + $0x63c] sm:%s145]
                %569 = vst [vmem:[%s153 + $0x33c] sm:%s145] %v568
                %v570 = vld [vmem:[%s152 + $0x640] sm:%s145]
                %571 = vst [vmem:[%s153 + $0x340] sm:%s145] %v570
                %v572 = vld [vmem:[%s152 + $0x644] sm:%s145]
                %573 = vst [vmem:[%s153 + $0x344] sm:%s145] %v572
                %v574 = vld [vmem:[%s152 + $0x648] sm:%s145]
                %575 = vst [vmem:[%s153 + $0x348] sm:%s145] %v574
                %v576 = vld [vmem:[%s152 + $0x64c] sm:%s145]
                %577 = vst [vmem:[%s153 + $0x34c] sm:%s145] %v576
                %v578 = vld [vmem:[%s152 + $0x650] sm:%s145]
                %579 = vst [vmem:[%s153 + $0x350] sm:%s145] %v578
                %v580 = vld [vmem:[%s152 + $0x654] sm:%s145]
                %581 = vst [vmem:[%s153 + $0x354] sm:%s145] %v580
                %v582 = vld [vmem:[%s152 + $0x658] sm:%s145]
                %583 = vst [vmem:[%s153 + $0x358] sm:%s145] %v582
                %v584 = vld [vmem:[%s152 + $0x65c] sm:%s145]
                %585 = vst [vmem:[%s153 + $0x35c] sm:%s145] %v584
                %v586 = vld [vmem:[%s152 + $0x660] sm:%s145]
                %587 = vst [vmem:[%s153 + $0x360] sm:%s145] %v586
                %v588 = vld [vmem:[%s152 + $0x664] sm:%s145]
                %589 = vst [vmem:[%s153 + $0x364] sm:%s145] %v588
                %v590 = vld [vmem:[%s152 + $0x668] sm:%s145]
                %591 = vst [vmem:[%s153 + $0x368] sm:%s145] %v590
                %v592 = vld [vmem:[%s152 + $0x66c] sm:%s145]
                %593 = vst [vmem:[%s153 + $0x36c] sm:%s145] %v592
                %v594 = vld [vmem:[%s152 + $0x670] sm:%s145]
                %595 = vst [vmem:[%s153 + $0x370] sm:%s145] %v594
                %v596 = vld [vmem:[%s152 + $0x674] sm:%s145]
                %597 = vst [vmem:[%s153 + $0x374] sm:%s145] %v596
                %v598 = vld [vmem:[%s152 + $0x678] sm:%s145]
                %599 = vst [vmem:[%s153 + $0x378] sm:%s145] %v598
                %v600 = vld [vmem:[%s152 + $0x67c] sm:%s145]
                %601 = vst [vmem:[%s153 + $0x37c] sm:%s145] %v600
                %v602 = vld [vmem:[%s152 + $0x700] sm:%s145]
                %603 = vst [vmem:[%s153 + $0x380] sm:%s145] %v602
                %v604 = vld [vmem:[%s152 + $0x704] sm:%s145]
                %605 = vst [vmem:[%s153 + $0x384] sm:%s145] %v604
                %v606 = vld [vmem:[%s152 + $0x708] sm:%s145]
                %607 = vst [vmem:[%s153 + $0x388] sm:%s145] %v606
                %v608 = vld [vmem:[%s152 + $0x70c] sm:%s145]
                %609 = vst [vmem:[%s153 + $0x38c] sm:%s145] %v608
                %v610 = vld [vmem:[%s152 + $0x710] sm:%s145]
                %611 = vst [vmem:[%s153 + $0x390] sm:%s145] %v610
                %v612 = vld [vmem:[%s152 + $0x714] sm:%s145]
                %613 = vst [vmem:[%s153 + $0x394] sm:%s145] %v612
                %v614 = vld [vmem:[%s152 + $0x718] sm:%s145]
                %615 = vst [vmem:[%s153 + $0x398] sm:%s145] %v614
                %v616 = vld [vmem:[%s152 + $0x71c] sm:%s145]
                %617 = vst [vmem:[%s153 + $0x39c] sm:%s145] %v616
                %v618 = vld [vmem:[%s152 + $0x720] sm:%s145]
                %619 = vst [vmem:[%s153 + $0x3a0] sm:%s145] %v618
                %v620 = vld [vmem:[%s152 + $0x724] sm:%s145]
                %621 = vst [vmem:[%s153 + $0x3a4] sm:%s145] %v620
                %v622 = vld [vmem:[%s152 + $0x728] sm:%s145]
                %623 = vst [vmem:[%s153 + $0x3a8] sm:%s145] %v622
                %v624 = vld [vmem:[%s152 + $0x72c] sm:%s145]
                %625 = vst [vmem:[%s153 + $0x3ac] sm:%s145] %v624
                %v626 = vld [vmem:[%s152 + $0x730] sm:%s145]
                %627 = vst [vmem:[%s153 + $0x3b0] sm:%s145] %v626
                %v628 = vld [vmem:[%s152 + $0x734] sm:%s145]
                %629 = vst [vmem:[%s153 + $0x3b4] sm:%s145] %v628
                %v630 = vld [vmem:[%s152 + $0x738] sm:%s145]
                %631 = vst [vmem:[%s153 + $0x3b8] sm:%s145] %v630
                %v632 = vld [vmem:[%s152 + $0x73c] sm:%s145]
                %633 = vst [vmem:[%s153 + $0x3bc] sm:%s145] %v632
                %v634 = vld [vmem:[%s152 + $0x740] sm:%s145]
                %635 = vst [vmem:[%s153 + $0x3c0] sm:%s145] %v634
                %v636 = vld [vmem:[%s152 + $0x744] sm:%s145]
                %637 = vst [vmem:[%s153 + $0x3c4] sm:%s145] %v636
                %v638 = vld [vmem:[%s152 + $0x748] sm:%s145]
                %639 = vst [vmem:[%s153 + $0x3c8] sm:%s145] %v638
                %v640 = vld [vmem:[%s152 + $0x74c] sm:%s145]
                %641 = vst [vmem:[%s153 + $0x3cc] sm:%s145] %v640
                %v642 = vld [vmem:[%s152 + $0x750] sm:%s145]
                %643 = vst [vmem:[%s153 + $0x3d0] sm:%s145] %v642
                %v644 = vld [vmem:[%s152 + $0x754] sm:%s145]
                %645 = vst [vmem:[%s153 + $0x3d4] sm:%s145] %v644
                %v646 = vld [vmem:[%s152 + $0x758] sm:%s145]
                %647 = vst [vmem:[%s153 + $0x3d8] sm:%s145] %v646
                %v648 = vld [vmem:[%s152 + $0x75c] sm:%s145]
                %649 = vst [vmem:[%s153 + $0x3dc] sm:%s145] %v648
                %v650 = vld [vmem:[%s152 + $0x760] sm:%s145]
                %651 = vst [vmem:[%s153 + $0x3e0] sm:%s145] %v650
                %v652 = vld [vmem:[%s152 + $0x764] sm:%s145]
                %653 = vst [vmem:[%s153 + $0x3e4] sm:%s145] %v652
                %v654 = vld [vmem:[%s152 + $0x768] sm:%s145]
                %655 = vst [vmem:[%s153 + $0x3e8] sm:%s145] %v654
                %v656 = vld [vmem:[%s152 + $0x76c] sm:%s145]
                %657 = vst [vmem:[%s153 + $0x3ec] sm:%s145] %v656
                %v658 = vld [vmem:[%s152 + $0x770] sm:%s145]
                %659 = vst [vmem:[%s153 + $0x3f0] sm:%s145] %v658
                %v660 = vld [vmem:[%s152 + $0x774] sm:%s145]
                %661 = vst [vmem:[%s153 + $0x3f4] sm:%s145] %v660
                %v662 = vld [vmem:[%s152 + $0x778] sm:%s145]
                %663 = vst [vmem:[%s153 + $0x3f8] sm:%s145] %v662
                %v664 = vld [vmem:[%s152 + $0x77c] sm:%s145]
                %665 = vst [vmem:[%s153 + $0x3fc] sm:%s145] %v664
                %v666 = vld [vmem:[%s152 + $0x800] sm:%s145]
                %667 = vst [vmem:[%s153 + $0x400] sm:%s145] %v666
                %v668 = vld [vmem:[%s152 + $0x804] sm:%s145]
                %669 = vst [vmem:[%s153 + $0x404] sm:%s145] %v668
                %v670 = vld [vmem:[%s152 + $0x808] sm:%s145]
                %671 = vst [vmem:[%s153 + $0x408] sm:%s145] %v670
                %v672 = vld [vmem:[%s152 + $0x80c] sm:%s145]
                %673 = vst [vmem:[%s153 + $0x40c] sm:%s145] %v672
                %v674 = vld [vmem:[%s152 + $0x810] sm:%s145]
                %675 = vst [vmem:[%s153 + $0x410] sm:%s145] %v674
                %v676 = vld [vmem:[%s152 + $0x814] sm:%s145]
                %677 = vst [vmem:[%s153 + $0x414] sm:%s145] %v676
                %v678 = vld [vmem:[%s152 + $0x818] sm:%s145]
                %679 = vst [vmem:[%s153 + $0x418] sm:%s145] %v678
                %v680 = vld [vmem:[%s152 + $0x81c] sm:%s145]
                %681 = vst [vmem:[%s153 + $0x41c] sm:%s145] %v680
                %v682 = vld [vmem:[%s152 + $0x820] sm:%s145]
                %683 = vst [vmem:[%s153 + $0x420] sm:%s145] %v682
                %v684 = vld [vmem:[%s152 + $0x824] sm:%s145]
                %685 = vst [vmem:[%s153 + $0x424] sm:%s145] %v684
                %v686 = vld [vmem:[%s152 + $0x828] sm:%s145]
                %687 = vst [vmem:[%s153 + $0x428] sm:%s145] %v686
                %v688 = vld [vmem:[%s152 + $0x82c] sm:%s145]
                %689 = vst [vmem:[%s153 + $0x42c] sm:%s145] %v688
                %v690 = vld [vmem:[%s152 + $0x830] sm:%s145]
                %691 = vst [vmem:[%s153 + $0x430] sm:%s145] %v690
                %v692 = vld [vmem:[%s152 + $0x834] sm:%s145]
                %693 = vst [vmem:[%s153 + $0x434] sm:%s145] %v692
                %v694 = vld [vmem:[%s152 + $0x838] sm:%s145]
                %695 = vst [vmem:[%s153 + $0x438] sm:%s145] %v694
                %v696 = vld [vmem:[%s152 + $0x83c] sm:%s145]
                %697 = vst [vmem:[%s153 + $0x43c] sm:%s145] %v696
                %v698 = vld [vmem:[%s152 + $0x840] sm:%s145]
                %699 = vst [vmem:[%s153 + $0x440] sm:%s145] %v698
                %v700 = vld [vmem:[%s152 + $0x844] sm:%s145]
                %701 = vst [vmem:[%s153 + $0x444] sm:%s145] %v700
                %v702 = vld [vmem:[%s152 + $0x848] sm:%s145]
                %703 = vst [vmem:[%s153 + $0x448] sm:%s145] %v702
                %v704 = vld [vmem:[%s152 + $0x84c] sm:%s145]
                %705 = vst [vmem:[%s153 + $0x44c] sm:%s145] %v704
                %v706 = vld [vmem:[%s152 + $0x850] sm:%s145]
                %707 = vst [vmem:[%s153 + $0x450] sm:%s145] %v706
                %v708 = vld [vmem:[%s152 + $0x854] sm:%s145]
                %709 = vst [vmem:[%s153 + $0x454] sm:%s145] %v708
                %v710 = vld [vmem:[%s152 + $0x858] sm:%s145]
                %711 = vst [vmem:[%s153 + $0x458] sm:%s145] %v710
                %v712 = vld [vmem:[%s152 + $0x85c] sm:%s145]
                %713 = vst [vmem:[%s153 + $0x45c] sm:%s145] %v712
                %v714 = vld [vmem:[%s152 + $0x860] sm:%s145]
                %715 = vst [vmem:[%s153 + $0x460] sm:%s145] %v714
                %v716 = vld [vmem:[%s152 + $0x864] sm:%s145]
                %717 = vst [vmem:[%s153 + $0x464] sm:%s145] %v716
                %v718 = vld [vmem:[%s152 + $0x868] sm:%s145]
                %719 = vst [vmem:[%s153 + $0x468] sm:%s145] %v718
                %v720 = vld [vmem:[%s152 + $0x86c] sm:%s145]
                %721 = vst [vmem:[%s153 + $0x46c] sm:%s145] %v720
                %v722 = vld [vmem:[%s152 + $0x870] sm:%s145]
                %723 = vst [vmem:[%s153 + $0x470] sm:%s145] %v722
                %v724 = vld [vmem:[%s152 + $0x874] sm:%s145]
                %725 = vst [vmem:[%s153 + $0x474] sm:%s145] %v724
                %v726 = vld [vmem:[%s152 + $0x878] sm:%s145]
                %727 = vst [vmem:[%s153 + $0x478] sm:%s145] %v726
                %v728 = vld [vmem:[%s152 + $0x87c] sm:%s145]
                %729 = vst [vmem:[%s153 + $0x47c] sm:%s145] %v728
              $region45: #{tpu_custom_call.1} parent=39 // loop_footer
                %s151 = sadd.s32 1, %s147
              $region46: #{tpu_custom_call.1} parent=39 // loop_footer_branch
                %146 = sbr.rel target = $region42
              $region47: #{tpu_custom_call.1} parent=39 // loop_exit
                _
            $region40: #{tpu_custom_call.1} parent=31 // pred_fallthru
              _
          $region32: #{tpu_custom_call.1} parent=27 // pred_fallthru
            _
          %1326 = vnop
        $region28: #{tpu_custom_call.1} parent=23 // pred_fallthru
          _
      $region24: #{tpu_custom_call.1} parent=5 // pred_fallthru
        _
      %p1327 = scmp.le.s32.totalorder 1, %s9
      %p1328 = scmp.lt.s32.totalorder %s9, 3
      %p1329 = pnand %p1327, %p1328
      %p1330 = pneg %p1329
      // Predicated region
      $region66: #{tpu_custom_call.1} parent=5 // pred_check
        _
      $region67: #{tpu_custom_call.1} parent=5 // pred_check_branch
        %1332 = sbr.rel (%p1329) target = $region69
      $region68: #{tpu_custom_call.1} parent=5 // pred_region
        %s1333 = ssub.s32 %s9, 1
        %s1334 = sand.u32 %s22, 1
        %s1335 = sand.u32 %s22, 1
        %s1336 = smul.addr %s1335, 1152
        %s1337 = scalar_lea.vmem [#allocation3], %s1336
        // Predicated region
        $region70: #{tpu_custom_call.1} parent=68 // pred_check
          %p1338 = pneg %p35
        $region71: #{tpu_custom_call.1} parent=68 // pred_check_branch
          %1340 = sbr.rel (%p1338) target = $region73
        $region72: #{tpu_custom_call.1} parent=68 // pred_region
          _
        $region73: #{tpu_custom_call.1} parent=68 // pred_fallthru
          _
        %s1341 = sand.u32 %s22, 1
        %s1342 = sand.u32 %s22, 1
        %s1343 = smul.addr %s1342, 1152
        %s1344 = scalar_lea.vmem [#allocation3], %s1343
        %p1345 = pneg %p35
        %p1346 = pneg %p32
        %p1347 = pneg %p56
        %p1348 = pneg %p53
        %p1349 = pneg %p77
        %p1350 = pneg %p74
        %p1351 = pneg %p103
        %p1352 = pneg %p100
        %s1353 = smul.u32 32, %s14
        %p1354 = scmp.lt.s32.totalorder %s1353, 63
        %s1355 = scalar_select %p1354, %s1353, 63
        %s1356 = smul.addr %s1355, 8
        %s1357 = scalar_lea.vmem %s3, %s1356
        %s1358 = smul.u32 32, %s14
        %s1359 = smul.u32 32, %s14
        %p1360 = scmp.lt.s32.totalorder %s1359, 63
        %s1361 = scalar_select %p1360, %s1359, 63
        %s1362 = smul.addr %s1361, 8
        %s1363 = scalar_lea.vmem %s3, %s1362
        %s1364 = smul.u32 32, %s14
        %vm1366 = vcmask 523264
        %1367 = vst.msk [vmem:[#allocation2] sm:$0xff] %vm1366, 0.0
        %1368 = vst.msk [vmem:[#allocation2 + $0x8] sm:$0xff] %vm1366, 0.0
        %1369 = vst.msk [vmem:[#allocation2 + $0x10] sm:$0xff] %vm1366, 0.0
        %1370 = vst.msk [vmem:[#allocation2 + $0x18] sm:$0xff] %vm1366, 0.0
        %1371 = vst.msk [vmem:[#allocation2 + $0x20] sm:$0xff] %vm1366, 0.0
        %1372 = vst.msk [vmem:[#allocation2 + $0x28] sm:$0xff] %vm1366, 0.0
        %1373 = vst.msk [vmem:[#allocation2 + $0x30] sm:$0xff] %vm1366, 0.0
        %1374 = vst.msk [vmem:[#allocation2 + $0x38] sm:$0xff] %vm1366, 0.0
        %1375 = vst.msk [vmem:[#allocation2 + $0x40] sm:$0xff] %vm1366, 0.0
        %1376 = vst.msk [vmem:[#allocation2 + $0x48] sm:$0xff] %vm1366, 0.0
        %1377 = vst.msk [vmem:[#allocation2 + $0x50] sm:$0xff] %vm1366, 0.0
        %1378 = vst.msk [vmem:[#allocation2 + $0x58] sm:$0xff] %vm1366, 0.0
        %1379 = vst.msk [vmem:[#allocation2 + $0x60] sm:$0xff] %vm1366, 0.0
        %1380 = vst.msk [vmem:[#allocation2 + $0x68] sm:$0xff] %vm1366, 0.0
        %1381 = vst.msk [vmem:[#allocation2 + $0x70] sm:$0xff] %vm1366, 0.0
        %1382 = vst.msk [vmem:[#allocation2 + $0x78] sm:$0xff] %vm1366, 0.0
        %1383 = vst.msk [vmem:[#allocation2 + $0x80] sm:$0xff] %vm1366, 0.0
        %1384 = vst.msk [vmem:[#allocation2 + $0x88] sm:$0xff] %vm1366, 0.0
        %1385 = vst.msk [vmem:[#allocation2 + $0x90] sm:$0xff] %vm1366, 0.0
        %1386 = vst.msk [vmem:[#allocation2 + $0x98] sm:$0xff] %vm1366, 0.0
        %1387 = vst.msk [vmem:[#allocation2 + $0xa0] sm:$0xff] %vm1366, 0.0
        %1388 = vst.msk [vmem:[#allocation2 + $0xa8] sm:$0xff] %vm1366, 0.0
        %1389 = vst.msk [vmem:[#allocation2 + $0xb0] sm:$0xff] %vm1366, 0.0
        %1390 = vst.msk [vmem:[#allocation2 + $0xb8] sm:$0xff] %vm1366, 0.0
        %1391 = vst.msk [vmem:[#allocation2 + $0xc0] sm:$0xff] %vm1366, 0.0
        %1392 = vst.msk [vmem:[#allocation2 + $0xc8] sm:$0xff] %vm1366, 0.0
        %1393 = vst.msk [vmem:[#allocation2 + $0xd0] sm:$0xff] %vm1366, 0.0
        %1394 = vst.msk [vmem:[#allocation2 + $0xd8] sm:$0xff] %vm1366, 0.0
        %1395 = vst.msk [vmem:[#allocation2 + $0xe0] sm:$0xff] %vm1366, 0.0
        %1396 = vst.msk [vmem:[#allocation2 + $0xe8] sm:$0xff] %vm1366, 0.0
        %1397 = vst.msk [vmem:[#allocation2 + $0xf0] sm:$0xff] %vm1366, 0.0
        %1398 = vst.msk [vmem:[#allocation2 + $0xf8] sm:$0xff] %vm1366, 0.0
        %v1399 = vld [vmem:[#allocation2] sm:$0xff]
        %v1400 = vld [vmem:[#allocation2 + $0x8] sm:$0xff]
        %v1401 = vld [vmem:[#allocation2 + $0x10] sm:$0xff]
        %v1402 = vld [vmem:[#allocation2 + $0x18] sm:$0xff]
        %v1403 = vld [vmem:[#allocation2 + $0x20] sm:$0xff]
        %v1404 = vld [vmem:[#allocation2 + $0x28] sm:$0xff]
        %v1405 = vld [vmem:[#allocation2 + $0x30] sm:$0xff]
        %v1406 = vld [vmem:[#allocation2 + $0x38] sm:$0xff]
        %v1407 = vld [vmem:[#allocation2 + $0x40] sm:$0xff]
        %v1408 = vld [vmem:[#allocation2 + $0x48] sm:$0xff]
        %v1409 = vld [vmem:[#allocation2 + $0x50] sm:$0xff]
        %v1410 = vld [vmem:[#allocation2 + $0x58] sm:$0xff]
        %v1411 = vld [vmem:[#allocation2 + $0x60] sm:$0xff]
        %v1412 = vld [vmem:[#allocation2 + $0x68] sm:$0xff]
        %v1413 = vld [vmem:[#allocation2 + $0x70] sm:$0xff]
        %v1414 = vld [vmem:[#allocation2 + $0x78] sm:$0xff]
        %v1415 = vld [vmem:[#allocation2 + $0x80] sm:$0xff]
        %v1416 = vld [vmem:[#allocation2 + $0x88] sm:$0xff]
        %v1417 = vld [vmem:[#allocation2 + $0x90] sm:$0xff]
        %v1418 = vld [vmem:[#allocation2 + $0x98] sm:$0xff]
        %v1419 = vld [vmem:[#allocation2 + $0xa0] sm:$0xff]
        %v1420 = vld [vmem:[#allocation2 + $0xa8] sm:$0xff]
        %v1421 = vld [vmem:[#allocation2 + $0xb0] sm:$0xff]
        %v1422 = vld [vmem:[#allocation2 + $0xb8] sm:$0xff]
        %v1423 = vld [vmem:[#allocation2 + $0xc0] sm:$0xff]
        %v1424 = vld [vmem:[#allocation2 + $0xc8] sm:$0xff]
        %v1425 = vld [vmem:[#allocation2 + $0xd0] sm:$0xff]
        %v1426 = vld [vmem:[#allocation2 + $0xd8] sm:$0xff]
        %v1427 = vld [vmem:[#allocation2 + $0xe0] sm:$0xff]
        %v1428 = vld [vmem:[#allocation2 + $0xe8] sm:$0xff]
        %v1429 = vld [vmem:[#allocation2 + $0xf0] sm:$0xff]
        %v1430 = vld [vmem:[#allocation2 + $0xf8] sm:$0xff]
        %v1431 = vld [vmem:[%s1337] sm:$0xf]
        %v1432 = vld [vmem:[%s1337 + $0x4] sm:$0xf]
        %v1433 = vld [vmem:[%s1337 + $0x8] sm:$0xf]
        %v1434 = vld [vmem:[%s1337 + $0xc] sm:$0xf]
        %v1435 = vld [vmem:[%s1337 + $0x10] sm:$0xf]
        %v1436 = vld [vmem:[%s1337 + $0x14] sm:$0xf]
        %v1437 = vld [vmem:[%s1337 + $0x18] sm:$0xf]
        %v1438 = vld [vmem:[%s1337 + $0x1c] sm:$0xf]
        %v1439 = vld [vmem:[%s1337 + $0x20] sm:$0xf]
        %v1440 = vld [vmem:[%s1337 + $0x24] sm:$0xf]
        %v1441 = vld [vmem:[%s1337 + $0x28] sm:$0xf]
        %v1442 = vld [vmem:[%s1337 + $0x2c] sm:$0xf]
        %v1443 = vld [vmem:[%s1337 + $0x30] sm:$0xf]
        %v1444 = vld [vmem:[%s1337 + $0x34] sm:$0xf]
        %v1445 = vld [vmem:[%s1337 + $0x38] sm:$0xf]
        %v1446 = vld [vmem:[%s1337 + $0x3c] sm:$0xf]
        %v1447 = vld [vmem:[%s1337 + $0x40] sm:$0xf]
        %v1448 = vld [vmem:[%s1337 + $0x44] sm:$0xf]
        %v1449 = vld [vmem:[%s1337 + $0x48] sm:$0xf]
        %v1450 = vld [vmem:[%s1337 + $0x4c] sm:$0xf]
        %v1451 = vld [vmem:[%s1337 + $0x50] sm:$0xf]
        %v1452 = vld [vmem:[%s1337 + $0x54] sm:$0xf]
        %v1453 = vld [vmem:[%s1337 + $0x58] sm:$0xf]
        %v1454 = vld [vmem:[%s1337 + $0x5c] sm:$0xf]
        %v1455 = vld [vmem:[%s1337 + $0x60] sm:$0xf]
        %v1456 = vld [vmem:[%s1337 + $0x64] sm:$0xf]
        %v1457 = vld [vmem:[%s1337 + $0x68] sm:$0xf]
        %v1458 = vld [vmem:[%s1337 + $0x6c] sm:$0xf]
        %v1459 = vld [vmem:[%s1337 + $0x70] sm:$0xf]
        %v1460 = vld [vmem:[%s1337 + $0x74] sm:$0xf]
        %v1461 = vld [vmem:[%s1337 + $0x78] sm:$0xf]
        %v1462 = vld [vmem:[%s1337 + $0x7c] sm:$0xf]
        %v1463 = vld [vmem:[%s1] sm:$0x3]
        %v1496 = vunpack.c.l.b16 %v1431
        %v1497 = vunpack.c.l.b16 %v1432
        %v1498 = vunpack.c.l.b16 %v1433
        %v1499 = vunpack.c.l.b16 %v1434
        %v1500 = vunpack.c.l.b16 %v1435
        %v1501 = vunpack.c.l.b16 %v1436
        %v1502 = vunpack.c.l.b16 %v1437
        %v1503 = vunpack.c.l.b16 %v1438
        %v1504 = vunpack.c.l.b16 %v1439
        %v1505 = vunpack.c.l.b16 %v1440
        %v1506 = vunpack.c.l.b16 %v1441
        %v1507 = vunpack.c.l.b16 %v1442
        %v1508 = vunpack.c.l.b16 %v1443
        %v1509 = vunpack.c.l.b16 %v1444
        %v1510 = vunpack.c.l.b16 %v1445
        %v1511 = vunpack.c.l.b16 %v1446
        %v1512 = vunpack.c.l.b16 %v1447
        %v1513 = vunpack.c.l.b16 %v1448
        %v1514 = vunpack.c.l.b16 %v1449
        %v1515 = vunpack.c.l.b16 %v1450
        %v1516 = vunpack.c.l.b16 %v1451
        %v1517 = vunpack.c.l.b16 %v1452
        %v1518 = vunpack.c.l.b16 %v1453
        %v1519 = vunpack.c.l.b16 %v1454
        %v1520 = vunpack.c.l.b16 %v1455
        %v1521 = vunpack.c.l.b16 %v1456
        %v1522 = vunpack.c.l.b16 %v1457
        %v1523 = vunpack.c.l.b16 %v1458
        %v1524 = vunpack.c.l.b16 %v1459
        %v1525 = vunpack.c.l.b16 %v1460
        %v1526 = vunpack.c.l.b16 %v1461
        %v1527 = vunpack.c.l.b16 %v1462
        %v1528 = vpack.c.b16 %v1497, %v1496
        %v1529 = vpack.c.b16 %v1499, %v1498
        %v1530 = vpack.c.b16 %v1501, %v1500
        %v1531 = vpack.c.b16 %v1503, %v1502
        %v1532 = vpack.c.b16 %v1505, %v1504
        %v1533 = vpack.c.b16 %v1507, %v1506
        %v1534 = vpack.c.b16 %v1509, %v1508
        %v1535 = vpack.c.b16 %v1511, %v1510
        %v1536 = vpack.c.b16 %v1513, %v1512
        %v1537 = vpack.c.b16 %v1515, %v1514
        %v1538 = vpack.c.b16 %v1517, %v1516
        %v1539 = vpack.c.b16 %v1519, %v1518
        %v1540 = vpack.c.b16 %v1521, %v1520
        %v1541 = vpack.c.b16 %v1523, %v1522
        %v1542 = vpack.c.b16 %v1525, %v1524
        %v1543 = vpack.c.b16 %v1527, %v1526
        %vm1544 = vcmask 31744
        %v1546 = vsel %vm1544, %v1528, 0
        %v1549 = vsel %vm1544, %v1529, 0
        %v1552 = vsel %vm1544, %v1530, 0
        %v1555 = vsel %vm1544, %v1531, 0
        %v1558 = vsel %vm1544, %v1532, 0
        %v1561 = vsel %vm1544, %v1533, 0
        %v1564 = vsel %vm1544, %v1534, 0
        %v1567 = vsel %vm1544, %v1535, 0
        %v1570 = vsel %vm1544, %v1536, 0
        %v1573 = vsel %vm1544, %v1537, 0
        %v1576 = vsel %vm1544, %v1538, 0
        %v1579 = vsel %vm1544, %v1539, 0
        %v1582 = vsel %vm1544, %v1540, 0
        %v1585 = vsel %vm1544, %v1541, 0
        %v1588 = vsel %vm1544, %v1542, 0
        %v1591 = vsel %vm1544, %v1543, 0
        %vm1593 = vcmask 1041408
        %v1595 = vsel %vm1593, %v1463, 0
        %1597 = vmatprep.subr.bf16.mxu0 0
        %1598 = vmatpush1.bf16.msra.mxu0 0
        %1599 = vmatprep.subr.bf16.mxu0 0
        %1600 = vmatpush1.bf16.msra.mxu0 0
        %1601 = vmatprep.subr.bf16.mxu0 0
        %1602 = vmatpush1.bf16.msra.mxu0 0
        %1603 = vmatprep.subr.bf16.mxu0 0
        %1604 = vmatpush1.bf16.msra.mxu0 0
        %1605 = vmatprep.subr.bf16.mxu0 0
        %1606 = vmatpush1.bf16.msra.mxu0 0
        %1607 = vmatprep.subr.bf16.mxu0 0
        %1608 = vmatpush1.bf16.msra.mxu0 0
        %1609 = vmatprep.subr.bf16.mxu0 0
        %1610 = vmatpush1.bf16.msra.mxu0 0
        %1611 = vmatprep.subr.bf16.mxu0 0
        %1612 = vmatpush1.bf16.msra.mxu0 %v1595
        %1613 = vmatprep.subr.bf16.mxu0 0
        %1614 = vmatpush2.bf16.msra.mxu0 0
        %1615 = vmatprep.subr.bf16.mxu0 0
        %1616 = vmatpush2.bf16.msra.mxu0 0
        %1617 = vmatprep.subr.bf16.mxu0 0
        %1618 = vmatpush2.bf16.msra.mxu0 0
        %1619 = vmatprep.subr.bf16.mxu0 0
        %1620 = vmatpush2.bf16.msra.mxu0 0
        %1621 = vmatprep.subr.bf16.mxu0 0
        %1622 = vmatpush2.bf16.msra.mxu0 0
        %1623 = vmatprep.subr.bf16.mxu0 0
        %1624 = vmatpush2.bf16.msra.mxu0 0
        %1625 = vmatprep.subr.bf16.mxu0 0
        %1626 = vmatpush2.bf16.msra.mxu0 0
        %1627 = vmatprep.subr.bf16.mxu0 0
        %1628 = vmatpush2.bf16.msra.mxu0 0
        %1629 = vmatprep.mubr.bf16.mxu0 0
        %1630 = vmatmul.mubr.bf16.gmra.mxu0 %v1546
        %v1631 = vpop.f32.mrf.mxu0
        %v1632 = vadd.f32 0.0, %v1631
        %v1633 = vpop.f32.mrf.mxu0
        %v1634 = vpop.f32.mrf.mxu0
        %v1635 = vadd.f32 0.0, %v1634
        %v1636 = vpop.f32.mrf.mxu0
        %1637 = vmatprep.mubr.bf16.mxu0 0
        %1638 = vmatmul.mubr.bf16.gmra.mxu0 %v1549
        %v1639 = vpop.f32.mrf.mxu0
        %v1640 = vadd.f32 0.0, %v1639
        %v1641 = vpop.f32.mrf.mxu0
        %v1642 = vpop.f32.mrf.mxu0
        %v1643 = vadd.f32 0.0, %v1642
        %v1644 = vpop.f32.mrf.mxu0
        %1645 = vmatprep.mubr.bf16.mxu0 0
        %1646 = vmatmul.mubr.bf16.gmra.mxu0 %v1552
        %v1647 = vpop.f32.mrf.mxu0
        %v1648 = vadd.f32 0.0, %v1647
        %v1649 = vpop.f32.mrf.mxu0
        %v1650 = vpop.f32.mrf.mxu0
        %v1651 = vadd.f32 0.0, %v1650
        %v1652 = vpop.f32.mrf.mxu0
        %1653 = vmatprep.mubr.bf16.mxu0 0
        %1654 = vmatmul.mubr.bf16.gmra.mxu0 %v1555
        %v1655 = vpop.f32.mrf.mxu0
        %v1656 = vadd.f32 0.0, %v1655
        %v1657 = vpop.f32.mrf.mxu0
        %v1658 = vpop.f32.mrf.mxu0
        %v1659 = vadd.f32 0.0, %v1658
        %v1660 = vpop.f32.mrf.mxu0
        %1661 = vmatprep.mubr.bf16.mxu0 0
        %1662 = vmatmul.mubr.bf16.gmra.mxu0 %v1558
        %v1663 = vpop.f32.mrf.mxu0
        %v1664 = vadd.f32 0.0, %v1663
        %v1665 = vpop.f32.mrf.mxu0
        %v1666 = vpop.f32.mrf.mxu0
        %v1667 = vadd.f32 0.0, %v1666
        %v1668 = vpop.f32.mrf.mxu0
        %1669 = vmatprep.mubr.bf16.mxu0 0
        %1670 = vmatmul.mubr.bf16.gmra.mxu0 %v1561
        %v1671 = vpop.f32.mrf.mxu0
        %v1672 = vadd.f32 0.0, %v1671
        %v1673 = vpop.f32.mrf.mxu0
        %v1674 = vpop.f32.mrf.mxu0
        %v1675 = vadd.f32 0.0, %v1674
        %v1676 = vpop.f32.mrf.mxu0
        %1677 = vmatprep.mubr.bf16.mxu0 0
        %1678 = vmatmul.mubr.bf16.gmra.mxu0 %v1564
        %v1679 = vpop.f32.mrf.mxu0
        %v1680 = vadd.f32 0.0, %v1679
        %v1681 = vpop.f32.mrf.mxu0
        %v1682 = vpop.f32.mrf.mxu0
        %v1683 = vadd.f32 0.0, %v1682
        %v1684 = vpop.f32.mrf.mxu0
        %1685 = vmatprep.mubr.bf16.mxu0 0
        %1686 = vmatmul.mubr.bf16.gmra.mxu0 %v1567
        %v1687 = vpop.f32.mrf.mxu0
        %v1688 = vadd.f32 0.0, %v1687
        %v1689 = vpop.f32.mrf.mxu0
        %v1690 = vpop.f32.mrf.mxu0
        %v1691 = vadd.f32 0.0, %v1690
        %v1692 = vpop.f32.mrf.mxu0
        %1693 = vmatprep.mubr.bf16.mxu0 0
        %1694 = vmatmul.mubr.bf16.gmra.mxu0 %v1570
        %v1695 = vpop.f32.mrf.mxu0
        %v1696 = vadd.f32 0.0, %v1695
        %v1697 = vpop.f32.mrf.mxu0
        %v1698 = vpop.f32.mrf.mxu0
        %v1699 = vadd.f32 0.0, %v1698
        %v1700 = vpop.f32.mrf.mxu0
        %1701 = vmatprep.mubr.bf16.mxu0 0
        %1702 = vmatmul.mubr.bf16.gmra.mxu0 %v1573
        %v1703 = vpop.f32.mrf.mxu0
        %v1704 = vadd.f32 0.0, %v1703
        %v1705 = vpop.f32.mrf.mxu0
        %v1706 = vpop.f32.mrf.mxu0
        %v1707 = vadd.f32 0.0, %v1706
        %v1708 = vpop.f32.mrf.mxu0
        %1709 = vmatprep.mubr.bf16.mxu0 0
        %1710 = vmatmul.mubr.bf16.gmra.mxu0 %v1576
        %v1711 = vpop.f32.mrf.mxu0
        %v1712 = vadd.f32 0.0, %v1711
        %v1713 = vpop.f32.mrf.mxu0
        %v1714 = vpop.f32.mrf.mxu0
        %v1715 = vadd.f32 0.0, %v1714
        %v1716 = vpop.f32.mrf.mxu0
        %1717 = vmatprep.mubr.bf16.mxu0 0
        %1718 = vmatmul.mubr.bf16.gmra.mxu0 %v1579
        %v1719 = vpop.f32.mrf.mxu0
        %v1720 = vadd.f32 0.0, %v1719
        %v1721 = vpop.f32.mrf.mxu0
        %v1722 = vpop.f32.mrf.mxu0
        %v1723 = vadd.f32 0.0, %v1722
        %v1724 = vpop.f32.mrf.mxu0
        %1725 = vmatprep.mubr.bf16.mxu0 0
        %1726 = vmatmul.mubr.bf16.gmra.mxu0 %v1582
        %v1727 = vpop.f32.mrf.mxu0
        %v1728 = vadd.f32 0.0, %v1727
        %v1729 = vpop.f32.mrf.mxu0
        %v1730 = vpop.f32.mrf.mxu0
        %v1731 = vadd.f32 0.0, %v1730
        %v1732 = vpop.f32.mrf.mxu0
        %1733 = vmatprep.mubr.bf16.mxu0 0
        %1734 = vmatmul.mubr.bf16.gmra.mxu0 %v1585
        %v1735 = vpop.f32.mrf.mxu0
        %v1736 = vadd.f32 0.0, %v1735
        %v1737 = vpop.f32.mrf.mxu0
        %v1738 = vpop.f32.mrf.mxu0
        %v1739 = vadd.f32 0.0, %v1738
        %v1740 = vpop.f32.mrf.mxu0
        %1741 = vmatprep.mubr.bf16.mxu0 0
        %1742 = vmatmul.mubr.bf16.gmra.mxu0 %v1588
        %v1743 = vpop.f32.mrf.mxu0
        %v1744 = vadd.f32 0.0, %v1743
        %v1745 = vpop.f32.mrf.mxu0
        %v1746 = vpop.f32.mrf.mxu0
        %v1747 = vadd.f32 0.0, %v1746
        %v1748 = vpop.f32.mrf.mxu0
        %1749 = vmatprep.mubr.bf16.mxu0 0
        %1750 = vmatmul.mubr.bf16.gmra.mxu0 %v1591
        %v1751 = vpop.f32.mrf.mxu0
        %v1752 = vadd.f32 0.0, %v1751
        %v1753 = vpop.f32.mrf.mxu0
        %v1754 = vpop.f32.mrf.mxu0
        %v1755 = vadd.f32 0.0, %v1754
        %v1756 = vpop.f32.mrf.mxu0
        %1757 = vdwg.mxu0
        %v1758 = vadd.f32 %v1399, %v1632
        %v1759 = vadd.f32 %v1400, %v1635
        %v1760 = vadd.f32 %v1401, %v1640
        %v1761 = vadd.f32 %v1402, %v1643
        %v1762 = vadd.f32 %v1403, %v1648
        %v1763 = vadd.f32 %v1404, %v1651
        %v1764 = vadd.f32 %v1405, %v1656
        %v1765 = vadd.f32 %v1406, %v1659
        %v1766 = vadd.f32 %v1407, %v1664
        %v1767 = vadd.f32 %v1408, %v1667
        %v1768 = vadd.f32 %v1409, %v1672
        %v1769 = vadd.f32 %v1410, %v1675
        %v1770 = vadd.f32 %v1411, %v1680
        %v1771 = vadd.f32 %v1412, %v1683
        %v1772 = vadd.f32 %v1413, %v1688
        %v1773 = vadd.f32 %v1414, %v1691
        %v1774 = vadd.f32 %v1415, %v1696
        %v1775 = vadd.f32 %v1416, %v1699
        %v1776 = vadd.f32 %v1417, %v1704
        %v1777 = vadd.f32 %v1418, %v1707
        %v1778 = vadd.f32 %v1419, %v1712
        %v1779 = vadd.f32 %v1420, %v1715
        %v1780 = vadd.f32 %v1421, %v1720
        %v1781 = vadd.f32 %v1422, %v1723
        %v1782 = vadd.f32 %v1423, %v1728
        %v1783 = vadd.f32 %v1424, %v1731
        %v1784 = vadd.f32 %v1425, %v1736
        %v1785 = vadd.f32 %v1426, %v1739
        %v1786 = vadd.f32 %v1427, %v1744
        %v1787 = vadd.f32 %v1428, %v1747
        %v1788 = vadd.f32 %v1429, %v1752
        %v1789 = vadd.f32 %v1430, %v1755
        %1790 = vst.msk [vmem:[#allocation2] sm:$0xff] %vm1366, %v1758
        %1791 = vst.msk [vmem:[#allocation2 + $0x8] sm:$0xff] %vm1366, %v1759
        %1792 = vst.msk [vmem:[#allocation2 + $0x10] sm:$0xff] %vm1366, %v1760
        %1793 = vst.msk [vmem:[#allocation2 + $0x18] sm:$0xff] %vm1366, %v1761
        %1794 = vst.msk [vmem:[#allocation2 + $0x20] sm:$0xff] %vm1366, %v1762
        %1795 = vst.msk [vmem:[#allocation2 + $0x28] sm:$0xff] %vm1366, %v1763
        %1796 = vst.msk [vmem:[#allocation2 + $0x30] sm:$0xff] %vm1366, %v1764
        %1797 = vst.msk [vmem:[#allocation2 + $0x38] sm:$0xff] %vm1366, %v1765
        %1798 = vst.msk [vmem:[#allocation2 + $0x40] sm:$0xff] %vm1366, %v1766
        %1799 = vst.msk [vmem:[#allocation2 + $0x48] sm:$0xff] %vm1366, %v1767
        %1800 = vst.msk [vmem:[#allocation2 + $0x50] sm:$0xff] %vm1366, %v1768
        %1801 = vst.msk [vmem:[#allocation2 + $0x58] sm:$0xff] %vm1366, %v1769
        %1802 = vst.msk [vmem:[#allocation2 + $0x60] sm:$0xff] %vm1366, %v1770
        %1803 = vst.msk [vmem:[#allocation2 + $0x68] sm:$0xff] %vm1366, %v1771
        %1804 = vst.msk [vmem:[#allocation2 + $0x70] sm:$0xff] %vm1366, %v1772
        %1805 = vst.msk [vmem:[#allocation2 + $0x78] sm:$0xff] %vm1366, %v1773
        %1806 = vst.msk [vmem:[#allocation2 + $0x80] sm:$0xff] %vm1366, %v1774
        %1807 = vst.msk [vmem:[#allocation2 + $0x88] sm:$0xff] %vm1366, %v1775
        %1808 = vst.msk [vmem:[#allocation2 + $0x90] sm:$0xff] %vm1366, %v1776
        %1809 = vst.msk [vmem:[#allocation2 + $0x98] sm:$0xff] %vm1366, %v1777
        %1810 = vst.msk [vmem:[#allocation2 + $0xa0] sm:$0xff] %vm1366, %v1778
        %1811 = vst.msk [vmem:[#allocation2 + $0xa8] sm:$0xff] %vm1366, %v1779
        %1812 = vst.msk [vmem:[#allocation2 + $0xb0] sm:$0xff] %vm1366, %v1780
        %1813 = vst.msk [vmem:[#allocation2 + $0xb8] sm:$0xff] %vm1366, %v1781
        %1814 = vst.msk [vmem:[#allocation2 + $0xc0] sm:$0xff] %vm1366, %v1782
        %1815 = vst.msk [vmem:[#allocation2 + $0xc8] sm:$0xff] %vm1366, %v1783
        %1816 = vst.msk [vmem:[#allocation2 + $0xd0] sm:$0xff] %vm1366, %v1784
        %1817 = vst.msk [vmem:[#allocation2 + $0xd8] sm:$0xff] %vm1366, %v1785
        %1818 = vst.msk [vmem:[#allocation2 + $0xe0] sm:$0xff] %vm1366, %v1786
        %1819 = vst.msk [vmem:[#allocation2 + $0xe8] sm:$0xff] %vm1366, %v1787
        %1820 = vst.msk [vmem:[#allocation2 + $0xf0] sm:$0xff] %vm1366, %v1788
        %1821 = vst.msk [vmem:[#allocation2 + $0xf8] sm:$0xff] %vm1366, %v1789
        %v1822 = vld [vmem:[#allocation2] sm:$0xff]
        %v1823 = vld [vmem:[#allocation2 + $0x8] sm:$0xff]
        %v1824 = vld [vmem:[#allocation2 + $0x10] sm:$0xff]
        %v1825 = vld [vmem:[#allocation2 + $0x18] sm:$0xff]
        %v1826 = vld [vmem:[#allocation2 + $0x20] sm:$0xff]
        %v1827 = vld [vmem:[#allocation2 + $0x28] sm:$0xff]
        %v1828 = vld [vmem:[#allocation2 + $0x30] sm:$0xff]
        %v1829 = vld [vmem:[#allocation2 + $0x38] sm:$0xff]
        %v1830 = vld [vmem:[#allocation2 + $0x40] sm:$0xff]
        %v1831 = vld [vmem:[#allocation2 + $0x48] sm:$0xff]
        %v1832 = vld [vmem:[#allocation2 + $0x50] sm:$0xff]
        %v1833 = vld [vmem:[#allocation2 + $0x58] sm:$0xff]
        %v1834 = vld [vmem:[#allocation2 + $0x60] sm:$0xff]
        %v1835 = vld [vmem:[#allocation2 + $0x68] sm:$0xff]
        %v1836 = vld [vmem:[#allocation2 + $0x70] sm:$0xff]
        %v1837 = vld [vmem:[#allocation2 + $0x78] sm:$0xff]
        %v1838 = vld [vmem:[#allocation2 + $0x80] sm:$0xff]
        %v1839 = vld [vmem:[#allocation2 + $0x88] sm:$0xff]
        %v1840 = vld [vmem:[#allocation2 + $0x90] sm:$0xff]
        %v1841 = vld [vmem:[#allocation2 + $0x98] sm:$0xff]
        %v1842 = vld [vmem:[#allocation2 + $0xa0] sm:$0xff]
        %v1843 = vld [vmem:[#allocation2 + $0xa8] sm:$0xff]
        %v1844 = vld [vmem:[#allocation2 + $0xb0] sm:$0xff]
        %v1845 = vld [vmem:[#allocation2 + $0xb8] sm:$0xff]
        %v1846 = vld [vmem:[#allocation2 + $0xc0] sm:$0xff]
        %v1847 = vld [vmem:[#allocation2 + $0xc8] sm:$0xff]
        %v1848 = vld [vmem:[#allocation2 + $0xd0] sm:$0xff]
        %v1849 = vld [vmem:[#allocation2 + $0xd8] sm:$0xff]
        %v1850 = vld [vmem:[#allocation2 + $0xe0] sm:$0xff]
        %v1851 = vld [vmem:[#allocation2 + $0xe8] sm:$0xff]
        %v1852 = vld [vmem:[#allocation2 + $0xf0] sm:$0xff]
        %v1853 = vld [vmem:[#allocation2 + $0xf8] sm:$0xff]
        %s1854 = scalar_lea.vmem %s1337, 128 [#allocation3]
        %v1855 = vld [vmem:[%s1854] sm:$0xf]
        %v1856 = vld [vmem:[%s1854 + $0x4] sm:$0xf]
        %v1857 = vld [vmem:[%s1854 + $0x8] sm:$0xf]
        %v1858 = vld [vmem:[%s1854 + $0xc] sm:$0xf]
        %v1859 = vld [vmem:[%s1854 + $0x10] sm:$0xf]
        %v1860 = vld [vmem:[%s1854 + $0x14] sm:$0xf]
        %v1861 = vld [vmem:[%s1854 + $0x18] sm:$0xf]
        %v1862 = vld [vmem:[%s1854 + $0x1c] sm:$0xf]
        %v1863 = vld [vmem:[%s1854 + $0x20] sm:$0xf]
        %v1864 = vld [vmem:[%s1854 + $0x24] sm:$0xf]
        %v1865 = vld [vmem:[%s1854 + $0x28] sm:$0xf]
        %v1866 = vld [vmem:[%s1854 + $0x2c] sm:$0xf]
        %v1867 = vld [vmem:[%s1854 + $0x30] sm:$0xf]
        %v1868 = vld [vmem:[%s1854 + $0x34] sm:$0xf]
        %v1869 = vld [vmem:[%s1854 + $0x38] sm:$0xf]
        %v1870 = vld [vmem:[%s1854 + $0x3c] sm:$0xf]
        %v1871 = vld [vmem:[%s1854 + $0x40] sm:$0xf]
        %v1872 = vld [vmem:[%s1854 + $0x44] sm:$0xf]
        %v1873 = vld [vmem:[%s1854 + $0x48] sm:$0xf]
        %v1874 = vld [vmem:[%s1854 + $0x4c] sm:$0xf]
        %v1875 = vld [vmem:[%s1854 + $0x50] sm:$0xf]
        %v1876 = vld [vmem:[%s1854 + $0x54] sm:$0xf]
        %v1877 = vld [vmem:[%s1854 + $0x58] sm:$0xf]
        %v1878 = vld [vmem:[%s1854 + $0x5c] sm:$0xf]
        %v1879 = vld [vmem:[%s1854 + $0x60] sm:$0xf]
        %v1880 = vld [vmem:[%s1854 + $0x64] sm:$0xf]
        %v1881 = vld [vmem:[%s1854 + $0x68] sm:$0xf]
        %v1882 = vld [vmem:[%s1854 + $0x6c] sm:$0xf]
        %v1883 = vld [vmem:[%s1854 + $0x70] sm:$0xf]
        %v1884 = vld [vmem:[%s1854 + $0x74] sm:$0xf]
        %v1885 = vld [vmem:[%s1854 + $0x78] sm:$0xf]
        %v1886 = vld [vmem:[%s1854 + $0x7c] sm:$0xf]
        %s1887 = scalar_lea.vmem %s1, 2
        %v1888 = vld [vmem:[%s1887] sm:$0x3]
        %v1921 = vunpack.c.l.b16 %v1855
        %v1922 = vunpack.c.l.b16 %v1856
        %v1923 = vunpack.c.l.b16 %v1857
        %v1924 = vunpack.c.l.b16 %v1858
        %v1925 = vunpack.c.l.b16 %v1859
        %v1926 = vunpack.c.l.b16 %v1860
        %v1927 = vunpack.c.l.b16 %v1861
        %v1928 = vunpack.c.l.b16 %v1862
        %v1929 = vunpack.c.l.b16 %v1863
        %v1930 = vunpack.c.l.b16 %v1864
        %v1931 = vunpack.c.l.b16 %v1865
        %v1932 = vunpack.c.l.b16 %v1866
        %v1933 = vunpack.c.l.b16 %v1867
        %v1934 = vunpack.c.l.b16 %v1868
        %v1935 = vunpack.c.l.b16 %v1869
        %v1936 = vunpack.c.l.b16 %v1870
        %v1937 = vunpack.c.l.b16 %v1871
        %v1938 = vunpack.c.l.b16 %v1872
        %v1939 = vunpack.c.l.b16 %v1873
        %v1940 = vunpack.c.l.b16 %v1874
        %v1941 = vunpack.c.l.b16 %v1875
        %v1942 = vunpack.c.l.b16 %v1876
        %v1943 = vunpack.c.l.b16 %v1877
        %v1944 = vunpack.c.l.b16 %v1878
        %v1945 = vunpack.c.l.b16 %v1879
        %v1946 = vunpack.c.l.b16 %v1880
        %v1947 = vunpack.c.l.b16 %v1881
        %v1948 = vunpack.c.l.b16 %v1882
        %v1949 = vunpack.c.l.b16 %v1883
        %v1950 = vunpack.c.l.b16 %v1884
        %v1951 = vunpack.c.l.b16 %v1885
        %v1952 = vunpack.c.l.b16 %v1886
        %v1953 = vpack.c.b16 %v1922, %v1921
        %v1954 = vpack.c.b16 %v1924, %v1923
        %v1955 = vpack.c.b16 %v1926, %v1925
        %v1956 = vpack.c.b16 %v1928, %v1927
        %v1957 = vpack.c.b16 %v1930, %v1929
        %v1958 = vpack.c.b16 %v1932, %v1931
        %v1959 = vpack.c.b16 %v1934, %v1933
        %v1960 = vpack.c.b16 %v1936, %v1935
        %v1961 = vpack.c.b16 %v1938, %v1937
        %v1962 = vpack.c.b16 %v1940, %v1939
        %v1963 = vpack.c.b16 %v1942, %v1941
        %v1964 = vpack.c.b16 %v1944, %v1943
        %v1965 = vpack.c.b16 %v1946, %v1945
        %v1966 = vpack.c.b16 %v1948, %v1947
        %v1967 = vpack.c.b16 %v1950, %v1949
        %v1968 = vpack.c.b16 %v1952, %v1951
        %v1970 = vsel %vm1544, %v1953, 0
        %v1973 = vsel %vm1544, %v1954, 0
        %v1976 = vsel %vm1544, %v1955, 0
        %v1979 = vsel %vm1544, %v1956, 0
        %v1982 = vsel %vm1544, %v1957, 0
        %v1985 = vsel %vm1544, %v1958, 0
        %v1988 = vsel %vm1544, %v1959, 0
        %v1991 = vsel %vm1544, %v1960, 0
        %v1994 = vsel %vm1544, %v1961, 0
        %v1997 = vsel %vm1544, %v1962, 0
        %v2000 = vsel %vm1544, %v1963, 0
        %v2003 = vsel %vm1544, %v1964, 0
        %v2006 = vsel %vm1544, %v1965, 0
        %v2009 = vsel %vm1544, %v1966, 0
        %v2012 = vsel %vm1544, %v1967, 0
        %v2015 = vsel %vm1544, %v1968, 0
        %v2018 = vsel %vm1593, %v1888, 0
        %2020 = vmatprep.subr.bf16.mxu0 0
        %2021 = vmatpush1.bf16.msra.mxu0 0
        %2022 = vmatprep.subr.bf16.mxu0 0
        %2023 = vmatpush1.bf16.msra.mxu0 0
        %2024 = vmatprep.subr.bf16.mxu0 0
        %2025 = vmatpush1.bf16.msra.mxu0 0
        %2026 = vmatprep.subr.bf16.mxu0 0
        %2027 = vmatpush1.bf16.msra.mxu0 0
        %2028 = vmatprep.subr.bf16.mxu0 0
        %2029 = vmatpush1.bf16.msra.mxu0 0
        %2030 = vmatprep.subr.bf16.mxu0 0
        %2031 = vmatpush1.bf16.msra.mxu0 0
        %2032 = vmatprep.subr.bf16.mxu0 0
        %2033 = vmatpush1.bf16.msra.mxu0 0
        %2034 = vmatprep.subr.bf16.mxu0 0
        %2035 = vmatpush1.bf16.msra.mxu0 %v2018
        %2036 = vmatprep.subr.bf16.mxu0 0
        %2037 = vmatpush2.bf16.msra.mxu0 0
        %2038 = vmatprep.subr.bf16.mxu0 0
        %2039 = vmatpush2.bf16.msra.mxu0 0
        %2040 = vmatprep.subr.bf16.mxu0 0
        %2041 = vmatpush2.bf16.msra.mxu0 0
        %2042 = vmatprep.subr.bf16.mxu0 0
        %2043 = vmatpush2.bf16.msra.mxu0 0
        %2044 = vmatprep.subr.bf16.mxu0 0
        %2045 = vmatpush2.bf16.msra.mxu0 0
        %2046 = vmatprep.subr.bf16.mxu0 0
        %2047 = vmatpush2.bf16.msra.mxu0 0
        %2048 = vmatprep.subr.bf16.mxu0 0
        %2049 = vmatpush2.bf16.msra.mxu0 0
        %2050 = vmatprep.subr.bf16.mxu0 0
        %2051 = vmatpush2.bf16.msra.mxu0 0
        %2052 = vmatprep.mubr.bf16.mxu0 0
        %2053 = vmatmul.mubr.bf16.gmra.mxu0 %v1970
        %v2054 = vpop.f32.mrf.mxu0
        %v2055 = vadd.f32 0.0, %v2054
        %v2056 = vpop.f32.mrf.mxu0
        %v2057 = vpop.f32.mrf.mxu0
        %v2058 = vadd.f32 0.0, %v2057
        %v2059 = vpop.f32.mrf.mxu0
        %2060 = vmatprep.mubr.bf16.mxu0 0
        %2061 = vmatmul.mubr.bf16.gmra.mxu0 %v1973
        %v2062 = vpop.f32.mrf.mxu0
        %v2063 = vadd.f32 0.0, %v2062
        %v2064 = vpop.f32.mrf.mxu0
        %v2065 = vpop.f32.mrf.mxu0
        %v2066 = vadd.f32 0.0, %v2065
        %v2067 = vpop.f32.mrf.mxu0
        %2068 = vmatprep.mubr.bf16.mxu0 0
        %2069 = vmatmul.mubr.bf16.gmra.mxu0 %v1976
        %v2070 = vpop.f32.mrf.mxu0
        %v2071 = vadd.f32 0.0, %v2070
        %v2072 = vpop.f32.mrf.mxu0
        %v2073 = vpop.f32.mrf.mxu0
        %v2074 = vadd.f32 0.0, %v2073
        %v2075 = vpop.f32.mrf.mxu0
        %2076 = vmatprep.mubr.bf16.mxu0 0
        %2077 = vmatmul.mubr.bf16.gmra.mxu0 %v1979
        %v2078 = vpop.f32.mrf.mxu0
        %v2079 = vadd.f32 0.0, %v2078
        %v2080 = vpop.f32.mrf.mxu0
        %v2081 = vpop.f32.mrf.mxu0
        %v2082 = vadd.f32 0.0, %v2081
        %v2083 = vpop.f32.mrf.mxu0
        %2084 = vmatprep.mubr.bf16.mxu0 0
        %2085 = vmatmul.mubr.bf16.gmra.mxu0 %v1982
        %v2086 = vpop.f32.mrf.mxu0
        %v2087 = vadd.f32 0.0, %v2086
        %v2088 = vpop.f32.mrf.mxu0
        %v2089 = vpop.f32.mrf.mxu0
        %v2090 = vadd.f32 0.0, %v2089
        %v2091 = vpop.f32.mrf.mxu0
        %2092 = vmatprep.mubr.bf16.mxu0 0
        %2093 = vmatmul.mubr.bf16.gmra.mxu0 %v1985
        %v2094 = vpop.f32.mrf.mxu0
        %v2095 = vadd.f32 0.0, %v2094
        %v2096 = vpop.f32.mrf.mxu0
        %v2097 = vpop.f32.mrf.mxu0
        %v2098 = vadd.f32 0.0, %v2097
        %v2099 = vpop.f32.mrf.mxu0
        %2100 = vmatprep.mubr.bf16.mxu0 0
        %2101 = vmatmul.mubr.bf16.gmra.mxu0 %v1988
        %v2102 = vpop.f32.mrf.mxu0
        %v2103 = vadd.f32 0.0, %v2102
        %v2104 = vpop.f32.mrf.mxu0
        %v2105 = vpop.f32.mrf.mxu0
        %v2106 = vadd.f32 0.0, %v2105
        %v2107 = vpop.f32.mrf.mxu0
        %2108 = vmatprep.mubr.bf16.mxu0 0
        %2109 = vmatmul.mubr.bf16.gmra.mxu0 %v1991
        %v2110 = vpop.f32.mrf.mxu0
        %v2111 = vadd.f32 0.0, %v2110
        %v2112 = vpop.f32.mrf.mxu0
        %v2113 = vpop.f32.mrf.mxu0
        %v2114 = vadd.f32 0.0, %v2113
        %v2115 = vpop.f32.mrf.mxu0
        %2116 = vmatprep.mubr.bf16.mxu0 0
        %2117 = vmatmul.mubr.bf16.gmra.mxu0 %v1994
        %v2118 = vpop.f32.mrf.mxu0
        %v2119 = vadd.f32 0.0, %v2118
        %v2120 = vpop.f32.mrf.mxu0
        %v2121 = vpop.f32.mrf.mxu0
        %v2122 = vadd.f32 0.0, %v2121
        %v2123 = vpop.f32.mrf.mxu0
        %2124 = vmatprep.mubr.bf16.mxu0 0
        %2125 = vmatmul.mubr.bf16.gmra.mxu0 %v1997
        %v2126 = vpop.f32.mrf.mxu0
        %v2127 = vadd.f32 0.0, %v2126
        %v2128 = vpop.f32.mrf.mxu0
        %v2129 = vpop.f32.mrf.mxu0
        %v2130 = vadd.f32 0.0, %v2129
        %v2131 = vpop.f32.mrf.mxu0
        %2132 = vmatprep.mubr.bf16.mxu0 0
        %2133 = vmatmul.mubr.bf16.gmra.mxu0 %v2000
        %v2134 = vpop.f32.mrf.mxu0
        %v2135 = vadd.f32 0.0, %v2134
        %v2136 = vpop.f32.mrf.mxu0
        %v2137 = vpop.f32.mrf.mxu0
        %v2138 = vadd.f32 0.0, %v2137
        %v2139 = vpop.f32.mrf.mxu0
        %2140 = vmatprep.mubr.bf16.mxu0 0
        %2141 = vmatmul.mubr.bf16.gmra.mxu0 %v2003
        %v2142 = vpop.f32.mrf.mxu0
        %v2143 = vadd.f32 0.0, %v2142
        %v2144 = vpop.f32.mrf.mxu0
        %v2145 = vpop.f32.mrf.mxu0
        %v2146 = vadd.f32 0.0, %v2145
        %v2147 = vpop.f32.mrf.mxu0
        %2148 = vmatprep.mubr.bf16.mxu0 0
        %2149 = vmatmul.mubr.bf16.gmra.mxu0 %v2006
        %v2150 = vpop.f32.mrf.mxu0
        %v2151 = vadd.f32 0.0, %v2150
        %v2152 = vpop.f32.mrf.mxu0
        %v2153 = vpop.f32.mrf.mxu0
        %v2154 = vadd.f32 0.0, %v2153
        %v2155 = vpop.f32.mrf.mxu0
        %2156 = vmatprep.mubr.bf16.mxu0 0
        %2157 = vmatmul.mubr.bf16.gmra.mxu0 %v2009
        %v2158 = vpop.f32.mrf.mxu0
        %v2159 = vadd.f32 0.0, %v2158
        %v2160 = vpop.f32.mrf.mxu0
        %v2161 = vpop.f32.mrf.mxu0
        %v2162 = vadd.f32 0.0, %v2161
        %v2163 = vpop.f32.mrf.mxu0
        %2164 = vmatprep.mubr.bf16.mxu0 0
        %2165 = vmatmul.mubr.bf16.gmra.mxu0 %v2012
        %v2166 = vpop.f32.mrf.mxu0
        %v2167 = vadd.f32 0.0, %v2166
        %v2168 = vpop.f32.mrf.mxu0
        %v2169 = vpop.f32.mrf.mxu0
        %v2170 = vadd.f32 0.0, %v2169
        %v2171 = vpop.f32.mrf.mxu0
        %2172 = vmatprep.mubr.bf16.mxu0 0
        %2173 = vmatmul.mubr.bf16.gmra.mxu0 %v2015
        %v2174 = vpop.f32.mrf.mxu0
        %v2175 = vadd.f32 0.0, %v2174
        %v2176 = vpop.f32.mrf.mxu0
        %v2177 = vpop.f32.mrf.mxu0
        %v2178 = vadd.f32 0.0, %v2177
        %v2179 = vpop.f32.mrf.mxu0
        %2180 = vdwg.mxu0
        %v2181 = vadd.f32 %v1822, %v2055
        %v2182 = vadd.f32 %v1823, %v2058
        %v2183 = vadd.f32 %v1824, %v2063
        %v2184 = vadd.f32 %v1825, %v2066
        %v2185 = vadd.f32 %v1826, %v2071
        %v2186 = vadd.f32 %v1827, %v2074
        %v2187 = vadd.f32 %v1828, %v2079
        %v2188 = vadd.f32 %v1829, %v2082
        %v2189 = vadd.f32 %v1830, %v2087
        %v2190 = vadd.f32 %v1831, %v2090
        %v2191 = vadd.f32 %v1832, %v2095
        %v2192 = vadd.f32 %v1833, %v2098
        %v2193 = vadd.f32 %v1834, %v2103
        %v2194 = vadd.f32 %v1835, %v2106
        %v2195 = vadd.f32 %v1836, %v2111
        %v2196 = vadd.f32 %v1837, %v2114
        %v2197 = vadd.f32 %v1838, %v2119
        %v2198 = vadd.f32 %v1839, %v2122
        %v2199 = vadd.f32 %v1840, %v2127
        %v2200 = vadd.f32 %v1841, %v2130
        %v2201 = vadd.f32 %v1842, %v2135
        %v2202 = vadd.f32 %v1843, %v2138
        %v2203 = vadd.f32 %v1844, %v2143
        %v2204 = vadd.f32 %v1845, %v2146
        %v2205 = vadd.f32 %v1846, %v2151
        %v2206 = vadd.f32 %v1847, %v2154
        %v2207 = vadd.f32 %v1848, %v2159
        %v2208 = vadd.f32 %v1849, %v2162
        %v2209 = vadd.f32 %v1850, %v2167
        %v2210 = vadd.f32 %v1851, %v2170
        %v2211 = vadd.f32 %v1852, %v2175
        %v2212 = vadd.f32 %v1853, %v2178
        %2213 = vst.msk [vmem:[#allocation2] sm:$0xff] %vm1366, %v2181
        %2214 = vst.msk [vmem:[#allocation2 + $0x8] sm:$0xff] %vm1366, %v2182
        %2215 = vst.msk [vmem:[#allocation2 + $0x10] sm:$0xff] %vm1366, %v2183
        %2216 = vst.msk [vmem:[#allocation2 + $0x18] sm:$0xff] %vm1366, %v2184
        %2217 = vst.msk [vmem:[#allocation2 + $0x20] sm:$0xff] %vm1366, %v2185
        %2218 = vst.msk [vmem:[#allocation2 + $0x28] sm:$0xff] %vm1366, %v2186
        %2219 = vst.msk [vmem:[#allocation2 + $0x30] sm:$0xff] %vm1366, %v2187
        %2220 = vst.msk [vmem:[#allocation2 + $0x38] sm:$0xff] %vm1366, %v2188
        %2221 = vst.msk [vmem:[#allocation2 + $0x40] sm:$0xff] %vm1366, %v2189
        %2222 = vst.msk [vmem:[#allocation2 + $0x48] sm:$0xff] %vm1366, %v2190
        %2223 = vst.msk [vmem:[#allocation2 + $0x50] sm:$0xff] %vm1366, %v2191
        %2224 = vst.msk [vmem:[#allocation2 + $0x58] sm:$0xff] %vm1366, %v2192
        %2225 = vst.msk [vmem:[#allocation2 + $0x60] sm:$0xff] %vm1366, %v2193
        %2226 = vst.msk [vmem:[#allocation2 + $0x68] sm:$0xff] %vm1366, %v2194
        %2227 = vst.msk [vmem:[#allocation2 + $0x70] sm:$0xff] %vm1366, %v2195
        %2228 = vst.msk [vmem:[#allocation2 + $0x78] sm:$0xff] %vm1366, %v2196
        %2229 = vst.msk [vmem:[#allocation2 + $0x80] sm:$0xff] %vm1366, %v2197
        %2230 = vst.msk [vmem:[#allocation2 + $0x88] sm:$0xff] %vm1366, %v2198
        %2231 = vst.msk [vmem:[#allocation2 + $0x90] sm:$0xff] %vm1366, %v2199
        %2232 = vst.msk [vmem:[#allocation2 + $0x98] sm:$0xff] %vm1366, %v2200
        %2233 = vst.msk [vmem:[#allocation2 + $0xa0] sm:$0xff] %vm1366, %v2201
        %2234 = vst.msk [vmem:[#allocation2 + $0xa8] sm:$0xff] %vm1366, %v2202
        %2235 = vst.msk [vmem:[#allocation2 + $0xb0] sm:$0xff] %vm1366, %v2203
        %2236 = vst.msk [vmem:[#allocation2 + $0xb8] sm:$0xff] %vm1366, %v2204
        %2237 = vst.msk [vmem:[#allocation2 + $0xc0] sm:$0xff] %vm1366, %v2205
        %2238 = vst.msk [vmem:[#allocation2 + $0xc8] sm:$0xff] %vm1366, %v2206
        %2239 = vst.msk [vmem:[#allocation2 + $0xd0] sm:$0xff] %vm1366, %v2207
        %2240 = vst.msk [vmem:[#allocation2 + $0xd8] sm:$0xff] %vm1366, %v2208
        %2241 = vst.msk [vmem:[#allocation2 + $0xe0] sm:$0xff] %vm1366, %v2209
        %2242 = vst.msk [vmem:[#allocation2 + $0xe8] sm:$0xff] %vm1366, %v2210
        %2243 = vst.msk [vmem:[#allocation2 + $0xf0] sm:$0xff] %vm1366, %v2211
        %2244 = vst.msk [vmem:[#allocation2 + $0xf8] sm:$0xff] %vm1366, %v2212
        %v2245 = vld [vmem:[#allocation2] sm:$0xff]
        %v2246 = vld [vmem:[#allocation2 + $0x8] sm:$0xff]
        %v2247 = vld [vmem:[#allocation2 + $0x10] sm:$0xff]
        %v2248 = vld [vmem:[#allocation2 + $0x18] sm:$0xff]
        %v2249 = vld [vmem:[#allocation2 + $0x20] sm:$0xff]
        %v2250 = vld [vmem:[#allocation2 + $0x28] sm:$0xff]
        %v2251 = vld [vmem:[#allocation2 + $0x30] sm:$0xff]
        %v2252 = vld [vmem:[#allocation2 + $0x38] sm:$0xff]
        %v2253 = vld [vmem:[#allocation2 + $0x40] sm:$0xff]
        %v2254 = vld [vmem:[#allocation2 + $0x48] sm:$0xff]
        %v2255 = vld [vmem:[#allocation2 + $0x50] sm:$0xff]
        %v2256 = vld [vmem:[#allocation2 + $0x58] sm:$0xff]
        %v2257 = vld [vmem:[#allocation2 + $0x60] sm:$0xff]
        %v2258 = vld [vmem:[#allocation2 + $0x68] sm:$0xff]
        %v2259 = vld [vmem:[#allocation2 + $0x70] sm:$0xff]
        %v2260 = vld [vmem:[#allocation2 + $0x78] sm:$0xff]
        %v2261 = vld [vmem:[#allocation2 + $0x80] sm:$0xff]
        %v2262 = vld [vmem:[#allocation2 + $0x88] sm:$0xff]
        %v2263 = vld [vmem:[#allocation2 + $0x90] sm:$0xff]
        %v2264 = vld [vmem:[#allocation2 + $0x98] sm:$0xff]
        %v2265 = vld [vmem:[#allocation2 + $0xa0] sm:$0xff]
        %v2266 = vld [vmem:[#allocation2 + $0xa8] sm:$0xff]
        %v2267 = vld [vmem:[#allocation2 + $0xb0] sm:$0xff]
        %v2268 = vld [vmem:[#allocation2 + $0xb8] sm:$0xff]
        %v2269 = vld [vmem:[#allocation2 + $0xc0] sm:$0xff]
        %v2270 = vld [vmem:[#allocation2 + $0xc8] sm:$0xff]
        %v2271 = vld [vmem:[#allocation2 + $0xd0] sm:$0xff]
        %v2272 = vld [vmem:[#allocation2 + $0xd8] sm:$0xff]
        %v2273 = vld [vmem:[#allocation2 + $0xe0] sm:$0xff]
        %v2274 = vld [vmem:[#allocation2 + $0xe8] sm:$0xff]
        %v2275 = vld [vmem:[#allocation2 + $0xf0] sm:$0xff]
        %v2276 = vld [vmem:[#allocation2 + $0xf8] sm:$0xff]
        %s2277 = scalar_lea.vmem %s1337, 256 [#allocation3]
        %v2278 = vld [vmem:[%s2277] sm:$0xf]
        %v2279 = vld [vmem:[%s2277 + $0x4] sm:$0xf]
        %v2280 = vld [vmem:[%s2277 + $0x8] sm:$0xf]
        %v2281 = vld [vmem:[%s2277 + $0xc] sm:$0xf]
        %v2282 = vld [vmem:[%s2277 + $0x10] sm:$0xf]
        %v2283 = vld [vmem:[%s2277 + $0x14] sm:$0xf]
        %v2284 = vld [vmem:[%s2277 + $0x18] sm:$0xf]
        %v2285 = vld [vmem:[%s2277 + $0x1c] sm:$0xf]
        %v2286 = vld [vmem:[%s2277 + $0x20] sm:$0xf]
        %v2287 = vld [vmem:[%s2277 + $0x24] sm:$0xf]
        %v2288 = vld [vmem:[%s2277 + $0x28] sm:$0xf]
        %v2289 = vld [vmem:[%s2277 + $0x2c] sm:$0xf]
        %v2290 = vld [vmem:[%s2277 + $0x30] sm:$0xf]
        %v2291 = vld [vmem:[%s2277 + $0x34] sm:$0xf]
        %v2292 = vld [vmem:[%s2277 + $0x38] sm:$0xf]
        %v2293 = vld [vmem:[%s2277 + $0x3c] sm:$0xf]
        %v2294 = vld [vmem:[%s2277 + $0x40] sm:$0xf]
        %v2295 = vld [vmem:[%s2277 + $0x44] sm:$0xf]
        %v2296 = vld [vmem:[%s2277 + $0x48] sm:$0xf]
        %v2297 = vld [vmem:[%s2277 + $0x4c] sm:$0xf]
        %v2298 = vld [vmem:[%s2277 + $0x50] sm:$0xf]
        %v2299 = vld [vmem:[%s2277 + $0x54] sm:$0xf]
        %v2300 = vld [vmem:[%s2277 + $0x58] sm:$0xf]
        %v2301 = vld [vmem:[%s2277 + $0x5c] sm:$0xf]
        %v2302 = vld [vmem:[%s2277 + $0x60] sm:$0xf]
        %v2303 = vld [vmem:[%s2277 + $0x64] sm:$0xf]
        %v2304 = vld [vmem:[%s2277 + $0x68] sm:$0xf]
        %v2305 = vld [vmem:[%s2277 + $0x6c] sm:$0xf]
        %v2306 = vld [vmem:[%s2277 + $0x70] sm:$0xf]
        %v2307 = vld [vmem:[%s2277 + $0x74] sm:$0xf]
        %v2308 = vld [vmem:[%s2277 + $0x78] sm:$0xf]
        %v2309 = vld [vmem:[%s2277 + $0x7c] sm:$0xf]
        %s2310 = scalar_lea.vmem %s1, 4
        %v2311 = vld [vmem:[%s2310] sm:$0x3]
        %v2344 = vunpack.c.l.b16 %v2278
        %v2345 = vunpack.c.l.b16 %v2279
        %v2346 = vunpack.c.l.b16 %v2280
        %v2347 = vunpack.c.l.b16 %v2281
        %v2348 = vunpack.c.l.b16 %v2282
        %v2349 = vunpack.c.l.b16 %v2283
        %v2350 = vunpack.c.l.b16 %v2284
        %v2351 = vunpack.c.l.b16 %v2285
        %v2352 = vunpack.c.l.b16 %v2286
        %v2353 = vunpack.c.l.b16 %v2287
        %v2354 = vunpack.c.l.b16 %v2288
        %v2355 = vunpack.c.l.b16 %v2289
        %v2356 = vunpack.c.l.b16 %v2290
        %v2357 = vunpack.c.l.b16 %v2291
        %v2358 = vunpack.c.l.b16 %v2292
        %v2359 = vunpack.c.l.b16 %v2293
        %v2360 = vunpack.c.l.b16 %v2294
        %v2361 = vunpack.c.l.b16 %v2295
        %v2362 = vunpack.c.l.b16 %v2296
        %v2363 = vunpack.c.l.b16 %v2297
        %v2364 = vunpack.c.l.b16 %v2298
        %v2365 = vunpack.c.l.b16 %v2299
        %v2366 = vunpack.c.l.b16 %v2300
        %v2367 = vunpack.c.l.b16 %v2301
        %v2368 = vunpack.c.l.b16 %v2302
        %v2369 = vunpack.c.l.b16 %v2303
        %v2370 = vunpack.c.l.b16 %v2304
        %v2371 = vunpack.c.l.b16 %v2305
        %v2372 = vunpack.c.l.b16 %v2306
        %v2373 = vunpack.c.l.b16 %v2307
        %v2374 = vunpack.c.l.b16 %v2308
        %v2375 = vunpack.c.l.b16 %v2309
        %v2376 = vpack.c.b16 %v2345, %v2344
        %v2377 = vpack.c.b16 %v2347, %v2346
        %v2378 = vpack.c.b16 %v2349, %v2348
        %v2379 = vpack.c.b16 %v2351, %v2350
        %v2380 = vpack.c.b16 %v2353, %v2352
        %v2381 = vpack.c.b16 %v2355, %v2354
        %v2382 = vpack.c.b16 %v2357, %v2356
        %v2383 = vpack.c.b16 %v2359, %v2358
        %v2384 = vpack.c.b16 %v2361, %v2360
        %v2385 = vpack.c.b16 %v2363, %v2362
        %v2386 = vpack.c.b16 %v2365, %v2364
        %v2387 = vpack.c.b16 %v2367, %v2366
        %v2388 = vpack.c.b16 %v2369, %v2368
        %v2389 = vpack.c.b16 %v2371, %v2370
        %v2390 = vpack.c.b16 %v2373, %v2372
        %v2391 = vpack.c.b16 %v2375, %v2374
        %v2393 = vsel %vm1544, %v2376, 0
        %v2396 = vsel %vm1544, %v2377, 0
        %v2399 = vsel %vm1544, %v2378, 0
        %v2402 = vsel %vm1544, %v2379, 0
        %v2405 = vsel %vm1544, %v2380, 0
        %v2408 = vsel %vm1544, %v2381, 0
        %v2411 = vsel %vm1544, %v2382, 0
        %v2414 = vsel %vm1544, %v2383, 0
        %v2417 = vsel %vm1544, %v2384, 0
        %v2420 = vsel %vm1544, %v2385, 0
        %v2423 = vsel %vm1544, %v2386, 0
        %v2426 = vsel %vm1544, %v2387, 0
        %v2429 = vsel %vm1544, %v2388, 0
        %v2432 = vsel %vm1544, %v2389, 0
        %v2435 = vsel %vm1544, %v2390, 0
        %v2438 = vsel %vm1544, %v2391, 0
        %v2441 = vsel %vm1593, %v2311, 0
        %2443 = vmatprep.subr.bf16.mxu0 0
        %2444 = vmatpush1.bf16.msra.mxu0 0
        %2445 = vmatprep.subr.bf16.mxu0 0
        %2446 = vmatpush1.bf16.msra.mxu0 0
        %2447 = vmatprep.subr.bf16.mxu0 0
        %2448 = vmatpush1.bf16.msra.mxu0 0
        %2449 = vmatprep.subr.bf16.mxu0 0
        %2450 = vmatpush1.bf16.msra.mxu0 0
        %2451 = vmatprep.subr.bf16.mxu0 0
        %2452 = vmatpush1.bf16.msra.mxu0 0
        %2453 = vmatprep.subr.bf16.mxu0 0
        %2454 = vmatpush1.bf16.msra.mxu0 0
        %2455 = vmatprep.subr.bf16.mxu0 0
        %2456 = vmatpush1.bf16.msra.mxu0 0
        %2457 = vmatprep.subr.bf16.mxu0 0
        %2458 = vmatpush1.bf16.msra.mxu0 %v2441
        %2459 = vmatprep.subr.bf16.mxu0 0
        %2460 = vmatpush2.bf16.msra.mxu0 0
        %2461 = vmatprep.subr.bf16.mxu0 0
        %2462 = vmatpush2.bf16.msra.mxu0 0
        %2463 = vmatprep.subr.bf16.mxu0 0
        %2464 = vmatpush2.bf16.msra.mxu0 0
        %2465 = vmatprep.subr.bf16.mxu0 0
        %2466 = vmatpush2.bf16.msra.mxu0 0
        %2467 = vmatprep.subr.bf16.mxu0 0
        %2468 = vmatpush2.bf16.msra.mxu0 0
        %2469 = vmatprep.subr.bf16.mxu0 0
        %2470 = vmatpush2.bf16.msra.mxu0 0
        %2471 = vmatprep.subr.bf16.mxu0 0
        %2472 = vmatpush2.bf16.msra.mxu0 0
        %2473 = vmatprep.subr.bf16.mxu0 0
        %2474 = vmatpush2.bf16.msra.mxu0 0
        %2475 = vmatprep.mubr.bf16.mxu0 0
        %2476 = vmatmul.mubr.bf16.gmra.mxu0 %v2393
        %v2477 = vpop.f32.mrf.mxu0
        %v2478 = vadd.f32 0.0, %v2477
        %v2479 = vpop.f32.mrf.mxu0
        %v2480 = vpop.f32.mrf.mxu0
        %v2481 = vadd.f32 0.0, %v2480
        %v2482 = vpop.f32.mrf.mxu0
        %2483 = vmatprep.mubr.bf16.mxu0 0
        %2484 = vmatmul.mubr.bf16.gmra.mxu0 %v2396
        %v2485 = vpop.f32.mrf.mxu0
        %v2486 = vadd.f32 0.0, %v2485
        %v2487 = vpop.f32.mrf.mxu0
        %v2488 = vpop.f32.mrf.mxu0
        %v2489 = vadd.f32 0.0, %v2488
        %v2490 = vpop.f32.mrf.mxu0
        %2491 = vmatprep.mubr.bf16.mxu0 0
        %2492 = vmatmul.mubr.bf16.gmra.mxu0 %v2399
        %v2493 = vpop.f32.mrf.mxu0
        %v2494 = vadd.f32 0.0, %v2493
        %v2495 = vpop.f32.mrf.mxu0
        %v2496 = vpop.f32.mrf.mxu0
        %v2497 = vadd.f32 0.0, %v2496
        %v2498 = vpop.f32.mrf.mxu0
        %2499 = vmatprep.mubr.bf16.mxu0 0
        %2500 = vmatmul.mubr.bf16.gmra.mxu0 %v2402
        %v2501 = vpop.f32.mrf.mxu0
        %v2502 = vadd.f32 0.0, %v2501
        %v2503 = vpop.f32.mrf.mxu0
        %v2504 = vpop.f32.mrf.mxu0
        %v2505 = vadd.f32 0.0, %v2504
        %v2506 = vpop.f32.mrf.mxu0
        %2507 = vmatprep.mubr.bf16.mxu0 0
        %2508 = vmatmul.mubr.bf16.gmra.mxu0 %v2405
        %v2509 = vpop.f32.mrf.mxu0
        %v2510 = vadd.f32 0.0, %v2509
        %v2511 = vpop.f32.mrf.mxu0
        %v2512 = vpop.f32.mrf.mxu0
        %v2513 = vadd.f32 0.0, %v2512
        %v2514 = vpop.f32.mrf.mxu0
        %2515 = vmatprep.mubr.bf16.mxu0 0
        %2516 = vmatmul.mubr.bf16.gmra.mxu0 %v2408
        %v2517 = vpop.f32.mrf.mxu0
        %v2518 = vadd.f32 0.0, %v2517
        %v2519 = vpop.f32.mrf.mxu0
        %v2520 = vpop.f32.mrf.mxu0
        %v2521 = vadd.f32 0.0, %v2520
        %v2522 = vpop.f32.mrf.mxu0
        %2523 = vmatprep.mubr.bf16.mxu0 0
        %2524 = vmatmul.mubr.bf16.gmra.mxu0 %v2411
        %v2525 = vpop.f32.mrf.mxu0
        %v2526 = vadd.f32 0.0, %v2525
        %v2527 = vpop.f32.mrf.mxu0
        %v2528 = vpop.f32.mrf.mxu0
        %v2529 = vadd.f32 0.0, %v2528
        %v2530 = vpop.f32.mrf.mxu0
        %2531 = vmatprep.mubr.bf16.mxu0 0
        %2532 = vmatmul.mubr.bf16.gmra.mxu0 %v2414
        %v2533 = vpop.f32.mrf.mxu0
        %v2534 = vadd.f32 0.0, %v2533
        %v2535 = vpop.f32.mrf.mxu0
        %v2536 = vpop.f32.mrf.mxu0
        %v2537 = vadd.f32 0.0, %v2536
        %v2538 = vpop.f32.mrf.mxu0
        %2539 = vmatprep.mubr.bf16.mxu0 0
        %2540 = vmatmul.mubr.bf16.gmra.mxu0 %v2417
        %v2541 = vpop.f32.mrf.mxu0
        %v2542 = vadd.f32 0.0, %v2541
        %v2543 = vpop.f32.mrf.mxu0
        %v2544 = vpop.f32.mrf.mxu0
        %v2545 = vadd.f32 0.0, %v2544
        %v2546 = vpop.f32.mrf.mxu0
        %2547 = vmatprep.mubr.bf16.mxu0 0
        %2548 = vmatmul.mubr.bf16.gmra.mxu0 %v2420
        %v2549 = vpop.f32.mrf.mxu0
        %v2550 = vadd.f32 0.0, %v2549
        %v2551 = vpop.f32.mrf.mxu0
        %v2552 = vpop.f32.mrf.mxu0
        %v2553 = vadd.f32 0.0, %v2552
        %v2554 = vpop.f32.mrf.mxu0
        %2555 = vmatprep.mubr.bf16.mxu0 0
        %2556 = vmatmul.mubr.bf16.gmra.mxu0 %v2423
        %v2557 = vpop.f32.mrf.mxu0
        %v2558 = vadd.f32 0.0, %v2557
        %v2559 = vpop.f32.mrf.mxu0
        %v2560 = vpop.f32.mrf.mxu0
        %v2561 = vadd.f32 0.0, %v2560
        %v2562 = vpop.f32.mrf.mxu0
        %2563 = vmatprep.mubr.bf16.mxu0 0
        %2564 = vmatmul.mubr.bf16.gmra.mxu0 %v2426
        %v2565 = vpop.f32.mrf.mxu0
        %v2566 = vadd.f32 0.0, %v2565
        %v2567 = vpop.f32.mrf.mxu0
        %v2568 = vpop.f32.mrf.mxu0
        %v2569 = vadd.f32 0.0, %v2568
        %v2570 = vpop.f32.mrf.mxu0
        %2571 = vmatprep.mubr.bf16.mxu0 0
        %2572 = vmatmul.mubr.bf16.gmra.mxu0 %v2429
        %v2573 = vpop.f32.mrf.mxu0
        %v2574 = vadd.f32 0.0, %v2573
        %v2575 = vpop.f32.mrf.mxu0
        %v2576 = vpop.f32.mrf.mxu0
        %v2577 = vadd.f32 0.0, %v2576
        %v2578 = vpop.f32.mrf.mxu0
        %2579 = vmatprep.mubr.bf16.mxu0 0
        %2580 = vmatmul.mubr.bf16.gmra.mxu0 %v2432
        %v2581 = vpop.f32.mrf.mxu0
        %v2582 = vadd.f32 0.0, %v2581
        %v2583 = vpop.f32.mrf.mxu0
        %v2584 = vpop.f32.mrf.mxu0
        %v2585 = vadd.f32 0.0, %v2584
        %v2586 = vpop.f32.mrf.mxu0
        %2587 = vmatprep.mubr.bf16.mxu0 0
        %2588 = vmatmul.mubr.bf16.gmra.mxu0 %v2435
        %v2589 = vpop.f32.mrf.mxu0
        %v2590 = vadd.f32 0.0, %v2589
        %v2591 = vpop.f32.mrf.mxu0
        %v2592 = vpop.f32.mrf.mxu0
        %v2593 = vadd.f32 0.0, %v2592
        %v2594 = vpop.f32.mrf.mxu0
        %2595 = vmatprep.mubr.bf16.mxu0 0
        %2596 = vmatmul.mubr.bf16.gmra.mxu0 %v2438
        %v2597 = vpop.f32.mrf.mxu0
        %v2598 = vadd.f32 0.0, %v2597
        %v2599 = vpop.f32.mrf.mxu0
        %v2600 = vpop.f32.mrf.mxu0
        %v2601 = vadd.f32 0.0, %v2600
        %v2602 = vpop.f32.mrf.mxu0
        %2603 = vdwg.mxu0
        %v2604 = vadd.f32 %v2245, %v2478
        %v2605 = vadd.f32 %v2246, %v2481
        %v2606 = vadd.f32 %v2247, %v2486
        %v2607 = vadd.f32 %v2248, %v2489
        %v2608 = vadd.f32 %v2249, %v2494
        %v2609 = vadd.f32 %v2250, %v2497
        %v2610 = vadd.f32 %v2251, %v2502
        %v2611 = vadd.f32 %v2252, %v2505
        %v2612 = vadd.f32 %v2253, %v2510
        %v2613 = vadd.f32 %v2254, %v2513
        %v2614 = vadd.f32 %v2255, %v2518
        %v2615 = vadd.f32 %v2256, %v2521
        %v2616 = vadd.f32 %v2257, %v2526
        %v2617 = vadd.f32 %v2258, %v2529
        %v2618 = vadd.f32 %v2259, %v2534
        %v2619 = vadd.f32 %v2260, %v2537
        %v2620 = vadd.f32 %v2261, %v2542
        %v2621 = vadd.f32 %v2262, %v2545
        %v2622 = vadd.f32 %v2263, %v2550
        %v2623 = vadd.f32 %v2264, %v2553
        %v2624 = vadd.f32 %v2265, %v2558
        %v2625 = vadd.f32 %v2266, %v2561
        %v2626 = vadd.f32 %v2267, %v2566
        %v2627 = vadd.f32 %v2268, %v2569
        %v2628 = vadd.f32 %v2269, %v2574
        %v2629 = vadd.f32 %v2270, %v2577
        %v2630 = vadd.f32 %v2271, %v2582
        %v2631 = vadd.f32 %v2272, %v2585
        %v2632 = vadd.f32 %v2273, %v2590
        %v2633 = vadd.f32 %v2274, %v2593
        %v2634 = vadd.f32 %v2275, %v2598
        %v2635 = vadd.f32 %v2276, %v2601
        %2636 = vst.msk [vmem:[#allocation2] sm:$0xff] %vm1366, %v2604
        %2637 = vst.msk [vmem:[#allocation2 + $0x8] sm:$0xff] %vm1366, %v2605
        %2638 = vst.msk [vmem:[#allocation2 + $0x10] sm:$0xff] %vm1366, %v2606
        %2639 = vst.msk [vmem:[#allocation2 + $0x18] sm:$0xff] %vm1366, %v2607
        %2640 = vst.msk [vmem:[#allocation2 + $0x20] sm:$0xff] %vm1366, %v2608
        %2641 = vst.msk [vmem:[#allocation2 + $0x28] sm:$0xff] %vm1366, %v2609
        %2642 = vst.msk [vmem:[#allocation2 + $0x30] sm:$0xff] %vm1366, %v2610
        %2643 = vst.msk [vmem:[#allocation2 + $0x38] sm:$0xff] %vm1366, %v2611
        %2644 = vst.msk [vmem:[#allocation2 + $0x40] sm:$0xff] %vm1366, %v2612
        %2645 = vst.msk [vmem:[#allocation2 + $0x48] sm:$0xff] %vm1366, %v2613
        %2646 = vst.msk [vmem:[#allocation2 + $0x50] sm:$0xff] %vm1366, %v2614
        %2647 = vst.msk [vmem:[#allocation2 + $0x58] sm:$0xff] %vm1366, %v2615
        %2648 = vst.msk [vmem:[#allocation2 + $0x60] sm:$0xff] %vm1366, %v2616
        %2649 = vst.msk [vmem:[#allocation2 + $0x68] sm:$0xff] %vm1366, %v2617
        %2650 = vst.msk [vmem:[#allocation2 + $0x70] sm:$0xff] %vm1366, %v2618
        %2651 = vst.msk [vmem:[#allocation2 + $0x78] sm:$0xff] %vm1366, %v2619
        %2652 = vst.msk [vmem:[#allocation2 + $0x80] sm:$0xff] %vm1366, %v2620
        %2653 = vst.msk [vmem:[#allocation2 + $0x88] sm:$0xff] %vm1366, %v2621
        %2654 = vst.msk [vmem:[#allocation2 + $0x90] sm:$0xff] %vm1366, %v2622
        %2655 = vst.msk [vmem:[#allocation2 + $0x98] sm:$0xff] %vm1366, %v2623
        %2656 = vst.msk [vmem:[#allocation2 + $0xa0] sm:$0xff] %vm1366, %v2624
        %2657 = vst.msk [vmem:[#allocation2 + $0xa8] sm:$0xff] %vm1366, %v2625
        %2658 = vst.msk [vmem:[#allocation2 + $0xb0] sm:$0xff] %vm1366, %v2626
        %2659 = vst.msk [vmem:[#allocation2 + $0xb8] sm:$0xff] %vm1366, %v2627
        %2660 = vst.msk [vmem:[#allocation2 + $0xc0] sm:$0xff] %vm1366, %v2628
        %2661 = vst.msk [vmem:[#allocation2 + $0xc8] sm:$0xff] %vm1366, %v2629
        %2662 = vst.msk [vmem:[#allocation2 + $0xd0] sm:$0xff] %vm1366, %v2630
        %2663 = vst.msk [vmem:[#allocation2 + $0xd8] sm:$0xff] %vm1366, %v2631
        %2664 = vst.msk [vmem:[#allocation2 + $0xe0] sm:$0xff] %vm1366, %v2632
        %2665 = vst.msk [vmem:[#allocation2 + $0xe8] sm:$0xff] %vm1366, %v2633
        %2666 = vst.msk [vmem:[#allocation2 + $0xf0] sm:$0xff] %vm1366, %v2634
        %2667 = vst.msk [vmem:[#allocation2 + $0xf8] sm:$0xff] %vm1366, %v2635
        %v2668 = vld [vmem:[#allocation2] sm:$0xff]
        %v2669 = vld [vmem:[#allocation2 + $0x8] sm:$0xff]
        %v2670 = vld [vmem:[#allocation2 + $0x10] sm:$0xff]
        %v2671 = vld [vmem:[#allocation2 + $0x18] sm:$0xff]
        %v2672 = vld [vmem:[#allocation2 + $0x20] sm:$0xff]
        %v2673 = vld [vmem:[#allocation2 + $0x28] sm:$0xff]
        %v2674 = vld [vmem:[#allocation2 + $0x30] sm:$0xff]
        %v2675 = vld [vmem:[#allocation2 + $0x38] sm:$0xff]
        %v2676 = vld [vmem:[#allocation2 + $0x40] sm:$0xff]
        %v2677 = vld [vmem:[#allocation2 + $0x48] sm:$0xff]
        %v2678 = vld [vmem:[#allocation2 + $0x50] sm:$0xff]
        %v2679 = vld [vmem:[#allocation2 + $0x58] sm:$0xff]
        %v2680 = vld [vmem:[#allocation2 + $0x60] sm:$0xff]
        %v2681 = vld [vmem:[#allocation2 + $0x68] sm:$0xff]
        %v2682 = vld [vmem:[#allocation2 + $0x70] sm:$0xff]
        %v2683 = vld [vmem:[#allocation2 + $0x78] sm:$0xff]
        %v2684 = vld [vmem:[#allocation2 + $0x80] sm:$0xff]
        %v2685 = vld [vmem:[#allocation2 + $0x88] sm:$0xff]
        %v2686 = vld [vmem:[#allocation2 + $0x90] sm:$0xff]
        %v2687 = vld [vmem:[#allocation2 + $0x98] sm:$0xff]
        %v2688 = vld [vmem:[#allocation2 + $0xa0] sm:$0xff]
        %v2689 = vld [vmem:[#allocation2 + $0xa8] sm:$0xff]
        %v2690 = vld [vmem:[#allocation2 + $0xb0] sm:$0xff]
        %v2691 = vld [vmem:[#allocation2 + $0xb8] sm:$0xff]
        %v2692 = vld [vmem:[#allocation2 + $0xc0] sm:$0xff]
        %v2693 = vld [vmem:[#allocation2 + $0xc8] sm:$0xff]
        %v2694 = vld [vmem:[#allocation2 + $0xd0] sm:$0xff]
        %v2695 = vld [vmem:[#allocation2 + $0xd8] sm:$0xff]
        %v2696 = vld [vmem:[#allocation2 + $0xe0] sm:$0xff]
        %v2697 = vld [vmem:[#allocation2 + $0xe8] sm:$0xff]
        %v2698 = vld [vmem:[#allocation2 + $0xf0] sm:$0xff]
        %v2699 = vld [vmem:[#allocation2 + $0xf8] sm:$0xff]
        %s2700 = scalar_lea.vmem %s1337, 384 [#allocation3]
        %v2701 = vld [vmem:[%s2700] sm:$0xf]
        %v2702 = vld [vmem:[%s2700 + $0x4] sm:$0xf]
        %v2703 = vld [vmem:[%s2700 + $0x8] sm:$0xf]
        %v2704 = vld [vmem:[%s2700 + $0xc] sm:$0xf]
        %v2705 = vld [vmem:[%s2700 + $0x10] sm:$0xf]
        %v2706 = vld [vmem:[%s2700 + $0x14] sm:$0xf]
        %v2707 = vld [vmem:[%s2700 + $0x18] sm:$0xf]
        %v2708 = vld [vmem:[%s2700 + $0x1c] sm:$0xf]
        %v2709 = vld [vmem:[%s2700 + $0x20] sm:$0xf]
        %v2710 = vld [vmem:[%s2700 + $0x24] sm:$0xf]
        %v2711 = vld [vmem:[%s2700 + $0x28] sm:$0xf]
        %v2712 = vld [vmem:[%s2700 + $0x2c] sm:$0xf]
        %v2713 = vld [vmem:[%s2700 + $0x30] sm:$0xf]
        %v2714 = vld [vmem:[%s2700 + $0x34] sm:$0xf]
        %v2715 = vld [vmem:[%s2700 + $0x38] sm:$0xf]
        %v2716 = vld [vmem:[%s2700 + $0x3c] sm:$0xf]
        %v2717 = vld [vmem:[%s2700 + $0x40] sm:$0xf]
        %v2718 = vld [vmem:[%s2700 + $0x44] sm:$0xf]
        %v2719 = vld [vmem:[%s2700 + $0x48] sm:$0xf]
        %v2720 = vld [vmem:[%s2700 + $0x4c] sm:$0xf]
        %v2721 = vld [vmem:[%s2700 + $0x50] sm:$0xf]
        %v2722 = vld [vmem:[%s2700 + $0x54] sm:$0xf]
        %v2723 = vld [vmem:[%s2700 + $0x58] sm:$0xf]
        %v2724 = vld [vmem:[%s2700 + $0x5c] sm:$0xf]
        %v2725 = vld [vmem:[%s2700 + $0x60] sm:$0xf]
        %v2726 = vld [vmem:[%s2700 + $0x64] sm:$0xf]
        %v2727 = vld [vmem:[%s2700 + $0x68] sm:$0xf]
        %v2728 = vld [vmem:[%s2700 + $0x6c] sm:$0xf]
        %v2729 = vld [vmem:[%s2700 + $0x70] sm:$0xf]
        %v2730 = vld [vmem:[%s2700 + $0x74] sm:$0xf]
        %v2731 = vld [vmem:[%s2700 + $0x78] sm:$0xf]
        %v2732 = vld [vmem:[%s2700 + $0x7c] sm:$0xf]
        %s2733 = scalar_lea.vmem %s1, 6
        %v2734 = vld [vmem:[%s2733] sm:$0x3]
        %v2767 = vunpack.c.l.b16 %v2701
        %v2768 = vunpack.c.l.b16 %v2702
        %v2769 = vunpack.c.l.b16 %v2703
        %v2770 = vunpack.c.l.b16 %v2704
        %v2771 = vunpack.c.l.b16 %v2705
        %v2772 = vunpack.c.l.b16 %v2706
        %v2773 = vunpack.c.l.b16 %v2707
        %v2774 = vunpack.c.l.b16 %v2708
        %v2775 = vunpack.c.l.b16 %v2709
        %v2776 = vunpack.c.l.b16 %v2710
        %v2777 = vunpack.c.l.b16 %v2711
        %v2778 = vunpack.c.l.b16 %v2712
        %v2779 = vunpack.c.l.b16 %v2713
        %v2780 = vunpack.c.l.b16 %v2714
        %v2781 = vunpack.c.l.b16 %v2715
        %v2782 = vunpack.c.l.b16 %v2716
        %v2783 = vunpack.c.l.b16 %v2717
        %v2784 = vunpack.c.l.b16 %v2718
        %v2785 = vunpack.c.l.b16 %v2719
        %v2786 = vunpack.c.l.b16 %v2720
        %v2787 = vunpack.c.l.b16 %v2721
        %v2788 = vunpack.c.l.b16 %v2722
        %v2789 = vunpack.c.l.b16 %v2723
        %v2790 = vunpack.c.l.b16 %v2724
        %v2791 = vunpack.c.l.b16 %v2725
        %v2792 = vunpack.c.l.b16 %v2726
        %v2793 = vunpack.c.l.b16 %v2727
        %v2794 = vunpack.c.l.b16 %v2728
        %v2795 = vunpack.c.l.b16 %v2729
        %v2796 = vunpack.c.l.b16 %v2730
        %v2797 = vunpack.c.l.b16 %v2731
        %v2798 = vunpack.c.l.b16 %v2732
        %v2799 = vpack.c.b16 %v2768, %v2767
        %v2800 = vpack.c.b16 %v2770, %v2769
        %v2801 = vpack.c.b16 %v2772, %v2771
        %v2802 = vpack.c.b16 %v2774, %v2773
        %v2803 = vpack.c.b16 %v2776, %v2775
        %v2804 = vpack.c.b16 %v2778, %v2777
        %v2805 = vpack.c.b16 %v2780, %v2779
        %v2806 = vpack.c.b16 %v2782, %v2781
        %v2807 = vpack.c.b16 %v2784, %v2783
        %v2808 = vpack.c.b16 %v2786, %v2785
        %v2809 = vpack.c.b16 %v2788, %v2787
        %v2810 = vpack.c.b16 %v2790, %v2789
        %v2811 = vpack.c.b16 %v2792, %v2791
        %v2812 = vpack.c.b16 %v2794, %v2793
        %v2813 = vpack.c.b16 %v2796, %v2795
        %v2814 = vpack.c.b16 %v2798, %v2797
        %v2816 = vsel %vm1544, %v2799, 0
        %v2819 = vsel %vm1544, %v2800, 0
        %v2822 = vsel %vm1544, %v2801, 0
        %v2825 = vsel %vm1544, %v2802, 0
        %v2828 = vsel %vm1544, %v2803, 0
        %v2831 = vsel %vm1544, %v2804, 0
        %v2834 = vsel %vm1544, %v2805, 0
        %v2837 = vsel %vm1544, %v2806, 0
        %v2840 = vsel %vm1544, %v2807, 0
        %v2843 = vsel %vm1544, %v2808, 0
        %v2846 = vsel %vm1544, %v2809, 0
        %v2849 = vsel %vm1544, %v2810, 0
        %v2852 = vsel %vm1544, %v2811, 0
        %v2855 = vsel %vm1544, %v2812, 0
        %v2858 = vsel %vm1544, %v2813, 0
        %v2861 = vsel %vm1544, %v2814, 0
        %v2864 = vsel %vm1593, %v2734, 0
        %2866 = vmatprep.subr.bf16.mxu0 0
        %2867 = vmatpush1.bf16.msra.mxu0 0
        %2868 = vmatprep.subr.bf16.mxu0 0
        %2869 = vmatpush1.bf16.msra.mxu0 0
        %2870 = vmatprep.subr.bf16.mxu0 0
        %2871 = vmatpush1.bf16.msra.mxu0 0
        %2872 = vmatprep.subr.bf16.mxu0 0
        %2873 = vmatpush1.bf16.msra.mxu0 0
        %2874 = vmatprep.subr.bf16.mxu0 0
        %2875 = vmatpush1.bf16.msra.mxu0 0
        %2876 = vmatprep.subr.bf16.mxu0 0
        %2877 = vmatpush1.bf16.msra.mxu0 0
        %2878 = vmatprep.subr.bf16.mxu0 0
        %2879 = vmatpush1.bf16.msra.mxu0 0
        %2880 = vmatprep.subr.bf16.mxu0 0
        %2881 = vmatpush1.bf16.msra.mxu0 %v2864
        %2882 = vmatprep.subr.bf16.mxu0 0
        %2883 = vmatpush2.bf16.msra.mxu0 0
        %2884 = vmatprep.subr.bf16.mxu0 0
        %2885 = vmatpush2.bf16.msra.mxu0 0
        %2886 = vmatprep.subr.bf16.mxu0 0
        %2887 = vmatpush2.bf16.msra.mxu0 0
        %2888 = vmatprep.subr.bf16.mxu0 0
        %2889 = vmatpush2.bf16.msra.mxu0 0
        %2890 = vmatprep.subr.bf16.mxu0 0
        %2891 = vmatpush2.bf16.msra.mxu0 0
        %2892 = vmatprep.subr.bf16.mxu0 0
        %2893 = vmatpush2.bf16.msra.mxu0 0
        %2894 = vmatprep.subr.bf16.mxu0 0
        %2895 = vmatpush2.bf16.msra.mxu0 0
        %2896 = vmatprep.subr.bf16.mxu0 0
        %2897 = vmatpush2.bf16.msra.mxu0 0
        %2898 = vmatprep.mubr.bf16.mxu0 0
        %2899 = vmatmul.mubr.bf16.gmra.mxu0 %v2816
        %v2900 = vpop.f32.mrf.mxu0
        %v2901 = vadd.f32 0.0, %v2900
        %v2902 = vpop.f32.mrf.mxu0
        %v2903 = vpop.f32.mrf.mxu0
        %v2904 = vadd.f32 0.0, %v2903
        %v2905 = vpop.f32.mrf.mxu0
        %2906 = vmatprep.mubr.bf16.mxu0 0
        %2907 = vmatmul.mubr.bf16.gmra.mxu0 %v2819
        %v2908 = vpop.f32.mrf.mxu0
        %v2909 = vadd.f32 0.0, %v2908
        %v2910 = vpop.f32.mrf.mxu0
        %v2911 = vpop.f32.mrf.mxu0
        %v2912 = vadd.f32 0.0, %v2911
        %v2913 = vpop.f32.mrf.mxu0
        %2914 = vmatprep.mubr.bf16.mxu0 0
        %2915 = vmatmul.mubr.bf16.gmra.mxu0 %v2822
        %v2916 = vpop.f32.mrf.mxu0
        %v2917 = vadd.f32 0.0, %v2916
        %v2918 = vpop.f32.mrf.mxu0
        %v2919 = vpop.f32.mrf.mxu0
        %v2920 = vadd.f32 0.0, %v2919
        %v2921 = vpop.f32.mrf.mxu0
        %2922 = vmatprep.mubr.bf16.mxu0 0
        %2923 = vmatmul.mubr.bf16.gmra.mxu0 %v2825
        %v2924 = vpop.f32.mrf.mxu0
        %v2925 = vadd.f32 0.0, %v2924
        %v2926 = vpop.f32.mrf.mxu0
        %v2927 = vpop.f32.mrf.mxu0
        %v2928 = vadd.f32 0.0, %v2927
        %v2929 = vpop.f32.mrf.mxu0
        %2930 = vmatprep.mubr.bf16.mxu0 0
        %2931 = vmatmul.mubr.bf16.gmra.mxu0 %v2828
        %v2932 = vpop.f32.mrf.mxu0
        %v2933 = vadd.f32 0.0, %v2932
        %v2934 = vpop.f32.mrf.mxu0
        %v2935 = vpop.f32.mrf.mxu0
        %v2936 = vadd.f32 0.0, %v2935
        %v2937 = vpop.f32.mrf.mxu0
        %2938 = vmatprep.mubr.bf16.mxu0 0
        %2939 = vmatmul.mubr.bf16.gmra.mxu0 %v2831
        %v2940 = vpop.f32.mrf.mxu0
        %v2941 = vadd.f32 0.0, %v2940
        %v2942 = vpop.f32.mrf.mxu0
        %v2943 = vpop.f32.mrf.mxu0
        %v2944 = vadd.f32 0.0, %v2943
        %v2945 = vpop.f32.mrf.mxu0
        %2946 = vmatprep.mubr.bf16.mxu0 0
        %2947 = vmatmul.mubr.bf16.gmra.mxu0 %v2834
        %v2948 = vpop.f32.mrf.mxu0
        %v2949 = vadd.f32 0.0, %v2948
        %v2950 = vpop.f32.mrf.mxu0
        %v2951 = vpop.f32.mrf.mxu0
        %v2952 = vadd.f32 0.0, %v2951
        %v2953 = vpop.f32.mrf.mxu0
        %2954 = vmatprep.mubr.bf16.mxu0 0
        %2955 = vmatmul.mubr.bf16.gmra.mxu0 %v2837
        %v2956 = vpop.f32.mrf.mxu0
        %v2957 = vadd.f32 0.0, %v2956
        %v2958 = vpop.f32.mrf.mxu0
        %v2959 = vpop.f32.mrf.mxu0
        %v2960 = vadd.f32 0.0, %v2959
        %v2961 = vpop.f32.mrf.mxu0
        %2962 = vmatprep.mubr.bf16.mxu0 0
        %2963 = vmatmul.mubr.bf16.gmra.mxu0 %v2840
        %v2964 = vpop.f32.mrf.mxu0
        %v2965 = vadd.f32 0.0, %v2964
        %v2966 = vpop.f32.mrf.mxu0
        %v2967 = vpop.f32.mrf.mxu0
        %v2968 = vadd.f32 0.0, %v2967
        %v2969 = vpop.f32.mrf.mxu0
        %2970 = vmatprep.mubr.bf16.mxu0 0
        %2971 = vmatmul.mubr.bf16.gmra.mxu0 %v2843
        %v2972 = vpop.f32.mrf.mxu0
        %v2973 = vadd.f32 0.0, %v2972
        %v2974 = vpop.f32.mrf.mxu0
        %v2975 = vpop.f32.mrf.mxu0
        %v2976 = vadd.f32 0.0, %v2975
        %v2977 = vpop.f32.mrf.mxu0
        %2978 = vmatprep.mubr.bf16.mxu0 0
        %2979 = vmatmul.mubr.bf16.gmra.mxu0 %v2846
        %v2980 = vpop.f32.mrf.mxu0
        %v2981 = vadd.f32 0.0, %v2980
        %v2982 = vpop.f32.mrf.mxu0
        %v2983 = vpop.f32.mrf.mxu0
        %v2984 = vadd.f32 0.0, %v2983
        %v2985 = vpop.f32.mrf.mxu0
        %2986 = vmatprep.mubr.bf16.mxu0 0
        %2987 = vmatmul.mubr.bf16.gmra.mxu0 %v2849
        %v2988 = vpop.f32.mrf.mxu0
        %v2989 = vadd.f32 0.0, %v2988
        %v2990 = vpop.f32.mrf.mxu0
        %v2991 = vpop.f32.mrf.mxu0
        %v2992 = vadd.f32 0.0, %v2991
        %v2993 = vpop.f32.mrf.mxu0
        %2994 = vmatprep.mubr.bf16.mxu0 0
        %2995 = vmatmul.mubr.bf16.gmra.mxu0 %v2852
        %v2996 = vpop.f32.mrf.mxu0
        %v2997 = vadd.f32 0.0, %v2996
        %v2998 = vpop.f32.mrf.mxu0
        %v2999 = vpop.f32.mrf.mxu0
        %v3000 = vadd.f32 0.0, %v2999
        %v3001 = vpop.f32.mrf.mxu0
        %3002 = vmatprep.mubr.bf16.mxu0 0
        %3003 = vmatmul.mubr.bf16.gmra.mxu0 %v2855
        %v3004 = vpop.f32.mrf.mxu0
        %v3005 = vadd.f32 0.0, %v3004
        %v3006 = vpop.f32.mrf.mxu0
        %v3007 = vpop.f32.mrf.mxu0
        %v3008 = vadd.f32 0.0, %v3007
        %v3009 = vpop.f32.mrf.mxu0
        %3010 = vmatprep.mubr.bf16.mxu0 0
        %3011 = vmatmul.mubr.bf16.gmra.mxu0 %v2858
        %v3012 = vpop.f32.mrf.mxu0
        %v3013 = vadd.f32 0.0, %v3012
        %v3014 = vpop.f32.mrf.mxu0
        %v3015 = vpop.f32.mrf.mxu0
        %v3016 = vadd.f32 0.0, %v3015
        %v3017 = vpop.f32.mrf.mxu0
        %3018 = vmatprep.mubr.bf16.mxu0 0
        %3019 = vmatmul.mubr.bf16.gmra.mxu0 %v2861
        %v3020 = vpop.f32.mrf.mxu0
        %v3021 = vadd.f32 0.0, %v3020
        %v3022 = vpop.f32.mrf.mxu0
        %v3023 = vpop.f32.mrf.mxu0
        %v3024 = vadd.f32 0.0, %v3023
        %v3025 = vpop.f32.mrf.mxu0
        %3026 = vdwg.mxu0
        %v3027 = vadd.f32 %v2668, %v2901
        %v3028 = vadd.f32 %v2669, %v2904
        %v3029 = vadd.f32 %v2670, %v2909
        %v3030 = vadd.f32 %v2671, %v2912
        %v3031 = vadd.f32 %v2672, %v2917
        %v3032 = vadd.f32 %v2673, %v2920
        %v3033 = vadd.f32 %v2674, %v2925
        %v3034 = vadd.f32 %v2675, %v2928
        %v3035 = vadd.f32 %v2676, %v2933
        %v3036 = vadd.f32 %v2677, %v2936
        %v3037 = vadd.f32 %v2678, %v2941
        %v3038 = vadd.f32 %v2679, %v2944
        %v3039 = vadd.f32 %v2680, %v2949
        %v3040 = vadd.f32 %v2681, %v2952
        %v3041 = vadd.f32 %v2682, %v2957
        %v3042 = vadd.f32 %v2683, %v2960
        %v3043 = vadd.f32 %v2684, %v2965
        %v3044 = vadd.f32 %v2685, %v2968
        %v3045 = vadd.f32 %v2686, %v2973
        %v3046 = vadd.f32 %v2687, %v2976
        %v3047 = vadd.f32 %v2688, %v2981
        %v3048 = vadd.f32 %v2689, %v2984
        %v3049 = vadd.f32 %v2690, %v2989
        %v3050 = vadd.f32 %v2691, %v2992
        %v3051 = vadd.f32 %v2692, %v2997
        %v3052 = vadd.f32 %v2693, %v3000
        %v3053 = vadd.f32 %v2694, %v3005
        %v3054 = vadd.f32 %v2695, %v3008
        %v3055 = vadd.f32 %v2696, %v3013
        %v3056 = vadd.f32 %v2697, %v3016
        %v3057 = vadd.f32 %v2698, %v3021
        %v3058 = vadd.f32 %v2699, %v3024
        %3059 = vst.msk [vmem:[#allocation2] sm:$0xff] %vm1366, %v3027
        %3060 = vst.msk [vmem:[#allocation2 + $0x8] sm:$0xff] %vm1366, %v3028
        %3061 = vst.msk [vmem:[#allocation2 + $0x10] sm:$0xff] %vm1366, %v3029
        %3062 = vst.msk [vmem:[#allocation2 + $0x18] sm:$0xff] %vm1366, %v3030
        %3063 = vst.msk [vmem:[#allocation2 + $0x20] sm:$0xff] %vm1366, %v3031
        %3064 = vst.msk [vmem:[#allocation2 + $0x28] sm:$0xff] %vm1366, %v3032
        %3065 = vst.msk [vmem:[#allocation2 + $0x30] sm:$0xff] %vm1366, %v3033
        %3066 = vst.msk [vmem:[#allocation2 + $0x38] sm:$0xff] %vm1366, %v3034
        %3067 = vst.msk [vmem:[#allocation2 + $0x40] sm:$0xff] %vm1366, %v3035
        %3068 = vst.msk [vmem:[#allocation2 + $0x48] sm:$0xff] %vm1366, %v3036
        %3069 = vst.msk [vmem:[#allocation2 + $0x50] sm:$0xff] %vm1366, %v3037
        %3070 = vst.msk [vmem:[#allocation2 + $0x58] sm:$0xff] %vm1366, %v3038
        %3071 = vst.msk [vmem:[#allocation2 + $0x60] sm:$0xff] %vm1366, %v3039
        %3072 = vst.msk [vmem:[#allocation2 + $0x68] sm:$0xff] %vm1366, %v3040
        %3073 = vst.msk [vmem:[#allocation2 + $0x70] sm:$0xff] %vm1366, %v3041
        %3074 = vst.msk [vmem:[#allocation2 + $0x78] sm:$0xff] %vm1366, %v3042
        %3075 = vst.msk [vmem:[#allocation2 + $0x80] sm:$0xff] %vm1366, %v3043
        %3076 = vst.msk [vmem:[#allocation2 + $0x88] sm:$0xff] %vm1366, %v3044
        %3077 = vst.msk [vmem:[#allocation2 + $0x90] sm:$0xff] %vm1366, %v3045
        %3078 = vst.msk [vmem:[#allocation2 + $0x98] sm:$0xff] %vm1366, %v3046
        %3079 = vst.msk [vmem:[#allocation2 + $0xa0] sm:$0xff] %vm1366, %v3047
        %3080 = vst.msk [vmem:[#allocation2 + $0xa8] sm:$0xff] %vm1366, %v3048
        %3081 = vst.msk [vmem:[#allocation2 + $0xb0] sm:$0xff] %vm1366, %v3049
        %3082 = vst.msk [vmem:[#allocation2 + $0xb8] sm:$0xff] %vm1366, %v3050
        %3083 = vst.msk [vmem:[#allocation2 + $0xc0] sm:$0xff] %vm1366, %v3051
        %3084 = vst.msk [vmem:[#allocation2 + $0xc8] sm:$0xff] %vm1366, %v3052
        %3085 = vst.msk [vmem:[#allocation2 + $0xd0] sm:$0xff] %vm1366, %v3053
        %3086 = vst.msk [vmem:[#allocation2 + $0xd8] sm:$0xff] %vm1366, %v3054
        %3087 = vst.msk [vmem:[#allocation2 + $0xe0] sm:$0xff] %vm1366, %v3055
        %3088 = vst.msk [vmem:[#allocation2 + $0xe8] sm:$0xff] %vm1366, %v3056
        %3089 = vst.msk [vmem:[#allocation2 + $0xf0] sm:$0xff] %vm1366, %v3057
        %3090 = vst.msk [vmem:[#allocation2 + $0xf8] sm:$0xff] %vm1366, %v3058
        %v3091 = vld [vmem:[#allocation2] sm:$0xff]
        %v3092 = vld [vmem:[#allocation2 + $0x8] sm:$0xff]
        %v3093 = vld [vmem:[#allocation2 + $0x10] sm:$0xff]
        %v3094 = vld [vmem:[#allocation2 + $0x18] sm:$0xff]
        %v3095 = vld [vmem:[#allocation2 + $0x20] sm:$0xff]
        %v3096 = vld [vmem:[#allocation2 + $0x28] sm:$0xff]
        %v3097 = vld [vmem:[#allocation2 + $0x30] sm:$0xff]
        %v3098 = vld [vmem:[#allocation2 + $0x38] sm:$0xff]
        %v3099 = vld [vmem:[#allocation2 + $0x40] sm:$0xff]
        %v3100 = vld [vmem:[#allocation2 + $0x48] sm:$0xff]
        %v3101 = vld [vmem:[#allocation2 + $0x50] sm:$0xff]
        %v3102 = vld [vmem:[#allocation2 + $0x58] sm:$0xff]
        %v3103 = vld [vmem:[#allocation2 + $0x60] sm:$0xff]
        %v3104 = vld [vmem:[#allocation2 + $0x68] sm:$0xff]
        %v3105 = vld [vmem:[#allocation2 + $0x70] sm:$0xff]
        %v3106 = vld [vmem:[#allocation2 + $0x78] sm:$0xff]
        %v3107 = vld [vmem:[#allocation2 + $0x80] sm:$0xff]
        %v3108 = vld [vmem:[#allocation2 + $0x88] sm:$0xff]
        %v3109 = vld [vmem:[#allocation2 + $0x90] sm:$0xff]
        %v3110 = vld [vmem:[#allocation2 + $0x98] sm:$0xff]
        %v3111 = vld [vmem:[#allocation2 + $0xa0] sm:$0xff]
        %v3112 = vld [vmem:[#allocation2 + $0xa8] sm:$0xff]
        %v3113 = vld [vmem:[#allocation2 + $0xb0] sm:$0xff]
        %v3114 = vld [vmem:[#allocation2 + $0xb8] sm:$0xff]
        %v3115 = vld [vmem:[#allocation2 + $0xc0] sm:$0xff]
        %v3116 = vld [vmem:[#allocation2 + $0xc8] sm:$0xff]
        %v3117 = vld [vmem:[#allocation2 + $0xd0] sm:$0xff]
        %v3118 = vld [vmem:[#allocation2 + $0xd8] sm:$0xff]
        %v3119 = vld [vmem:[#allocation2 + $0xe0] sm:$0xff]
        %v3120 = vld [vmem:[#allocation2 + $0xe8] sm:$0xff]
        %v3121 = vld [vmem:[#allocation2 + $0xf0] sm:$0xff]
        %v3122 = vld [vmem:[#allocation2 + $0xf8] sm:$0xff]
        %s3123 = scalar_lea.vmem %s1337, 512 [#allocation3]
        %v3124 = vld [vmem:[%s3123] sm:$0xf]
        %v3125 = vld [vmem:[%s3123 + $0x4] sm:$0xf]
        %v3126 = vld [vmem:[%s3123 + $0x8] sm:$0xf]
        %v3127 = vld [vmem:[%s3123 + $0xc] sm:$0xf]
        %v3128 = vld [vmem:[%s3123 + $0x10] sm:$0xf]
        %v3129 = vld [vmem:[%s3123 + $0x14] sm:$0xf]
        %v3130 = vld [vmem:[%s3123 + $0x18] sm:$0xf]
        %v3131 = vld [vmem:[%s3123 + $0x1c] sm:$0xf]
        %v3132 = vld [vmem:[%s3123 + $0x20] sm:$0xf]
        %v3133 = vld [vmem:[%s3123 + $0x24] sm:$0xf]
        %v3134 = vld [vmem:[%s3123 + $0x28] sm:$0xf]
        %v3135 = vld [vmem:[%s3123 + $0x2c] sm:$0xf]
        %v3136 = vld [vmem:[%s3123 + $0x30] sm:$0xf]
        %v3137 = vld [vmem:[%s3123 + $0x34] sm:$0xf]
        %v3138 = vld [vmem:[%s3123 + $0x38] sm:$0xf]
        %v3139 = vld [vmem:[%s3123 + $0x3c] sm:$0xf]
        %v3140 = vld [vmem:[%s3123 + $0x40] sm:$0xf]
        %v3141 = vld [vmem:[%s3123 + $0x44] sm:$0xf]
        %v3142 = vld [vmem:[%s3123 + $0x48] sm:$0xf]
        %v3143 = vld [vmem:[%s3123 + $0x4c] sm:$0xf]
        %v3144 = vld [vmem:[%s3123 + $0x50] sm:$0xf]
        %v3145 = vld [vmem:[%s3123 + $0x54] sm:$0xf]
        %v3146 = vld [vmem:[%s3123 + $0x58] sm:$0xf]
        %v3147 = vld [vmem:[%s3123 + $0x5c] sm:$0xf]
        %v3148 = vld [vmem:[%s3123 + $0x60] sm:$0xf]
        %v3149 = vld [vmem:[%s3123 + $0x64] sm:$0xf]
        %v3150 = vld [vmem:[%s3123 + $0x68] sm:$0xf]
        %v3151 = vld [vmem:[%s3123 + $0x6c] sm:$0xf]
        %v3152 = vld [vmem:[%s3123 + $0x70] sm:$0xf]
        %v3153 = vld [vmem:[%s3123 + $0x74] sm:$0xf]
        %v3154 = vld [vmem:[%s3123 + $0x78] sm:$0xf]
        %v3155 = vld [vmem:[%s3123 + $0x7c] sm:$0xf]
        %s3156 = scalar_lea.vmem %s1, 8
        %v3157 = vld [vmem:[%s3156] sm:$0x3]
        %v3190 = vunpack.c.l.b16 %v3124
        %v3191 = vunpack.c.l.b16 %v3125
        %v3192 = vunpack.c.l.b16 %v3126
        %v3193 = vunpack.c.l.b16 %v3127
        %v3194 = vunpack.c.l.b16 %v3128
        %v3195 = vunpack.c.l.b16 %v3129
        %v3196 = vunpack.c.l.b16 %v3130
        %v3197 = vunpack.c.l.b16 %v3131
        %v3198 = vunpack.c.l.b16 %v3132
        %v3199 = vunpack.c.l.b16 %v3133
        %v3200 = vunpack.c.l.b16 %v3134
        %v3201 = vunpack.c.l.b16 %v3135
        %v3202 = vunpack.c.l.b16 %v3136
        %v3203 = vunpack.c.l.b16 %v3137
        %v3204 = vunpack.c.l.b16 %v3138
        %v3205 = vunpack.c.l.b16 %v3139
        %v3206 = vunpack.c.l.b16 %v3140
        %v3207 = vunpack.c.l.b16 %v3141
        %v3208 = vunpack.c.l.b16 %v3142
        %v3209 = vunpack.c.l.b16 %v3143
        %v3210 = vunpack.c.l.b16 %v3144
        %v3211 = vunpack.c.l.b16 %v3145
        %v3212 = vunpack.c.l.b16 %v3146
        %v3213 = vunpack.c.l.b16 %v3147
        %v3214 = vunpack.c.l.b16 %v3148
        %v3215 = vunpack.c.l.b16 %v3149
        %v3216 = vunpack.c.l.b16 %v3150
        %v3217 = vunpack.c.l.b16 %v3151
        %v3218 = vunpack.c.l.b16 %v3152
        %v3219 = vunpack.c.l.b16 %v3153
        %v3220 = vunpack.c.l.b16 %v3154
        %v3221 = vunpack.c.l.b16 %v3155
        %v3222 = vpack.c.b16 %v3191, %v3190
        %v3223 = vpack.c.b16 %v3193, %v3192
        %v3224 = vpack.c.b16 %v3195, %v3194
        %v3225 = vpack.c.b16 %v3197, %v3196
        %v3226 = vpack.c.b16 %v3199, %v3198
        %v3227 = vpack.c.b16 %v3201, %v3200
        %v3228 = vpack.c.b16 %v3203, %v3202
        %v3229 = vpack.c.b16 %v3205, %v3204
        %v3230 = vpack.c.b16 %v3207, %v3206
        %v3231 = vpack.c.b16 %v3209, %v3208
        %v3232 = vpack.c.b16 %v3211, %v3210
        %v3233 = vpack.c.b16 %v3213, %v3212
        %v3234 = vpack.c.b16 %v3215, %v3214
        %v3235 = vpack.c.b16 %v3217, %v3216
        %v3236 = vpack.c.b16 %v3219, %v3218
        %v3237 = vpack.c.b16 %v3221, %v3220
        %v3239 = vsel %vm1544, %v3222, 0
        %v3242 = vsel %vm1544, %v3223, 0
        %v3245 = vsel %vm1544, %v3224, 0
        %v3248 = vsel %vm1544, %v3225, 0
        %v3251 = vsel %vm1544, %v3226, 0
        %v3254 = vsel %vm1544, %v3227, 0
        %v3257 = vsel %vm1544, %v3228, 0
        %v3260 = vsel %vm1544, %v3229, 0
        %v3263 = vsel %vm1544, %v3230, 0
        %v3266 = vsel %vm1544, %v3231, 0
        %v3269 = vsel %vm1544, %v3232, 0
        %v3272 = vsel %vm1544, %v3233, 0
        %v3275 = vsel %vm1544, %v3234, 0
        %v3278 = vsel %vm1544, %v3235, 0
        %v3281 = vsel %vm1544, %v3236, 0
        %v3284 = vsel %vm1544, %v3237, 0
        %v3287 = vsel %vm1593, %v3157, 0
        %3289 = vmatprep.subr.bf16.mxu0 0
        %3290 = vmatpush1.bf16.msra.mxu0 0
        %3291 = vmatprep.subr.bf16.mxu0 0
        %3292 = vmatpush1.bf16.msra.mxu0 0
        %3293 = vmatprep.subr.bf16.mxu0 0
        %3294 = vmatpush1.bf16.msra.mxu0 0
        %3295 = vmatprep.subr.bf16.mxu0 0
        %3296 = vmatpush1.bf16.msra.mxu0 0
        %3297 = vmatprep.subr.bf16.mxu0 0
        %3298 = vmatpush1.bf16.msra.mxu0 0
        %3299 = vmatprep.subr.bf16.mxu0 0
        %3300 = vmatpush1.bf16.msra.mxu0 0
        %3301 = vmatprep.subr.bf16.mxu0 0
        %3302 = vmatpush1.bf16.msra.mxu0 0
        %3303 = vmatprep.subr.bf16.mxu0 0
        %3304 = vmatpush1.bf16.msra.mxu0 %v3287
        %3305 = vmatprep.subr.bf16.mxu0 0
        %3306 = vmatpush2.bf16.msra.mxu0 0
        %3307 = vmatprep.subr.bf16.mxu0 0
        %3308 = vmatpush2.bf16.msra.mxu0 0
        %3309 = vmatprep.subr.bf16.mxu0 0
        %3310 = vmatpush2.bf16.msra.mxu0 0
        %3311 = vmatprep.subr.bf16.mxu0 0
        %3312 = vmatpush2.bf16.msra.mxu0 0
        %3313 = vmatprep.subr.bf16.mxu0 0
        %3314 = vmatpush2.bf16.msra.mxu0 0
        %3315 = vmatprep.subr.bf16.mxu0 0
        %3316 = vmatpush2.bf16.msra.mxu0 0
        %3317 = vmatprep.subr.bf16.mxu0 0
        %3318 = vmatpush2.bf16.msra.mxu0 0
        %3319 = vmatprep.subr.bf16.mxu0 0
        %3320 = vmatpush2.bf16.msra.mxu0 0
        %3321 = vmatprep.mubr.bf16.mxu0 0
        %3322 = vmatmul.mubr.bf16.gmra.mxu0 %v3239
        %v3323 = vpop.f32.mrf.mxu0
        %v3324 = vadd.f32 0.0, %v3323
        %v3325 = vpop.f32.mrf.mxu0
        %v3326 = vpop.f32.mrf.mxu0
        %v3327 = vadd.f32 0.0, %v3326
        %v3328 = vpop.f32.mrf.mxu0
        %3329 = vmatprep.mubr.bf16.mxu0 0
        %3330 = vmatmul.mubr.bf16.gmra.mxu0 %v3242
        %v3331 = vpop.f32.mrf.mxu0
        %v3332 = vadd.f32 0.0, %v3331
        %v3333 = vpop.f32.mrf.mxu0
        %v3334 = vpop.f32.mrf.mxu0
        %v3335 = vadd.f32 0.0, %v3334
        %v3336 = vpop.f32.mrf.mxu0
        %3337 = vmatprep.mubr.bf16.mxu0 0
        %3338 = vmatmul.mubr.bf16.gmra.mxu0 %v3245
        %v3339 = vpop.f32.mrf.mxu0
        %v3340 = vadd.f32 0.0, %v3339
        %v3341 = vpop.f32.mrf.mxu0
        %v3342 = vpop.f32.mrf.mxu0
        %v3343 = vadd.f32 0.0, %v3342
        %v3344 = vpop.f32.mrf.mxu0
        %3345 = vmatprep.mubr.bf16.mxu0 0
        %3346 = vmatmul.mubr.bf16.gmra.mxu0 %v3248
        %v3347 = vpop.f32.mrf.mxu0
        %v3348 = vadd.f32 0.0, %v3347
        %v3349 = vpop.f32.mrf.mxu0
        %v3350 = vpop.f32.mrf.mxu0
        %v3351 = vadd.f32 0.0, %v3350
        %v3352 = vpop.f32.mrf.mxu0
        %3353 = vmatprep.mubr.bf16.mxu0 0
        %3354 = vmatmul.mubr.bf16.gmra.mxu0 %v3251
        %v3355 = vpop.f32.mrf.mxu0
        %v3356 = vadd.f32 0.0, %v3355
        %v3357 = vpop.f32.mrf.mxu0
        %v3358 = vpop.f32.mrf.mxu0
        %v3359 = vadd.f32 0.0, %v3358
        %v3360 = vpop.f32.mrf.mxu0
        %3361 = vmatprep.mubr.bf16.mxu0 0
        %3362 = vmatmul.mubr.bf16.gmra.mxu0 %v3254
        %v3363 = vpop.f32.mrf.mxu0
        %v3364 = vadd.f32 0.0, %v3363
        %v3365 = vpop.f32.mrf.mxu0
        %v3366 = vpop.f32.mrf.mxu0
        %v3367 = vadd.f32 0.0, %v3366
        %v3368 = vpop.f32.mrf.mxu0
        %3369 = vmatprep.mubr.bf16.mxu0 0
        %3370 = vmatmul.mubr.bf16.gmra.mxu0 %v3257
        %v3371 = vpop.f32.mrf.mxu0
        %v3372 = vadd.f32 0.0, %v3371
        %v3373 = vpop.f32.mrf.mxu0
        %v3374 = vpop.f32.mrf.mxu0
        %v3375 = vadd.f32 0.0, %v3374
        %v3376 = vpop.f32.mrf.mxu0
        %3377 = vmatprep.mubr.bf16.mxu0 0
        %3378 = vmatmul.mubr.bf16.gmra.mxu0 %v3260
        %v3379 = vpop.f32.mrf.mxu0
        %v3380 = vadd.f32 0.0, %v3379
        %v3381 = vpop.f32.mrf.mxu0
        %v3382 = vpop.f32.mrf.mxu0
        %v3383 = vadd.f32 0.0, %v3382
        %v3384 = vpop.f32.mrf.mxu0
        %3385 = vmatprep.mubr.bf16.mxu0 0
        %3386 = vmatmul.mubr.bf16.gmra.mxu0 %v3263
        %v3387 = vpop.f32.mrf.mxu0
        %v3388 = vadd.f32 0.0, %v3387
        %v3389 = vpop.f32.mrf.mxu0
        %v3390 = vpop.f32.mrf.mxu0
        %v3391 = vadd.f32 0.0, %v3390
        %v3392 = vpop.f32.mrf.mxu0
        %3393 = vmatprep.mubr.bf16.mxu0 0
        %3394 = vmatmul.mubr.bf16.gmra.mxu0 %v3266
        %v3395 = vpop.f32.mrf.mxu0
        %v3396 = vadd.f32 0.0, %v3395
        %v3397 = vpop.f32.mrf.mxu0
        %v3398 = vpop.f32.mrf.mxu0
        %v3399 = vadd.f32 0.0, %v3398
        %v3400 = vpop.f32.mrf.mxu0
        %3401 = vmatprep.mubr.bf16.mxu0 0
        %3402 = vmatmul.mubr.bf16.gmra.mxu0 %v3269
        %v3403 = vpop.f32.mrf.mxu0
        %v3404 = vadd.f32 0.0, %v3403
        %v3405 = vpop.f32.mrf.mxu0
        %v3406 = vpop.f32.mrf.mxu0
        %v3407 = vadd.f32 0.0, %v3406
        %v3408 = vpop.f32.mrf.mxu0
        %3409 = vmatprep.mubr.bf16.mxu0 0
        %3410 = vmatmul.mubr.bf16.gmra.mxu0 %v3272
        %v3411 = vpop.f32.mrf.mxu0
        %v3412 = vadd.f32 0.0, %v3411
        %v3413 = vpop.f32.mrf.mxu0
        %v3414 = vpop.f32.mrf.mxu0
        %v3415 = vadd.f32 0.0, %v3414
        %v3416 = vpop.f32.mrf.mxu0
        %3417 = vmatprep.mubr.bf16.mxu0 0
        %3418 = vmatmul.mubr.bf16.gmra.mxu0 %v3275
        %v3419 = vpop.f32.mrf.mxu0
        %v3420 = vadd.f32 0.0, %v3419
        %v3421 = vpop.f32.mrf.mxu0
        %v3422 = vpop.f32.mrf.mxu0
        %v3423 = vadd.f32 0.0, %v3422
        %v3424 = vpop.f32.mrf.mxu0
        %3425 = vmatprep.mubr.bf16.mxu0 0
        %3426 = vmatmul.mubr.bf16.gmra.mxu0 %v3278
        %v3427 = vpop.f32.mrf.mxu0
        %v3428 = vadd.f32 0.0, %v3427
        %v3429 = vpop.f32.mrf.mxu0
        %v3430 = vpop.f32.mrf.mxu0
        %v3431 = vadd.f32 0.0, %v3430
        %v3432 = vpop.f32.mrf.mxu0
        %3433 = vmatprep.mubr.bf16.mxu0 0
        %3434 = vmatmul.mubr.bf16.gmra.mxu0 %v3281
        %v3435 = vpop.f32.mrf.mxu0
        %v3436 = vadd.f32 0.0, %v3435
        %v3437 = vpop.f32.mrf.mxu0
        %v3438 = vpop.f32.mrf.mxu0
        %v3439 = vadd.f32 0.0, %v3438
        %v3440 = vpop.f32.mrf.mxu0
        %3441 = vmatprep.mubr.bf16.mxu0 0
        %3442 = vmatmul.mubr.bf16.gmra.mxu0 %v3284
        %v3443 = vpop.f32.mrf.mxu0
        %v3444 = vadd.f32 0.0, %v3443
        %v3445 = vpop.f32.mrf.mxu0
        %v3446 = vpop.f32.mrf.mxu0
        %v3447 = vadd.f32 0.0, %v3446
        %v3448 = vpop.f32.mrf.mxu0
        %3449 = vdwg.mxu0
        %v3450 = vadd.f32 %v3091, %v3324
        %v3451 = vadd.f32 %v3092, %v3327
        %v3452 = vadd.f32 %v3093, %v3332
        %v3453 = vadd.f32 %v3094, %v3335
        %v3454 = vadd.f32 %v3095, %v3340
        %v3455 = vadd.f32 %v3096, %v3343
        %v3456 = vadd.f32 %v3097, %v3348
        %v3457 = vadd.f32 %v3098, %v3351
        %v3458 = vadd.f32 %v3099, %v3356
        %v3459 = vadd.f32 %v3100, %v3359
        %v3460 = vadd.f32 %v3101, %v3364
        %v3461 = vadd.f32 %v3102, %v3367
        %v3462 = vadd.f32 %v3103, %v3372
        %v3463 = vadd.f32 %v3104, %v3375
        %v3464 = vadd.f32 %v3105, %v3380
        %v3465 = vadd.f32 %v3106, %v3383
        %v3466 = vadd.f32 %v3107, %v3388
        %v3467 = vadd.f32 %v3108, %v3391
        %v3468 = vadd.f32 %v3109, %v3396
        %v3469 = vadd.f32 %v3110, %v3399
        %v3470 = vadd.f32 %v3111, %v3404
        %v3471 = vadd.f32 %v3112, %v3407
        %v3472 = vadd.f32 %v3113, %v3412
        %v3473 = vadd.f32 %v3114, %v3415
        %v3474 = vadd.f32 %v3115, %v3420
        %v3475 = vadd.f32 %v3116, %v3423
        %v3476 = vadd.f32 %v3117, %v3428
        %v3477 = vadd.f32 %v3118, %v3431
        %v3478 = vadd.f32 %v3119, %v3436
        %v3479 = vadd.f32 %v3120, %v3439
        %v3480 = vadd.f32 %v3121, %v3444
        %v3481 = vadd.f32 %v3122, %v3447
        %3482 = vst.msk [vmem:[#allocation2] sm:$0xff] %vm1366, %v3450
        %3483 = vst.msk [vmem:[#allocation2 + $0x8] sm:$0xff] %vm1366, %v3451
        %3484 = vst.msk [vmem:[#allocation2 + $0x10] sm:$0xff] %vm1366, %v3452
        %3485 = vst.msk [vmem:[#allocation2 + $0x18] sm:$0xff] %vm1366, %v3453
        %3486 = vst.msk [vmem:[#allocation2 + $0x20] sm:$0xff] %vm1366, %v3454
        %3487 = vst.msk [vmem:[#allocation2 + $0x28] sm:$0xff] %vm1366, %v3455
        %3488 = vst.msk [vmem:[#allocation2 + $0x30] sm:$0xff] %vm1366, %v3456
        %3489 = vst.msk [vmem:[#allocation2 + $0x38] sm:$0xff] %vm1366, %v3457
        %3490 = vst.msk [vmem:[#allocation2 + $0x40] sm:$0xff] %vm1366, %v3458
        %3491 = vst.msk [vmem:[#allocation2 + $0x48] sm:$0xff] %vm1366, %v3459
        %3492 = vst.msk [vmem:[#allocation2 + $0x50] sm:$0xff] %vm1366, %v3460
        %3493 = vst.msk [vmem:[#allocation2 + $0x58] sm:$0xff] %vm1366, %v3461
        %3494 = vst.msk [vmem:[#allocation2 + $0x60] sm:$0xff] %vm1366, %v3462
        %3495 = vst.msk [vmem:[#allocation2 + $0x68] sm:$0xff] %vm1366, %v3463
        %3496 = vst.msk [vmem:[#allocation2 + $0x70] sm:$0xff] %vm1366, %v3464
        %3497 = vst.msk [vmem:[#allocation2 + $0x78] sm:$0xff] %vm1366, %v3465
        %3498 = vst.msk [vmem:[#allocation2 + $0x80] sm:$0xff] %vm1366, %v3466
        %3499 = vst.msk [vmem:[#allocation2 + $0x88] sm:$0xff] %vm1366, %v3467
        %3500 = vst.msk [vmem:[#allocation2 + $0x90] sm:$0xff] %vm1366, %v3468
        %3501 = vst.msk [vmem:[#allocation2 + $0x98] sm:$0xff] %vm1366, %v3469
        %3502 = vst.msk [vmem:[#allocation2 + $0xa0] sm:$0xff] %vm1366, %v3470
        %3503 = vst.msk [vmem:[#allocation2 + $0xa8] sm:$0xff] %vm1366, %v3471
        %3504 = vst.msk [vmem:[#allocation2 + $0xb0] sm:$0xff] %vm1366, %v3472
        %3505 = vst.msk [vmem:[#allocation2 + $0xb8] sm:$0xff] %vm1366, %v3473
        %3506 = vst.msk [vmem:[#allocation2 + $0xc0] sm:$0xff] %vm1366, %v3474
        %3507 = vst.msk [vmem:[#allocation2 + $0xc8] sm:$0xff] %vm1366, %v3475
        %3508 = vst.msk [vmem:[#allocation2 + $0xd0] sm:$0xff] %vm1366, %v3476
        %3509 = vst.msk [vmem:[#allocation2 + $0xd8] sm:$0xff] %vm1366, %v3477
        %3510 = vst.msk [vmem:[#allocation2 + $0xe0] sm:$0xff] %vm1366, %v3478
        %3511 = vst.msk [vmem:[#allocation2 + $0xe8] sm:$0xff] %vm1366, %v3479
        %3512 = vst.msk [vmem:[#allocation2 + $0xf0] sm:$0xff] %vm1366, %v3480
        %3513 = vst.msk [vmem:[#allocation2 + $0xf8] sm:$0xff] %vm1366, %v3481
        %v3514 = vld [vmem:[#allocation2] sm:$0xff]
        %v3515 = vld [vmem:[#allocation2 + $0x8] sm:$0xff]
        %v3516 = vld [vmem:[#allocation2 + $0x10] sm:$0xff]
        %v3517 = vld [vmem:[#allocation2 + $0x18] sm:$0xff]
        %v3518 = vld [vmem:[#allocation2 + $0x20] sm:$0xff]
        %v3519 = vld [vmem:[#allocation2 + $0x28] sm:$0xff]
        %v3520 = vld [vmem:[#allocation2 + $0x30] sm:$0xff]
        %v3521 = vld [vmem:[#allocation2 + $0x38] sm:$0xff]
        %v3522 = vld [vmem:[#allocation2 + $0x40] sm:$0xff]
        %v3523 = vld [vmem:[#allocation2 + $0x48] sm:$0xff]
        %v3524 = vld [vmem:[#allocation2 + $0x50] sm:$0xff]
        %v3525 = vld [vmem:[#allocation2 + $0x58] sm:$0xff]
        %v3526 = vld [vmem:[#allocation2 + $0x60] sm:$0xff]
        %v3527 = vld [vmem:[#allocation2 + $0x68] sm:$0xff]
        %v3528 = vld [vmem:[#allocation2 + $0x70] sm:$0xff]
        %v3529 = vld [vmem:[#allocation2 + $0x78] sm:$0xff]
        %v3530 = vld [vmem:[#allocation2 + $0x80] sm:$0xff]
        %v3531 = vld [vmem:[#allocation2 + $0x88] sm:$0xff]
        %v3532 = vld [vmem:[#allocation2 + $0x90] sm:$0xff]
        %v3533 = vld [vmem:[#allocation2 + $0x98] sm:$0xff]
        %v3534 = vld [vmem:[#allocation2 + $0xa0] sm:$0xff]
        %v3535 = vld [vmem:[#allocation2 + $0xa8] sm:$0xff]
        %v3536 = vld [vmem:[#allocation2 + $0xb0] sm:$0xff]
        %v3537 = vld [vmem:[#allocation2 + $0xb8] sm:$0xff]
        %v3538 = vld [vmem:[#allocation2 + $0xc0] sm:$0xff]
        %v3539 = vld [vmem:[#allocation2 + $0xc8] sm:$0xff]
        %v3540 = vld [vmem:[#allocation2 + $0xd0] sm:$0xff]
        %v3541 = vld [vmem:[#allocation2 + $0xd8] sm:$0xff]
        %v3542 = vld [vmem:[#allocation2 + $0xe0] sm:$0xff]
        %v3543 = vld [vmem:[#allocation2 + $0xe8] sm:$0xff]
        %v3544 = vld [vmem:[#allocation2 + $0xf0] sm:$0xff]
        %v3545 = vld [vmem:[#allocation2 + $0xf8] sm:$0xff]
        %s3546 = scalar_lea.vmem %s1337, 640 [#allocation3]
        %v3547 = vld [vmem:[%s3546] sm:$0xf]
        %v3548 = vld [vmem:[%s3546 + $0x4] sm:$0xf]
        %v3549 = vld [vmem:[%s3546 + $0x8] sm:$0xf]
        %v3550 = vld [vmem:[%s3546 + $0xc] sm:$0xf]
        %v3551 = vld [vmem:[%s3546 + $0x10] sm:$0xf]
        %v3552 = vld [vmem:[%s3546 + $0x14] sm:$0xf]
        %v3553 = vld [vmem:[%s3546 + $0x18] sm:$0xf]
        %v3554 = vld [vmem:[%s3546 + $0x1c] sm:$0xf]
        %v3555 = vld [vmem:[%s3546 + $0x20] sm:$0xf]
        %v3556 = vld [vmem:[%s3546 + $0x24] sm:$0xf]
        %v3557 = vld [vmem:[%s3546 + $0x28] sm:$0xf]
        %v3558 = vld [vmem:[%s3546 + $0x2c] sm:$0xf]
        %v3559 = vld [vmem:[%s3546 + $0x30] sm:$0xf]
        %v3560 = vld [vmem:[%s3546 + $0x34] sm:$0xf]
        %v3561 = vld [vmem:[%s3546 + $0x38] sm:$0xf]
        %v3562 = vld [vmem:[%s3546 + $0x3c] sm:$0xf]
        %v3563 = vld [vmem:[%s3546 + $0x40] sm:$0xf]
        %v3564 = vld [vmem:[%s3546 + $0x44] sm:$0xf]
        %v3565 = vld [vmem:[%s3546 + $0x48] sm:$0xf]
        %v3566 = vld [vmem:[%s3546 + $0x4c] sm:$0xf]
        %v3567 = vld [vmem:[%s3546 + $0x50] sm:$0xf]
        %v3568 = vld [vmem:[%s3546 + $0x54] sm:$0xf]
        %v3569 = vld [vmem:[%s3546 + $0x58] sm:$0xf]
        %v3570 = vld [vmem:[%s3546 + $0x5c] sm:$0xf]
        %v3571 = vld [vmem:[%s3546 + $0x60] sm:$0xf]
        %v3572 = vld [vmem:[%s3546 + $0x64] sm:$0xf]
        %v3573 = vld [vmem:[%s3546 + $0x68] sm:$0xf]
        %v3574 = vld [vmem:[%s3546 + $0x6c] sm:$0xf]
        %v3575 = vld [vmem:[%s3546 + $0x70] sm:$0xf]
        %v3576 = vld [vmem:[%s3546 + $0x74] sm:$0xf]
        %v3577 = vld [vmem:[%s3546 + $0x78] sm:$0xf]
        %v3578 = vld [vmem:[%s3546 + $0x7c] sm:$0xf]
        %s3579 = scalar_lea.vmem %s1, 10
        %v3580 = vld [vmem:[%s3579] sm:$0x3]
        %v3613 = vunpack.c.l.b16 %v3547
        %v3614 = vunpack.c.l.b16 %v3548
        %v3615 = vunpack.c.l.b16 %v3549
        %v3616 = vunpack.c.l.b16 %v3550
        %v3617 = vunpack.c.l.b16 %v3551
        %v3618 = vunpack.c.l.b16 %v3552
        %v3619 = vunpack.c.l.b16 %v3553
        %v3620 = vunpack.c.l.b16 %v3554
        %v3621 = vunpack.c.l.b16 %v3555
        %v3622 = vunpack.c.l.b16 %v3556
        %v3623 = vunpack.c.l.b16 %v3557
        %v3624 = vunpack.c.l.b16 %v3558
        %v3625 = vunpack.c.l.b16 %v3559
        %v3626 = vunpack.c.l.b16 %v3560
        %v3627 = vunpack.c.l.b16 %v3561
        %v3628 = vunpack.c.l.b16 %v3562
        %v3629 = vunpack.c.l.b16 %v3563
        %v3630 = vunpack.c.l.b16 %v3564
        %v3631 = vunpack.c.l.b16 %v3565
        %v3632 = vunpack.c.l.b16 %v3566
        %v3633 = vunpack.c.l.b16 %v3567
        %v3634 = vunpack.c.l.b16 %v3568
        %v3635 = vunpack.c.l.b16 %v3569
        %v3636 = vunpack.c.l.b16 %v3570
        %v3637 = vunpack.c.l.b16 %v3571
        %v3638 = vunpack.c.l.b16 %v3572
        %v3639 = vunpack.c.l.b16 %v3573
        %v3640 = vunpack.c.l.b16 %v3574
        %v3641 = vunpack.c.l.b16 %v3575
        %v3642 = vunpack.c.l.b16 %v3576
        %v3643 = vunpack.c.l.b16 %v3577
        %v3644 = vunpack.c.l.b16 %v3578
        %v3645 = vpack.c.b16 %v3614, %v3613
        %v3646 = vpack.c.b16 %v3616, %v3615
        %v3647 = vpack.c.b16 %v3618, %v3617
        %v3648 = vpack.c.b16 %v3620, %v3619
        %v3649 = vpack.c.b16 %v3622, %v3621
        %v3650 = vpack.c.b16 %v3624, %v3623
        %v3651 = vpack.c.b16 %v3626, %v3625
        %v3652 = vpack.c.b16 %v3628, %v3627
        %v3653 = vpack.c.b16 %v3630, %v3629
        %v3654 = vpack.c.b16 %v3632, %v3631
        %v3655 = vpack.c.b16 %v3634, %v3633
        %v3656 = vpack.c.b16 %v3636, %v3635
        %v3657 = vpack.c.b16 %v3638, %v3637
        %v3658 = vpack.c.b16 %v3640, %v3639
        %v3659 = vpack.c.b16 %v3642, %v3641
        %v3660 = vpack.c.b16 %v3644, %v3643
        %v3662 = vsel %vm1544, %v3645, 0
        %v3665 = vsel %vm1544, %v3646, 0
        %v3668 = vsel %vm1544, %v3647, 0
        %v3671 = vsel %vm1544, %v3648, 0
        %v3674 = vsel %vm1544, %v3649, 0
        %v3677 = vsel %vm1544, %v3650, 0
        %v3680 = vsel %vm1544, %v3651, 0
        %v3683 = vsel %vm1544, %v3652, 0
        %v3686 = vsel %vm1544, %v3653, 0
        %v3689 = vsel %vm1544, %v3654, 0
        %v3692 = vsel %vm1544, %v3655, 0
        %v3695 = vsel %vm1544, %v3656, 0
        %v3698 = vsel %vm1544, %v3657, 0
        %v3701 = vsel %vm1544, %v3658, 0
        %v3704 = vsel %vm1544, %v3659, 0
        %v3707 = vsel %vm1544, %v3660, 0
        %v3710 = vsel %vm1593, %v3580, 0
        %3712 = vmatprep.subr.bf16.mxu0 0
        %3713 = vmatpush1.bf16.msra.mxu0 0
        %3714 = vmatprep.subr.bf16.mxu0 0
        %3715 = vmatpush1.bf16.msra.mxu0 0
        %3716 = vmatprep.subr.bf16.mxu0 0
        %3717 = vmatpush1.bf16.msra.mxu0 0
        %3718 = vmatprep.subr.bf16.mxu0 0
        %3719 = vmatpush1.bf16.msra.mxu0 0
        %3720 = vmatprep.subr.bf16.mxu0 0
        %3721 = vmatpush1.bf16.msra.mxu0 0
        %3722 = vmatprep.subr.bf16.mxu0 0
        %3723 = vmatpush1.bf16.msra.mxu0 0
        %3724 = vmatprep.subr.bf16.mxu0 0
        %3725 = vmatpush1.bf16.msra.mxu0 0
        %3726 = vmatprep.subr.bf16.mxu0 0
        %3727 = vmatpush1.bf16.msra.mxu0 %v3710
        %3728 = vmatprep.subr.bf16.mxu0 0
        %3729 = vmatpush2.bf16.msra.mxu0 0
        %3730 = vmatprep.subr.bf16.mxu0 0
        %3731 = vmatpush2.bf16.msra.mxu0 0
        %3732 = vmatprep.subr.bf16.mxu0 0
        %3733 = vmatpush2.bf16.msra.mxu0 0
        %3734 = vmatprep.subr.bf16.mxu0 0
        %3735 = vmatpush2.bf16.msra.mxu0 0
        %3736 = vmatprep.subr.bf16.mxu0 0
        %3737 = vmatpush2.bf16.msra.mxu0 0
        %3738 = vmatprep.subr.bf16.mxu0 0
        %3739 = vmatpush2.bf16.msra.mxu0 0
        %3740 = vmatprep.subr.bf16.mxu0 0
        %3741 = vmatpush2.bf16.msra.mxu0 0
        %3742 = vmatprep.subr.bf16.mxu0 0
        %3743 = vmatpush2.bf16.msra.mxu0 0
        %3744 = vmatprep.mubr.bf16.mxu0 0
        %3745 = vmatmul.mubr.bf16.gmra.mxu0 %v3662
        %v3746 = vpop.f32.mrf.mxu0
        %v3747 = vadd.f32 0.0, %v3746
        %v3748 = vpop.f32.mrf.mxu0
        %v3749 = vpop.f32.mrf.mxu0
        %v3750 = vadd.f32 0.0, %v3749
        %v3751 = vpop.f32.mrf.mxu0
        %3752 = vmatprep.mubr.bf16.mxu0 0
        %3753 = vmatmul.mubr.bf16.gmra.mxu0 %v3665
        %v3754 = vpop.f32.mrf.mxu0
        %v3755 = vadd.f32 0.0, %v3754
        %v3756 = vpop.f32.mrf.mxu0
        %v3757 = vpop.f32.mrf.mxu0
        %v3758 = vadd.f32 0.0, %v3757
        %v3759 = vpop.f32.mrf.mxu0
        %3760 = vmatprep.mubr.bf16.mxu0 0
        %3761 = vmatmul.mubr.bf16.gmra.mxu0 %v3668
        %v3762 = vpop.f32.mrf.mxu0
        %v3763 = vadd.f32 0.0, %v3762
        %v3764 = vpop.f32.mrf.mxu0
        %v3765 = vpop.f32.mrf.mxu0
        %v3766 = vadd.f32 0.0, %v3765
        %v3767 = vpop.f32.mrf.mxu0
        %3768 = vmatprep.mubr.bf16.mxu0 0
        %3769 = vmatmul.mubr.bf16.gmra.mxu0 %v3671
        %v3770 = vpop.f32.mrf.mxu0
        %v3771 = vadd.f32 0.0, %v3770
        %v3772 = vpop.f32.mrf.mxu0
        %v3773 = vpop.f32.mrf.mxu0
        %v3774 = vadd.f32 0.0, %v3773
        %v3775 = vpop.f32.mrf.mxu0
        %3776 = vmatprep.mubr.bf16.mxu0 0
        %3777 = vmatmul.mubr.bf16.gmra.mxu0 %v3674
        %v3778 = vpop.f32.mrf.mxu0
        %v3779 = vadd.f32 0.0, %v3778
        %v3780 = vpop.f32.mrf.mxu0
        %v3781 = vpop.f32.mrf.mxu0
        %v3782 = vadd.f32 0.0, %v3781
        %v3783 = vpop.f32.mrf.mxu0
        %3784 = vmatprep.mubr.bf16.mxu0 0
        %3785 = vmatmul.mubr.bf16.gmra.mxu0 %v3677
        %v3786 = vpop.f32.mrf.mxu0
        %v3787 = vadd.f32 0.0, %v3786
        %v3788 = vpop.f32.mrf.mxu0
        %v3789 = vpop.f32.mrf.mxu0
        %v3790 = vadd.f32 0.0, %v3789
        %v3791 = vpop.f32.mrf.mxu0
        %3792 = vmatprep.mubr.bf16.mxu0 0
        %3793 = vmatmul.mubr.bf16.gmra.mxu0 %v3680
        %v3794 = vpop.f32.mrf.mxu0
        %v3795 = vadd.f32 0.0, %v3794
        %v3796 = vpop.f32.mrf.mxu0
        %v3797 = vpop.f32.mrf.mxu0
        %v3798 = vadd.f32 0.0, %v3797
        %v3799 = vpop.f32.mrf.mxu0
        %3800 = vmatprep.mubr.bf16.mxu0 0
        %3801 = vmatmul.mubr.bf16.gmra.mxu0 %v3683
        %v3802 = vpop.f32.mrf.mxu0
        %v3803 = vadd.f32 0.0, %v3802
        %v3804 = vpop.f32.mrf.mxu0
        %v3805 = vpop.f32.mrf.mxu0
        %v3806 = vadd.f32 0.0, %v3805
        %v3807 = vpop.f32.mrf.mxu0
        %3808 = vmatprep.mubr.bf16.mxu0 0
        %3809 = vmatmul.mubr.bf16.gmra.mxu0 %v3686
        %v3810 = vpop.f32.mrf.mxu0
        %v3811 = vadd.f32 0.0, %v3810
        %v3812 = vpop.f32.mrf.mxu0
        %v3813 = vpop.f32.mrf.mxu0
        %v3814 = vadd.f32 0.0, %v3813
        %v3815 = vpop.f32.mrf.mxu0
        %3816 = vmatprep.mubr.bf16.mxu0 0
        %3817 = vmatmul.mubr.bf16.gmra.mxu0 %v3689
        %v3818 = vpop.f32.mrf.mxu0
        %v3819 = vadd.f32 0.0, %v3818
        %v3820 = vpop.f32.mrf.mxu0
        %v3821 = vpop.f32.mrf.mxu0
        %v3822 = vadd.f32 0.0, %v3821
        %v3823 = vpop.f32.mrf.mxu0
        %3824 = vmatprep.mubr.bf16.mxu0 0
        %3825 = vmatmul.mubr.bf16.gmra.mxu0 %v3692
        %v3826 = vpop.f32.mrf.mxu0
        %v3827 = vadd.f32 0.0, %v3826
        %v3828 = vpop.f32.mrf.mxu0
        %v3829 = vpop.f32.mrf.mxu0
        %v3830 = vadd.f32 0.0, %v3829
        %v3831 = vpop.f32.mrf.mxu0
        %3832 = vmatprep.mubr.bf16.mxu0 0
        %3833 = vmatmul.mubr.bf16.gmra.mxu0 %v3695
        %v3834 = vpop.f32.mrf.mxu0
        %v3835 = vadd.f32 0.0, %v3834
        %v3836 = vpop.f32.mrf.mxu0
        %v3837 = vpop.f32.mrf.mxu0
        %v3838 = vadd.f32 0.0, %v3837
        %v3839 = vpop.f32.mrf.mxu0
        %3840 = vmatprep.mubr.bf16.mxu0 0
        %3841 = vmatmul.mubr.bf16.gmra.mxu0 %v3698
        %v3842 = vpop.f32.mrf.mxu0
        %v3843 = vadd.f32 0.0, %v3842
        %v3844 = vpop.f32.mrf.mxu0
        %v3845 = vpop.f32.mrf.mxu0
        %v3846 = vadd.f32 0.0, %v3845
        %v3847 = vpop.f32.mrf.mxu0
        %3848 = vmatprep.mubr.bf16.mxu0 0
        %3849 = vmatmul.mubr.bf16.gmra.mxu0 %v3701
        %v3850 = vpop.f32.mrf.mxu0
        %v3851 = vadd.f32 0.0, %v3850
        %v3852 = vpop.f32.mrf.mxu0
        %v3853 = vpop.f32.mrf.mxu0
        %v3854 = vadd.f32 0.0, %v3853
        %v3855 = vpop.f32.mrf.mxu0
        %3856 = vmatprep.mubr.bf16.mxu0 0
        %3857 = vmatmul.mubr.bf16.gmra.mxu0 %v3704
        %v3858 = vpop.f32.mrf.mxu0
        %v3859 = vadd.f32 0.0, %v3858
        %v3860 = vpop.f32.mrf.mxu0
        %v3861 = vpop.f32.mrf.mxu0
        %v3862 = vadd.f32 0.0, %v3861
        %v3863 = vpop.f32.mrf.mxu0
        %3864 = vmatprep.mubr.bf16.mxu0 0
        %3865 = vmatmul.mubr.bf16.gmra.mxu0 %v3707
        %v3866 = vpop.f32.mrf.mxu0
        %v3867 = vadd.f32 0.0, %v3866
        %v3868 = vpop.f32.mrf.mxu0
        %v3869 = vpop.f32.mrf.mxu0
        %v3870 = vadd.f32 0.0, %v3869
        %v3871 = vpop.f32.mrf.mxu0
        %3872 = vdwg.mxu0
        %v3873 = vadd.f32 %v3514, %v3747
        %v3874 = vadd.f32 %v3515, %v3750
        %v3875 = vadd.f32 %v3516, %v3755
        %v3876 = vadd.f32 %v3517, %v3758
        %v3877 = vadd.f32 %v3518, %v3763
        %v3878 = vadd.f32 %v3519, %v3766
        %v3879 = vadd.f32 %v3520, %v3771
        %v3880 = vadd.f32 %v3521, %v3774
        %v3881 = vadd.f32 %v3522, %v3779
        %v3882 = vadd.f32 %v3523, %v3782
        %v3883 = vadd.f32 %v3524, %v3787
        %v3884 = vadd.f32 %v3525, %v3790
        %v3885 = vadd.f32 %v3526, %v3795
        %v3886 = vadd.f32 %v3527, %v3798
        %v3887 = vadd.f32 %v3528, %v3803
        %v3888 = vadd.f32 %v3529, %v3806
        %v3889 = vadd.f32 %v3530, %v3811
        %v3890 = vadd.f32 %v3531, %v3814
        %v3891 = vadd.f32 %v3532, %v3819
        %v3892 = vadd.f32 %v3533, %v3822
        %v3893 = vadd.f32 %v3534, %v3827
        %v3894 = vadd.f32 %v3535, %v3830
        %v3895 = vadd.f32 %v3536, %v3835
        %v3896 = vadd.f32 %v3537, %v3838
        %v3897 = vadd.f32 %v3538, %v3843
        %v3898 = vadd.f32 %v3539, %v3846
        %v3899 = vadd.f32 %v3540, %v3851
        %v3900 = vadd.f32 %v3541, %v3854
        %v3901 = vadd.f32 %v3542, %v3859
        %v3902 = vadd.f32 %v3543, %v3862
        %v3903 = vadd.f32 %v3544, %v3867
        %v3904 = vadd.f32 %v3545, %v3870
        %3905 = vst.msk [vmem:[#allocation2] sm:$0xff] %vm1366, %v3873
        %3906 = vst.msk [vmem:[#allocation2 + $0x8] sm:$0xff] %vm1366, %v3874
        %3907 = vst.msk [vmem:[#allocation2 + $0x10] sm:$0xff] %vm1366, %v3875
        %3908 = vst.msk [vmem:[#allocation2 + $0x18] sm:$0xff] %vm1366, %v3876
        %3909 = vst.msk [vmem:[#allocation2 + $0x20] sm:$0xff] %vm1366, %v3877
        %3910 = vst.msk [vmem:[#allocation2 + $0x28] sm:$0xff] %vm1366, %v3878
        %3911 = vst.msk [vmem:[#allocation2 + $0x30] sm:$0xff] %vm1366, %v3879
        %3912 = vst.msk [vmem:[#allocation2 + $0x38] sm:$0xff] %vm1366, %v3880
        %3913 = vst.msk [vmem:[#allocation2 + $0x40] sm:$0xff] %vm1366, %v3881
        %3914 = vst.msk [vmem:[#allocation2 + $0x48] sm:$0xff] %vm1366, %v3882
        %3915 = vst.msk [vmem:[#allocation2 + $0x50] sm:$0xff] %vm1366, %v3883
        %3916 = vst.msk [vmem:[#allocation2 + $0x58] sm:$0xff] %vm1366, %v3884
        %3917 = vst.msk [vmem:[#allocation2 + $0x60] sm:$0xff] %vm1366, %v3885
        %3918 = vst.msk [vmem:[#allocation2 + $0x68] sm:$0xff] %vm1366, %v3886
        %3919 = vst.msk [vmem:[#allocation2 + $0x70] sm:$0xff] %vm1366, %v3887
        %3920 = vst.msk [vmem:[#allocation2 + $0x78] sm:$0xff] %vm1366, %v3888
        %3921 = vst.msk [vmem:[#allocation2 + $0x80] sm:$0xff] %vm1366, %v3889
        %3922 = vst.msk [vmem:[#allocation2 + $0x88] sm:$0xff] %vm1366, %v3890
        %3923 = vst.msk [vmem:[#allocation2 + $0x90] sm:$0xff] %vm1366, %v3891
        %3924 = vst.msk [vmem:[#allocation2 + $0x98] sm:$0xff] %vm1366, %v3892
        %3925 = vst.msk [vmem:[#allocation2 + $0xa0] sm:$0xff] %vm1366, %v3893
        %3926 = vst.msk [vmem:[#allocation2 + $0xa8] sm:$0xff] %vm1366, %v3894
        %3927 = vst.msk [vmem:[#allocation2 + $0xb0] sm:$0xff] %vm1366, %v3895
        %3928 = vst.msk [vmem:[#allocation2 + $0xb8] sm:$0xff] %vm1366, %v3896
        %3929 = vst.msk [vmem:[#allocation2 + $0xc0] sm:$0xff] %vm1366, %v3897
        %3930 = vst.msk [vmem:[#allocation2 + $0xc8] sm:$0xff] %vm1366, %v3898
        %3931 = vst.msk [vmem:[#allocation2 + $0xd0] sm:$0xff] %vm1366, %v3899
        %3932 = vst.msk [vmem:[#allocation2 + $0xd8] sm:$0xff] %vm1366, %v3900
        %3933 = vst.msk [vmem:[#allocation2 + $0xe0] sm:$0xff] %vm1366, %v3901
        %3934 = vst.msk [vmem:[#allocation2 + $0xe8] sm:$0xff] %vm1366, %v3902
        %3935 = vst.msk [vmem:[#allocation2 + $0xf0] sm:$0xff] %vm1366, %v3903
        %3936 = vst.msk [vmem:[#allocation2 + $0xf8] sm:$0xff] %vm1366, %v3904
        %v3937 = vld [vmem:[#allocation2] sm:$0xff]
        %v3938 = vld [vmem:[#allocation2 + $0x8] sm:$0xff]
        %v3939 = vld [vmem:[#allocation2 + $0x10] sm:$0xff]
        %v3940 = vld [vmem:[#allocation2 + $0x18] sm:$0xff]
        %v3941 = vld [vmem:[#allocation2 + $0x20] sm:$0xff]
        %v3942 = vld [vmem:[#allocation2 + $0x28] sm:$0xff]
        %v3943 = vld [vmem:[#allocation2 + $0x30] sm:$0xff]
        %v3944 = vld [vmem:[#allocation2 + $0x38] sm:$0xff]
        %v3945 = vld [vmem:[#allocation2 + $0x40] sm:$0xff]
        %v3946 = vld [vmem:[#allocation2 + $0x48] sm:$0xff]
        %v3947 = vld [vmem:[#allocation2 + $0x50] sm:$0xff]
        %v3948 = vld [vmem:[#allocation2 + $0x58] sm:$0xff]
        %v3949 = vld [vmem:[#allocation2 + $0x60] sm:$0xff]
        %v3950 = vld [vmem:[#allocation2 + $0x68] sm:$0xff]
        %v3951 = vld [vmem:[#allocation2 + $0x70] sm:$0xff]
        %v3952 = vld [vmem:[#allocation2 + $0x78] sm:$0xff]
        %v3953 = vld [vmem:[#allocation2 + $0x80] sm:$0xff]
        %v3954 = vld [vmem:[#allocation2 + $0x88] sm:$0xff]
        %v3955 = vld [vmem:[#allocation2 + $0x90] sm:$0xff]
        %v3956 = vld [vmem:[#allocation2 + $0x98] sm:$0xff]
        %v3957 = vld [vmem:[#allocation2 + $0xa0] sm:$0xff]
        %v3958 = vld [vmem:[#allocation2 + $0xa8] sm:$0xff]
        %v3959 = vld [vmem:[#allocation2 + $0xb0] sm:$0xff]
        %v3960 = vld [vmem:[#allocation2 + $0xb8] sm:$0xff]
        %v3961 = vld [vmem:[#allocation2 + $0xc0] sm:$0xff]
        %v3962 = vld [vmem:[#allocation2 + $0xc8] sm:$0xff]
        %v3963 = vld [vmem:[#allocation2 + $0xd0] sm:$0xff]
        %v3964 = vld [vmem:[#allocation2 + $0xd8] sm:$0xff]
        %v3965 = vld [vmem:[#allocation2 + $0xe0] sm:$0xff]
        %v3966 = vld [vmem:[#allocation2 + $0xe8] sm:$0xff]
        %v3967 = vld [vmem:[#allocation2 + $0xf0] sm:$0xff]
        %v3968 = vld [vmem:[#allocation2 + $0xf8] sm:$0xff]
        %s3969 = scalar_lea.vmem %s1337, 768 [#allocation3]
        %v3970 = vld [vmem:[%s3969] sm:$0xf]
        %v3971 = vld [vmem:[%s3969 + $0x4] sm:$0xf]
        %v3972 = vld [vmem:[%s3969 + $0x8] sm:$0xf]
        %v3973 = vld [vmem:[%s3969 + $0xc] sm:$0xf]
        %v3974 = vld [vmem:[%s3969 + $0x10] sm:$0xf]
        %v3975 = vld [vmem:[%s3969 + $0x14] sm:$0xf]
        %v3976 = vld [vmem:[%s3969 + $0x18] sm:$0xf]
        %v3977 = vld [vmem:[%s3969 + $0x1c] sm:$0xf]
        %v3978 = vld [vmem:[%s3969 + $0x20] sm:$0xf]
        %v3979 = vld [vmem:[%s3969 + $0x24] sm:$0xf]
        %v3980 = vld [vmem:[%s3969 + $0x28] sm:$0xf]
        %v3981 = vld [vmem:[%s3969 + $0x2c] sm:$0xf]
        %v3982 = vld [vmem:[%s3969 + $0x30] sm:$0xf]
        %v3983 = vld [vmem:[%s3969 + $0x34] sm:$0xf]
        %v3984 = vld [vmem:[%s3969 + $0x38] sm:$0xf]
        %v3985 = vld [vmem:[%s3969 + $0x3c] sm:$0xf]
        %v3986 = vld [vmem:[%s3969 + $0x40] sm:$0xf]
        %v3987 = vld [vmem:[%s3969 + $0x44] sm:$0xf]
        %v3988 = vld [vmem:[%s3969 + $0x48] sm:$0xf]
        %v3989 = vld [vmem:[%s3969 + $0x4c] sm:$0xf]
        %v3990 = vld [vmem:[%s3969 + $0x50] sm:$0xf]
        %v3991 = vld [vmem:[%s3969 + $0x54] sm:$0xf]
        %v3992 = vld [vmem:[%s3969 + $0x58] sm:$0xf]
        %v3993 = vld [vmem:[%s3969 + $0x5c] sm:$0xf]
        %v3994 = vld [vmem:[%s3969 + $0x60] sm:$0xf]
        %v3995 = vld [vmem:[%s3969 + $0x64] sm:$0xf]
        %v3996 = vld [vmem:[%s3969 + $0x68] sm:$0xf]
        %v3997 = vld [vmem:[%s3969 + $0x6c] sm:$0xf]
        %v3998 = vld [vmem:[%s3969 + $0x70] sm:$0xf]
        %v3999 = vld [vmem:[%s3969 + $0x74] sm:$0xf]
        %v4000 = vld [vmem:[%s3969 + $0x78] sm:$0xf]
        %v4001 = vld [vmem:[%s3969 + $0x7c] sm:$0xf]
        %s4002 = scalar_lea.vmem %s1, 12
        %v4003 = vld [vmem:[%s4002] sm:$0x3]
        %v4036 = vunpack.c.l.b16 %v3970
        %v4037 = vunpack.c.l.b16 %v3971
        %v4038 = vunpack.c.l.b16 %v3972
        %v4039 = vunpack.c.l.b16 %v3973
        %v4040 = vunpack.c.l.b16 %v3974
        %v4041 = vunpack.c.l.b16 %v3975
        %v4042 = vunpack.c.l.b16 %v3976
        %v4043 = vunpack.c.l.b16 %v3977
        %v4044 = vunpack.c.l.b16 %v3978
        %v4045 = vunpack.c.l.b16 %v3979
        %v4046 = vunpack.c.l.b16 %v3980
        %v4047 = vunpack.c.l.b16 %v3981
        %v4048 = vunpack.c.l.b16 %v3982
        %v4049 = vunpack.c.l.b16 %v3983
        %v4050 = vunpack.c.l.b16 %v3984
        %v4051 = vunpack.c.l.b16 %v3985
        %v4052 = vunpack.c.l.b16 %v3986
        %v4053 = vunpack.c.l.b16 %v3987
        %v4054 = vunpack.c.l.b16 %v3988
        %v4055 = vunpack.c.l.b16 %v3989
        %v4056 = vunpack.c.l.b16 %v3990
        %v4057 = vunpack.c.l.b16 %v3991
        %v4058 = vunpack.c.l.b16 %v3992
        %v4059 = vunpack.c.l.b16 %v3993
        %v4060 = vunpack.c.l.b16 %v3994
        %v4061 = vunpack.c.l.b16 %v3995
        %v4062 = vunpack.c.l.b16 %v3996
        %v4063 = vunpack.c.l.b16 %v3997
        %v4064 = vunpack.c.l.b16 %v3998
        %v4065 = vunpack.c.l.b16 %v3999
        %v4066 = vunpack.c.l.b16 %v4000
        %v4067 = vunpack.c.l.b16 %v4001
        %v4068 = vpack.c.b16 %v4037, %v4036
        %v4069 = vpack.c.b16 %v4039, %v4038
        %v4070 = vpack.c.b16 %v4041, %v4040
        %v4071 = vpack.c.b16 %v4043, %v4042
        %v4072 = vpack.c.b16 %v4045, %v4044
        %v4073 = vpack.c.b16 %v4047, %v4046
        %v4074 = vpack.c.b16 %v4049, %v4048
        %v4075 = vpack.c.b16 %v4051, %v4050
        %v4076 = vpack.c.b16 %v4053, %v4052
        %v4077 = vpack.c.b16 %v4055, %v4054
        %v4078 = vpack.c.b16 %v4057, %v4056
        %v4079 = vpack.c.b16 %v4059, %v4058
        %v4080 = vpack.c.b16 %v4061, %v4060
        %v4081 = vpack.c.b16 %v4063, %v4062
        %v4082 = vpack.c.b16 %v4065, %v4064
        %v4083 = vpack.c.b16 %v4067, %v4066
        %v4085 = vsel %vm1544, %v4068, 0
        %v4088 = vsel %vm1544, %v4069, 0
        %v4091 = vsel %vm1544, %v4070, 0
        %v4094 = vsel %vm1544, %v4071, 0
        %v4097 = vsel %vm1544, %v4072, 0
        %v4100 = vsel %vm1544, %v4073, 0
        %v4103 = vsel %vm1544, %v4074, 0
        %v4106 = vsel %vm1544, %v4075, 0
        %v4109 = vsel %vm1544, %v4076, 0
        %v4112 = vsel %vm1544, %v4077, 0
        %v4115 = vsel %vm1544, %v4078, 0
        %v4118 = vsel %vm1544, %v4079, 0
        %v4121 = vsel %vm1544, %v4080, 0
        %v4124 = vsel %vm1544, %v4081, 0
        %v4127 = vsel %vm1544, %v4082, 0
        %v4130 = vsel %vm1544, %v4083, 0
        %v4133 = vsel %vm1593, %v4003, 0
        %4135 = vmatprep.subr.bf16.mxu0 0
        %4136 = vmatpush1.bf16.msra.mxu0 0
        %4137 = vmatprep.subr.bf16.mxu0 0
        %4138 = vmatpush1.bf16.msra.mxu0 0
        %4139 = vmatprep.subr.bf16.mxu0 0
        %4140 = vmatpush1.bf16.msra.mxu0 0
        %4141 = vmatprep.subr.bf16.mxu0 0
        %4142 = vmatpush1.bf16.msra.mxu0 0
        %4143 = vmatprep.subr.bf16.mxu0 0
        %4144 = vmatpush1.bf16.msra.mxu0 0
        %4145 = vmatprep.subr.bf16.mxu0 0
        %4146 = vmatpush1.bf16.msra.mxu0 0
        %4147 = vmatprep.subr.bf16.mxu0 0
        %4148 = vmatpush1.bf16.msra.mxu0 0
        %4149 = vmatprep.subr.bf16.mxu0 0
        %4150 = vmatpush1.bf16.msra.mxu0 %v4133
        %4151 = vmatprep.subr.bf16.mxu0 0
        %4152 = vmatpush2.bf16.msra.mxu0 0
        %4153 = vmatprep.subr.bf16.mxu0 0
        %4154 = vmatpush2.bf16.msra.mxu0 0
        %4155 = vmatprep.subr.bf16.mxu0 0
        %4156 = vmatpush2.bf16.msra.mxu0 0
        %4157 = vmatprep.subr.bf16.mxu0 0
        %4158 = vmatpush2.bf16.msra.mxu0 0
        %4159 = vmatprep.subr.bf16.mxu0 0
        %4160 = vmatpush2.bf16.msra.mxu0 0
        %4161 = vmatprep.subr.bf16.mxu0 0
        %4162 = vmatpush2.bf16.msra.mxu0 0
        %4163 = vmatprep.subr.bf16.mxu0 0
        %4164 = vmatpush2.bf16.msra.mxu0 0
        %4165 = vmatprep.subr.bf16.mxu0 0
        %4166 = vmatpush2.bf16.msra.mxu0 0
        %4167 = vmatprep.mubr.bf16.mxu0 0
        %4168 = vmatmul.mubr.bf16.gmra.mxu0 %v4085
        %v4169 = vpop.f32.mrf.mxu0
        %v4170 = vadd.f32 0.0, %v4169
        %v4171 = vpop.f32.mrf.mxu0
        %v4172 = vpop.f32.mrf.mxu0
        %v4173 = vadd.f32 0.0, %v4172
        %v4174 = vpop.f32.mrf.mxu0
        %4175 = vmatprep.mubr.bf16.mxu0 0
        %4176 = vmatmul.mubr.bf16.gmra.mxu0 %v4088
        %v4177 = vpop.f32.mrf.mxu0
        %v4178 = vadd.f32 0.0, %v4177
        %v4179 = vpop.f32.mrf.mxu0
        %v4180 = vpop.f32.mrf.mxu0
        %v4181 = vadd.f32 0.0, %v4180
        %v4182 = vpop.f32.mrf.mxu0
        %4183 = vmatprep.mubr.bf16.mxu0 0
        %4184 = vmatmul.mubr.bf16.gmra.mxu0 %v4091
        %v4185 = vpop.f32.mrf.mxu0
        %v4186 = vadd.f32 0.0, %v4185
        %v4187 = vpop.f32.mrf.mxu0
        %v4188 = vpop.f32.mrf.mxu0
        %v4189 = vadd.f32 0.0, %v4188
        %v4190 = vpop.f32.mrf.mxu0
        %4191 = vmatprep.mubr.bf16.mxu0 0
        %4192 = vmatmul.mubr.bf16.gmra.mxu0 %v4094
        %v4193 = vpop.f32.mrf.mxu0
        %v4194 = vadd.f32 0.0, %v4193
        %v4195 = vpop.f32.mrf.mxu0
        %v4196 = vpop.f32.mrf.mxu0
        %v4197 = vadd.f32 0.0, %v4196
        %v4198 = vpop.f32.mrf.mxu0
        %4199 = vmatprep.mubr.bf16.mxu0 0
        %4200 = vmatmul.mubr.bf16.gmra.mxu0 %v4097
        %v4201 = vpop.f32.mrf.mxu0
        %v4202 = vadd.f32 0.0, %v4201
        %v4203 = vpop.f32.mrf.mxu0
        %v4204 = vpop.f32.mrf.mxu0
        %v4205 = vadd.f32 0.0, %v4204
        %v4206 = vpop.f32.mrf.mxu0
        %4207 = vmatprep.mubr.bf16.mxu0 0
        %4208 = vmatmul.mubr.bf16.gmra.mxu0 %v4100
        %v4209 = vpop.f32.mrf.mxu0
        %v4210 = vadd.f32 0.0, %v4209
        %v4211 = vpop.f32.mrf.mxu0
        %v4212 = vpop.f32.mrf.mxu0
        %v4213 = vadd.f32 0.0, %v4212
        %v4214 = vpop.f32.mrf.mxu0
        %4215 = vmatprep.mubr.bf16.mxu0 0
        %4216 = vmatmul.mubr.bf16.gmra.mxu0 %v4103
        %v4217 = vpop.f32.mrf.mxu0
        %v4218 = vadd.f32 0.0, %v4217
        %v4219 = vpop.f32.mrf.mxu0
        %v4220 = vpop.f32.mrf.mxu0
        %v4221 = vadd.f32 0.0, %v4220
        %v4222 = vpop.f32.mrf.mxu0
        %4223 = vmatprep.mubr.bf16.mxu0 0
        %4224 = vmatmul.mubr.bf16.gmra.mxu0 %v4106
        %v4225 = vpop.f32.mrf.mxu0
        %v4226 = vadd.f32 0.0, %v4225
        %v4227 = vpop.f32.mrf.mxu0
        %v4228 = vpop.f32.mrf.mxu0
        %v4229 = vadd.f32 0.0, %v4228
        %v4230 = vpop.f32.mrf.mxu0
        %4231 = vmatprep.mubr.bf16.mxu0 0
        %4232 = vmatmul.mubr.bf16.gmra.mxu0 %v4109
        %v4233 = vpop.f32.mrf.mxu0
        %v4234 = vadd.f32 0.0, %v4233
        %v4235 = vpop.f32.mrf.mxu0
        %v4236 = vpop.f32.mrf.mxu0
        %v4237 = vadd.f32 0.0, %v4236
        %v4238 = vpop.f32.mrf.mxu0
        %4239 = vmatprep.mubr.bf16.mxu0 0
        %4240 = vmatmul.mubr.bf16.gmra.mxu0 %v4112
        %v4241 = vpop.f32.mrf.mxu0
        %v4242 = vadd.f32 0.0, %v4241
        %v4243 = vpop.f32.mrf.mxu0
        %v4244 = vpop.f32.mrf.mxu0
        %v4245 = vadd.f32 0.0, %v4244
        %v4246 = vpop.f32.mrf.mxu0
        %4247 = vmatprep.mubr.bf16.mxu0 0
        %4248 = vmatmul.mubr.bf16.gmra.mxu0 %v4115
        %v4249 = vpop.f32.mrf.mxu0
        %v4250 = vadd.f32 0.0, %v4249
        %v4251 = vpop.f32.mrf.mxu0
        %v4252 = vpop.f32.mrf.mxu0
        %v4253 = vadd.f32 0.0, %v4252
        %v4254 = vpop.f32.mrf.mxu0
        %4255 = vmatprep.mubr.bf16.mxu0 0
        %4256 = vmatmul.mubr.bf16.gmra.mxu0 %v4118
        %v4257 = vpop.f32.mrf.mxu0
        %v4258 = vadd.f32 0.0, %v4257
        %v4259 = vpop.f32.mrf.mxu0
        %v4260 = vpop.f32.mrf.mxu0
        %v4261 = vadd.f32 0.0, %v4260
        %v4262 = vpop.f32.mrf.mxu0
        %4263 = vmatprep.mubr.bf16.mxu0 0
        %4264 = vmatmul.mubr.bf16.gmra.mxu0 %v4121
        %v4265 = vpop.f32.mrf.mxu0
        %v4266 = vadd.f32 0.0, %v4265
        %v4267 = vpop.f32.mrf.mxu0
        %v4268 = vpop.f32.mrf.mxu0
        %v4269 = vadd.f32 0.0, %v4268
        %v4270 = vpop.f32.mrf.mxu0
        %4271 = vmatprep.mubr.bf16.mxu0 0
        %4272 = vmatmul.mubr.bf16.gmra.mxu0 %v4124
        %v4273 = vpop.f32.mrf.mxu0
        %v4274 = vadd.f32 0.0, %v4273
        %v4275 = vpop.f32.mrf.mxu0
        %v4276 = vpop.f32.mrf.mxu0
        %v4277 = vadd.f32 0.0, %v4276
        %v4278 = vpop.f32.mrf.mxu0
        %4279 = vmatprep.mubr.bf16.mxu0 0
        %4280 = vmatmul.mubr.bf16.gmra.mxu0 %v4127
        %v4281 = vpop.f32.mrf.mxu0
        %v4282 = vadd.f32 0.0, %v4281
        %v4283 = vpop.f32.mrf.mxu0
        %v4284 = vpop.f32.mrf.mxu0
        %v4285 = vadd.f32 0.0, %v4284
        %v4286 = vpop.f32.mrf.mxu0
        %4287 = vmatprep.mubr.bf16.mxu0 0
        %4288 = vmatmul.mubr.bf16.gmra.mxu0 %v4130
        %v4289 = vpop.f32.mrf.mxu0
        %v4290 = vadd.f32 0.0, %v4289
        %v4291 = vpop.f32.mrf.mxu0
        %v4292 = vpop.f32.mrf.mxu0
        %v4293 = vadd.f32 0.0, %v4292
        %v4294 = vpop.f32.mrf.mxu0
        %4295 = vdwg.mxu0
        %v4296 = vadd.f32 %v3937, %v4170
        %v4297 = vadd.f32 %v3938, %v4173
        %v4298 = vadd.f32 %v3939, %v4178
        %v4299 = vadd.f32 %v3940, %v4181
        %v4300 = vadd.f32 %v3941, %v4186
        %v4301 = vadd.f32 %v3942, %v4189
        %v4302 = vadd.f32 %v3943, %v4194
        %v4303 = vadd.f32 %v3944, %v4197
        %v4304 = vadd.f32 %v3945, %v4202
        %v4305 = vadd.f32 %v3946, %v4205
        %v4306 = vadd.f32 %v3947, %v4210
        %v4307 = vadd.f32 %v3948, %v4213
        %v4308 = vadd.f32 %v3949, %v4218
        %v4309 = vadd.f32 %v3950, %v4221
        %v4310 = vadd.f32 %v3951, %v4226
        %v4311 = vadd.f32 %v3952, %v4229
        %v4312 = vadd.f32 %v3953, %v4234
        %v4313 = vadd.f32 %v3954, %v4237
        %v4314 = vadd.f32 %v3955, %v4242
        %v4315 = vadd.f32 %v3956, %v4245
        %v4316 = vadd.f32 %v3957, %v4250
        %v4317 = vadd.f32 %v3958, %v4253
        %v4318 = vadd.f32 %v3959, %v4258
        %v4319 = vadd.f32 %v3960, %v4261
        %v4320 = vadd.f32 %v3961, %v4266
        %v4321 = vadd.f32 %v3962, %v4269
        %v4322 = vadd.f32 %v3963, %v4274
        %v4323 = vadd.f32 %v3964, %v4277
        %v4324 = vadd.f32 %v3965, %v4282
        %v4325 = vadd.f32 %v3966, %v4285
        %v4326 = vadd.f32 %v3967, %v4290
        %v4327 = vadd.f32 %v3968, %v4293
        %4328 = vst.msk [vmem:[#allocation2] sm:$0xff] %vm1366, %v4296
        %4329 = vst.msk [vmem:[#allocation2 + $0x8] sm:$0xff] %vm1366, %v4297
        %4330 = vst.msk [vmem:[#allocation2 + $0x10] sm:$0xff] %vm1366, %v4298
        %4331 = vst.msk [vmem:[#allocation2 + $0x18] sm:$0xff] %vm1366, %v4299
        %4332 = vst.msk [vmem:[#allocation2 + $0x20] sm:$0xff] %vm1366, %v4300
        %4333 = vst.msk [vmem:[#allocation2 + $0x28] sm:$0xff] %vm1366, %v4301
        %4334 = vst.msk [vmem:[#allocation2 + $0x30] sm:$0xff] %vm1366, %v4302
        %4335 = vst.msk [vmem:[#allocation2 + $0x38] sm:$0xff] %vm1366, %v4303
        %4336 = vst.msk [vmem:[#allocation2 + $0x40] sm:$0xff] %vm1366, %v4304
        %4337 = vst.msk [vmem:[#allocation2 + $0x48] sm:$0xff] %vm1366, %v4305
        %4338 = vst.msk [vmem:[#allocation2 + $0x50] sm:$0xff] %vm1366, %v4306
        %4339 = vst.msk [vmem:[#allocation2 + $0x58] sm:$0xff] %vm1366, %v4307
        %4340 = vst.msk [vmem:[#allocation2 + $0x60] sm:$0xff] %vm1366, %v4308
        %4341 = vst.msk [vmem:[#allocation2 + $0x68] sm:$0xff] %vm1366, %v4309
        %4342 = vst.msk [vmem:[#allocation2 + $0x70] sm:$0xff] %vm1366, %v4310
        %4343 = vst.msk [vmem:[#allocation2 + $0x78] sm:$0xff] %vm1366, %v4311
        %4344 = vst.msk [vmem:[#allocation2 + $0x80] sm:$0xff] %vm1366, %v4312
        %4345 = vst.msk [vmem:[#allocation2 + $0x88] sm:$0xff] %vm1366, %v4313
        %4346 = vst.msk [vmem:[#allocation2 + $0x90] sm:$0xff] %vm1366, %v4314
        %4347 = vst.msk [vmem:[#allocation2 + $0x98] sm:$0xff] %vm1366, %v4315
        %4348 = vst.msk [vmem:[#allocation2 + $0xa0] sm:$0xff] %vm1366, %v4316
        %4349 = vst.msk [vmem:[#allocation2 + $0xa8] sm:$0xff] %vm1366, %v4317
        %4350 = vst.msk [vmem:[#allocation2 + $0xb0] sm:$0xff] %vm1366, %v4318
        %4351 = vst.msk [vmem:[#allocation2 + $0xb8] sm:$0xff] %vm1366, %v4319
        %4352 = vst.msk [vmem:[#allocation2 + $0xc0] sm:$0xff] %vm1366, %v4320
        %4353 = vst.msk [vmem:[#allocation2 + $0xc8] sm:$0xff] %vm1366, %v4321
        %4354 = vst.msk [vmem:[#allocation2 + $0xd0] sm:$0xff] %vm1366, %v4322
        %4355 = vst.msk [vmem:[#allocation2 + $0xd8] sm:$0xff] %vm1366, %v4323
        %4356 = vst.msk [vmem:[#allocation2 + $0xe0] sm:$0xff] %vm1366, %v4324
        %4357 = vst.msk [vmem:[#allocation2 + $0xe8] sm:$0xff] %vm1366, %v4325
        %4358 = vst.msk [vmem:[#allocation2 + $0xf0] sm:$0xff] %vm1366, %v4326
        %4359 = vst.msk [vmem:[#allocation2 + $0xf8] sm:$0xff] %vm1366, %v4327
        %v4360 = vld [vmem:[#allocation2] sm:$0xff]
        %v4361 = vld [vmem:[#allocation2 + $0x8] sm:$0xff]
        %v4362 = vld [vmem:[#allocation2 + $0x10] sm:$0xff]
        %v4363 = vld [vmem:[#allocation2 + $0x18] sm:$0xff]
        %v4364 = vld [vmem:[#allocation2 + $0x20] sm:$0xff]
        %v4365 = vld [vmem:[#allocation2 + $0x28] sm:$0xff]
        %v4366 = vld [vmem:[#allocation2 + $0x30] sm:$0xff]
        %v4367 = vld [vmem:[#allocation2 + $0x38] sm:$0xff]
        %v4368 = vld [vmem:[#allocation2 + $0x40] sm:$0xff]
        %v4369 = vld [vmem:[#allocation2 + $0x48] sm:$0xff]
        %v4370 = vld [vmem:[#allocation2 + $0x50] sm:$0xff]
        %v4371 = vld [vmem:[#allocation2 + $0x58] sm:$0xff]
        %v4372 = vld [vmem:[#allocation2 + $0x60] sm:$0xff]
        %v4373 = vld [vmem:[#allocation2 + $0x68] sm:$0xff]
        %v4374 = vld [vmem:[#allocation2 + $0x70] sm:$0xff]
        %v4375 = vld [vmem:[#allocation2 + $0x78] sm:$0xff]
        %v4376 = vld [vmem:[#allocation2 + $0x80] sm:$0xff]
        %v4377 = vld [vmem:[#allocation2 + $0x88] sm:$0xff]
        %v4378 = vld [vmem:[#allocation2 + $0x90] sm:$0xff]
        %v4379 = vld [vmem:[#allocation2 + $0x98] sm:$0xff]
        %v4380 = vld [vmem:[#allocation2 + $0xa0] sm:$0xff]
        %v4381 = vld [vmem:[#allocation2 + $0xa8] sm:$0xff]
        %v4382 = vld [vmem:[#allocation2 + $0xb0] sm:$0xff]
        %v4383 = vld [vmem:[#allocation2 + $0xb8] sm:$0xff]
        %v4384 = vld [vmem:[#allocation2 + $0xc0] sm:$0xff]
        %v4385 = vld [vmem:[#allocation2 + $0xc8] sm:$0xff]
        %v4386 = vld [vmem:[#allocation2 + $0xd0] sm:$0xff]
        %v4387 = vld [vmem:[#allocation2 + $0xd8] sm:$0xff]
        %v4388 = vld [vmem:[#allocation2 + $0xe0] sm:$0xff]
        %v4389 = vld [vmem:[#allocation2 + $0xe8] sm:$0xff]
        %v4390 = vld [vmem:[#allocation2 + $0xf0] sm:$0xff]
        %v4391 = vld [vmem:[#allocation2 + $0xf8] sm:$0xff]
        %s4392 = scalar_lea.vmem %s1337, 896 [#allocation3]
        %v4393 = vld [vmem:[%s4392] sm:$0xf]
        %v4394 = vld [vmem:[%s4392 + $0x4] sm:$0xf]
        %v4395 = vld [vmem:[%s4392 + $0x8] sm:$0xf]
        %v4396 = vld [vmem:[%s4392 + $0xc] sm:$0xf]
        %v4397 = vld [vmem:[%s4392 + $0x10] sm:$0xf]
        %v4398 = vld [vmem:[%s4392 + $0x14] sm:$0xf]
        %v4399 = vld [vmem:[%s4392 + $0x18] sm:$0xf]
        %v4400 = vld [vmem:[%s4392 + $0x1c] sm:$0xf]
        %v4401 = vld [vmem:[%s4392 + $0x20] sm:$0xf]
        %v4402 = vld [vmem:[%s4392 + $0x24] sm:$0xf]
        %v4403 = vld [vmem:[%s4392 + $0x28] sm:$0xf]
        %v4404 = vld [vmem:[%s4392 + $0x2c] sm:$0xf]
        %v4405 = vld [vmem:[%s4392 + $0x30] sm:$0xf]
        %v4406 = vld [vmem:[%s4392 + $0x34] sm:$0xf]
        %v4407 = vld [vmem:[%s4392 + $0x38] sm:$0xf]
        %v4408 = vld [vmem:[%s4392 + $0x3c] sm:$0xf]
        %v4409 = vld [vmem:[%s4392 + $0x40] sm:$0xf]
        %v4410 = vld [vmem:[%s4392 + $0x44] sm:$0xf]
        %v4411 = vld [vmem:[%s4392 + $0x48] sm:$0xf]
        %v4412 = vld [vmem:[%s4392 + $0x4c] sm:$0xf]
        %v4413 = vld [vmem:[%s4392 + $0x50] sm:$0xf]
        %v4414 = vld [vmem:[%s4392 + $0x54] sm:$0xf]
        %v4415 = vld [vmem:[%s4392 + $0x58] sm:$0xf]
        %v4416 = vld [vmem:[%s4392 + $0x5c] sm:$0xf]
        %v4417 = vld [vmem:[%s4392 + $0x60] sm:$0xf]
        %v4418 = vld [vmem:[%s4392 + $0x64] sm:$0xf]
        %v4419 = vld [vmem:[%s4392 + $0x68] sm:$0xf]
        %v4420 = vld [vmem:[%s4392 + $0x6c] sm:$0xf]
        %v4421 = vld [vmem:[%s4392 + $0x70] sm:$0xf]
        %v4422 = vld [vmem:[%s4392 + $0x74] sm:$0xf]
        %v4423 = vld [vmem:[%s4392 + $0x78] sm:$0xf]
        %v4424 = vld [vmem:[%s4392 + $0x7c] sm:$0xf]
        %s4425 = scalar_lea.vmem %s1, 14
        %v4426 = vld [vmem:[%s4425] sm:$0x3]
        %v4459 = vunpack.c.l.b16 %v4393
        %v4460 = vunpack.c.l.b16 %v4394
        %v4461 = vunpack.c.l.b16 %v4395
        %v4462 = vunpack.c.l.b16 %v4396
        %v4463 = vunpack.c.l.b16 %v4397
        %v4464 = vunpack.c.l.b16 %v4398
        %v4465 = vunpack.c.l.b16 %v4399
        %v4466 = vunpack.c.l.b16 %v4400
        %v4467 = vunpack.c.l.b16 %v4401
        %v4468 = vunpack.c.l.b16 %v4402
        %v4469 = vunpack.c.l.b16 %v4403
        %v4470 = vunpack.c.l.b16 %v4404
        %v4471 = vunpack.c.l.b16 %v4405
        %v4472 = vunpack.c.l.b16 %v4406
        %v4473 = vunpack.c.l.b16 %v4407
        %v4474 = vunpack.c.l.b16 %v4408
        %v4475 = vunpack.c.l.b16 %v4409
        %v4476 = vunpack.c.l.b16 %v4410
        %v4477 = vunpack.c.l.b16 %v4411
        %v4478 = vunpack.c.l.b16 %v4412
        %v4479 = vunpack.c.l.b16 %v4413
        %v4480 = vunpack.c.l.b16 %v4414
        %v4481 = vunpack.c.l.b16 %v4415
        %v4482 = vunpack.c.l.b16 %v4416
        %v4483 = vunpack.c.l.b16 %v4417
        %v4484 = vunpack.c.l.b16 %v4418
        %v4485 = vunpack.c.l.b16 %v4419
        %v4486 = vunpack.c.l.b16 %v4420
        %v4487 = vunpack.c.l.b16 %v4421
        %v4488 = vunpack.c.l.b16 %v4422
        %v4489 = vunpack.c.l.b16 %v4423
        %v4490 = vunpack.c.l.b16 %v4424
        %v4491 = vpack.c.b16 %v4460, %v4459
        %v4492 = vpack.c.b16 %v4462, %v4461
        %v4493 = vpack.c.b16 %v4464, %v4463
        %v4494 = vpack.c.b16 %v4466, %v4465
        %v4495 = vpack.c.b16 %v4468, %v4467
        %v4496 = vpack.c.b16 %v4470, %v4469
        %v4497 = vpack.c.b16 %v4472, %v4471
        %v4498 = vpack.c.b16 %v4474, %v4473
        %v4499 = vpack.c.b16 %v4476, %v4475
        %v4500 = vpack.c.b16 %v4478, %v4477
        %v4501 = vpack.c.b16 %v4480, %v4479
        %v4502 = vpack.c.b16 %v4482, %v4481
        %v4503 = vpack.c.b16 %v4484, %v4483
        %v4504 = vpack.c.b16 %v4486, %v4485
        %v4505 = vpack.c.b16 %v4488, %v4487
        %v4506 = vpack.c.b16 %v4490, %v4489
        %v4508 = vsel %vm1544, %v4491, 0
        %v4511 = vsel %vm1544, %v4492, 0
        %v4514 = vsel %vm1544, %v4493, 0
        %v4517 = vsel %vm1544, %v4494, 0
        %v4520 = vsel %vm1544, %v4495, 0
        %v4523 = vsel %vm1544, %v4496, 0
        %v4526 = vsel %vm1544, %v4497, 0
        %v4529 = vsel %vm1544, %v4498, 0
        %v4532 = vsel %vm1544, %v4499, 0
        %v4535 = vsel %vm1544, %v4500, 0
        %v4538 = vsel %vm1544, %v4501, 0
        %v4541 = vsel %vm1544, %v4502, 0
        %v4544 = vsel %vm1544, %v4503, 0
        %v4547 = vsel %vm1544, %v4504, 0
        %v4550 = vsel %vm1544, %v4505, 0
        %v4553 = vsel %vm1544, %v4506, 0
        %v4556 = vsel %vm1593, %v4426, 0
        %4558 = vmatprep.subr.bf16.mxu0 0
        %4559 = vmatpush1.bf16.msra.mxu0 0
        %4560 = vmatprep.subr.bf16.mxu0 0
        %4561 = vmatpush1.bf16.msra.mxu0 0
        %4562 = vmatprep.subr.bf16.mxu0 0
        %4563 = vmatpush1.bf16.msra.mxu0 0
        %4564 = vmatprep.subr.bf16.mxu0 0
        %4565 = vmatpush1.bf16.msra.mxu0 0
        %4566 = vmatprep.subr.bf16.mxu0 0
        %4567 = vmatpush1.bf16.msra.mxu0 0
        %4568 = vmatprep.subr.bf16.mxu0 0
        %4569 = vmatpush1.bf16.msra.mxu0 0
        %4570 = vmatprep.subr.bf16.mxu0 0
        %4571 = vmatpush1.bf16.msra.mxu0 0
        %4572 = vmatprep.subr.bf16.mxu0 0
        %4573 = vmatpush1.bf16.msra.mxu0 %v4556
        %4574 = vmatprep.subr.bf16.mxu0 0
        %4575 = vmatpush2.bf16.msra.mxu0 0
        %4576 = vmatprep.subr.bf16.mxu0 0
        %4577 = vmatpush2.bf16.msra.mxu0 0
        %4578 = vmatprep.subr.bf16.mxu0 0
        %4579 = vmatpush2.bf16.msra.mxu0 0
        %4580 = vmatprep.subr.bf16.mxu0 0
        %4581 = vmatpush2.bf16.msra.mxu0 0
        %4582 = vmatprep.subr.bf16.mxu0 0
        %4583 = vmatpush2.bf16.msra.mxu0 0
        %4584 = vmatprep.subr.bf16.mxu0 0
        %4585 = vmatpush2.bf16.msra.mxu0 0
        %4586 = vmatprep.subr.bf16.mxu0 0
        %4587 = vmatpush2.bf16.msra.mxu0 0
        %4588 = vmatprep.subr.bf16.mxu0 0
        %4589 = vmatpush2.bf16.msra.mxu0 0
        %4590 = vmatprep.mubr.bf16.mxu0 0
        %4591 = vmatmul.mubr.bf16.gmra.mxu0 %v4508
        %v4592 = vpop.f32.mrf.mxu0
        %v4593 = vadd.f32 0.0, %v4592
        %v4594 = vpop.f32.mrf.mxu0
        %v4595 = vpop.f32.mrf.mxu0
        %v4596 = vadd.f32 0.0, %v4595
        %v4597 = vpop.f32.mrf.mxu0
        %4598 = vmatprep.mubr.bf16.mxu0 0
        %4599 = vmatmul.mubr.bf16.gmra.mxu0 %v4511
        %v4600 = vpop.f32.mrf.mxu0
        %v4601 = vadd.f32 0.0, %v4600
        %v4602 = vpop.f32.mrf.mxu0
        %v4603 = vpop.f32.mrf.mxu0
        %v4604 = vadd.f32 0.0, %v4603
        %v4605 = vpop.f32.mrf.mxu0
        %4606 = vmatprep.mubr.bf16.mxu0 0
        %4607 = vmatmul.mubr.bf16.gmra.mxu0 %v4514
        %v4608 = vpop.f32.mrf.mxu0
        %v4609 = vadd.f32 0.0, %v4608
        %v4610 = vpop.f32.mrf.mxu0
        %v4611 = vpop.f32.mrf.mxu0
        %v4612 = vadd.f32 0.0, %v4611
        %v4613 = vpop.f32.mrf.mxu0
        %4614 = vmatprep.mubr.bf16.mxu0 0
        %4615 = vmatmul.mubr.bf16.gmra.mxu0 %v4517
        %v4616 = vpop.f32.mrf.mxu0
        %v4617 = vadd.f32 0.0, %v4616
        %v4618 = vpop.f32.mrf.mxu0
        %v4619 = vpop.f32.mrf.mxu0
        %v4620 = vadd.f32 0.0, %v4619
        %v4621 = vpop.f32.mrf.mxu0
        %4622 = vmatprep.mubr.bf16.mxu0 0
        %4623 = vmatmul.mubr.bf16.gmra.mxu0 %v4520
        %v4624 = vpop.f32.mrf.mxu0
        %v4625 = vadd.f32 0.0, %v4624
        %v4626 = vpop.f32.mrf.mxu0
        %v4627 = vpop.f32.mrf.mxu0
        %v4628 = vadd.f32 0.0, %v4627
        %v4629 = vpop.f32.mrf.mxu0
        %4630 = vmatprep.mubr.bf16.mxu0 0
        %4631 = vmatmul.mubr.bf16.gmra.mxu0 %v4523
        %v4632 = vpop.f32.mrf.mxu0
        %v4633 = vadd.f32 0.0, %v4632
        %v4634 = vpop.f32.mrf.mxu0
        %v4635 = vpop.f32.mrf.mxu0
        %v4636 = vadd.f32 0.0, %v4635
        %v4637 = vpop.f32.mrf.mxu0
        %4638 = vmatprep.mubr.bf16.mxu0 0
        %4639 = vmatmul.mubr.bf16.gmra.mxu0 %v4526
        %v4640 = vpop.f32.mrf.mxu0
        %v4641 = vadd.f32 0.0, %v4640
        %v4642 = vpop.f32.mrf.mxu0
        %v4643 = vpop.f32.mrf.mxu0
        %v4644 = vadd.f32 0.0, %v4643
        %v4645 = vpop.f32.mrf.mxu0
        %4646 = vmatprep.mubr.bf16.mxu0 0
        %4647 = vmatmul.mubr.bf16.gmra.mxu0 %v4529
        %v4648 = vpop.f32.mrf.mxu0
        %v4649 = vadd.f32 0.0, %v4648
        %v4650 = vpop.f32.mrf.mxu0
        %v4651 = vpop.f32.mrf.mxu0
        %v4652 = vadd.f32 0.0, %v4651
        %v4653 = vpop.f32.mrf.mxu0
        %4654 = vmatprep.mubr.bf16.mxu0 0
        %4655 = vmatmul.mubr.bf16.gmra.mxu0 %v4532
        %v4656 = vpop.f32.mrf.mxu0
        %v4657 = vadd.f32 0.0, %v4656
        %v4658 = vpop.f32.mrf.mxu0
        %v4659 = vpop.f32.mrf.mxu0
        %v4660 = vadd.f32 0.0, %v4659
        %v4661 = vpop.f32.mrf.mxu0
        %4662 = vmatprep.mubr.bf16.mxu0 0
        %4663 = vmatmul.mubr.bf16.gmra.mxu0 %v4535
        %v4664 = vpop.f32.mrf.mxu0
        %v4665 = vadd.f32 0.0, %v4664
        %v4666 = vpop.f32.mrf.mxu0
        %v4667 = vpop.f32.mrf.mxu0
        %v4668 = vadd.f32 0.0, %v4667
        %v4669 = vpop.f32.mrf.mxu0
        %4670 = vmatprep.mubr.bf16.mxu0 0
        %4671 = vmatmul.mubr.bf16.gmra.mxu0 %v4538
        %v4672 = vpop.f32.mrf.mxu0
        %v4673 = vadd.f32 0.0, %v4672
        %v4674 = vpop.f32.mrf.mxu0
        %v4675 = vpop.f32.mrf.mxu0
        %v4676 = vadd.f32 0.0, %v4675
        %v4677 = vpop.f32.mrf.mxu0
        %4678 = vmatprep.mubr.bf16.mxu0 0
        %4679 = vmatmul.mubr.bf16.gmra.mxu0 %v4541
        %v4680 = vpop.f32.mrf.mxu0
        %v4681 = vadd.f32 0.0, %v4680
        %v4682 = vpop.f32.mrf.mxu0
        %v4683 = vpop.f32.mrf.mxu0
        %v4684 = vadd.f32 0.0, %v4683
        %v4685 = vpop.f32.mrf.mxu0
        %4686 = vmatprep.mubr.bf16.mxu0 0
        %4687 = vmatmul.mubr.bf16.gmra.mxu0 %v4544
        %v4688 = vpop.f32.mrf.mxu0
        %v4689 = vadd.f32 0.0, %v4688
        %v4690 = vpop.f32.mrf.mxu0
        %v4691 = vpop.f32.mrf.mxu0
        %v4692 = vadd.f32 0.0, %v4691
        %v4693 = vpop.f32.mrf.mxu0
        %4694 = vmatprep.mubr.bf16.mxu0 0
        %4695 = vmatmul.mubr.bf16.gmra.mxu0 %v4547
        %v4696 = vpop.f32.mrf.mxu0
        %v4697 = vadd.f32 0.0, %v4696
        %v4698 = vpop.f32.mrf.mxu0
        %v4699 = vpop.f32.mrf.mxu0
        %v4700 = vadd.f32 0.0, %v4699
        %v4701 = vpop.f32.mrf.mxu0
        %4702 = vmatprep.mubr.bf16.mxu0 0
        %4703 = vmatmul.mubr.bf16.gmra.mxu0 %v4550
        %v4704 = vpop.f32.mrf.mxu0
        %v4705 = vadd.f32 0.0, %v4704
        %v4706 = vpop.f32.mrf.mxu0
        %v4707 = vpop.f32.mrf.mxu0
        %v4708 = vadd.f32 0.0, %v4707
        %v4709 = vpop.f32.mrf.mxu0
        %4710 = vmatprep.mubr.bf16.mxu0 0
        %4711 = vmatmul.mubr.bf16.gmra.mxu0 %v4553
        %v4712 = vpop.f32.mrf.mxu0
        %v4713 = vadd.f32 0.0, %v4712
        %v4714 = vpop.f32.mrf.mxu0
        %v4715 = vpop.f32.mrf.mxu0
        %v4716 = vadd.f32 0.0, %v4715
        %v4717 = vpop.f32.mrf.mxu0
        %4718 = vdwg.mxu0
        %v4719 = vadd.f32 %v4360, %v4593
        %v4720 = vadd.f32 %v4361, %v4596
        %v4721 = vadd.f32 %v4362, %v4601
        %v4722 = vadd.f32 %v4363, %v4604
        %v4723 = vadd.f32 %v4364, %v4609
        %v4724 = vadd.f32 %v4365, %v4612
        %v4725 = vadd.f32 %v4366, %v4617
        %v4726 = vadd.f32 %v4367, %v4620
        %v4727 = vadd.f32 %v4368, %v4625
        %v4728 = vadd.f32 %v4369, %v4628
        %v4729 = vadd.f32 %v4370, %v4633
        %v4730 = vadd.f32 %v4371, %v4636
        %v4731 = vadd.f32 %v4372, %v4641
        %v4732 = vadd.f32 %v4373, %v4644
        %v4733 = vadd.f32 %v4374, %v4649
        %v4734 = vadd.f32 %v4375, %v4652
        %v4735 = vadd.f32 %v4376, %v4657
        %v4736 = vadd.f32 %v4377, %v4660
        %v4737 = vadd.f32 %v4378, %v4665
        %v4738 = vadd.f32 %v4379, %v4668
        %v4739 = vadd.f32 %v4380, %v4673
        %v4740 = vadd.f32 %v4381, %v4676
        %v4741 = vadd.f32 %v4382, %v4681
        %v4742 = vadd.f32 %v4383, %v4684
        %v4743 = vadd.f32 %v4384, %v4689
        %v4744 = vadd.f32 %v4385, %v4692
        %v4745 = vadd.f32 %v4386, %v4697
        %v4746 = vadd.f32 %v4387, %v4700
        %v4747 = vadd.f32 %v4388, %v4705
        %v4748 = vadd.f32 %v4389, %v4708
        %v4749 = vadd.f32 %v4390, %v4713
        %v4750 = vadd.f32 %v4391, %v4716
        %4751 = vst.msk [vmem:[#allocation2] sm:$0xff] %vm1366, %v4719
        %4752 = vst.msk [vmem:[#allocation2 + $0x8] sm:$0xff] %vm1366, %v4720
        %4753 = vst.msk [vmem:[#allocation2 + $0x10] sm:$0xff] %vm1366, %v4721
        %4754 = vst.msk [vmem:[#allocation2 + $0x18] sm:$0xff] %vm1366, %v4722
        %4755 = vst.msk [vmem:[#allocation2 + $0x20] sm:$0xff] %vm1366, %v4723
        %4756 = vst.msk [vmem:[#allocation2 + $0x28] sm:$0xff] %vm1366, %v4724
        %4757 = vst.msk [vmem:[#allocation2 + $0x30] sm:$0xff] %vm1366, %v4725
        %4758 = vst.msk [vmem:[#allocation2 + $0x38] sm:$0xff] %vm1366, %v4726
        %4759 = vst.msk [vmem:[#allocation2 + $0x40] sm:$0xff] %vm1366, %v4727
        %4760 = vst.msk [vmem:[#allocation2 + $0x48] sm:$0xff] %vm1366, %v4728
        %4761 = vst.msk [vmem:[#allocation2 + $0x50] sm:$0xff] %vm1366, %v4729
        %4762 = vst.msk [vmem:[#allocation2 + $0x58] sm:$0xff] %vm1366, %v4730
        %4763 = vst.msk [vmem:[#allocation2 + $0x60] sm:$0xff] %vm1366, %v4731
        %4764 = vst.msk [vmem:[#allocation2 + $0x68] sm:$0xff] %vm1366, %v4732
        %4765 = vst.msk [vmem:[#allocation2 + $0x70] sm:$0xff] %vm1366, %v4733
        %4766 = vst.msk [vmem:[#allocation2 + $0x78] sm:$0xff] %vm1366, %v4734
        %4767 = vst.msk [vmem:[#allocation2 + $0x80] sm:$0xff] %vm1366, %v4735
        %4768 = vst.msk [vmem:[#allocation2 + $0x88] sm:$0xff] %vm1366, %v4736
        %4769 = vst.msk [vmem:[#allocation2 + $0x90] sm:$0xff] %vm1366, %v4737
        %4770 = vst.msk [vmem:[#allocation2 + $0x98] sm:$0xff] %vm1366, %v4738
        %4771 = vst.msk [vmem:[#allocation2 + $0xa0] sm:$0xff] %vm1366, %v4739
        %4772 = vst.msk [vmem:[#allocation2 + $0xa8] sm:$0xff] %vm1366, %v4740
        %4773 = vst.msk [vmem:[#allocation2 + $0xb0] sm:$0xff] %vm1366, %v4741
        %4774 = vst.msk [vmem:[#allocation2 + $0xb8] sm:$0xff] %vm1366, %v4742
        %4775 = vst.msk [vmem:[#allocation2 + $0xc0] sm:$0xff] %vm1366, %v4743
        %4776 = vst.msk [vmem:[#allocation2 + $0xc8] sm:$0xff] %vm1366, %v4744
        %4777 = vst.msk [vmem:[#allocation2 + $0xd0] sm:$0xff] %vm1366, %v4745
        %4778 = vst.msk [vmem:[#allocation2 + $0xd8] sm:$0xff] %vm1366, %v4746
        %4779 = vst.msk [vmem:[#allocation2 + $0xe0] sm:$0xff] %vm1366, %v4747
        %4780 = vst.msk [vmem:[#allocation2 + $0xe8] sm:$0xff] %vm1366, %v4748
        %4781 = vst.msk [vmem:[#allocation2 + $0xf0] sm:$0xff] %vm1366, %v4749
        %4782 = vst.msk [vmem:[#allocation2 + $0xf8] sm:$0xff] %vm1366, %v4750
        %v4783 = vld [vmem:[#allocation2] sm:$0xff]
        %v4784 = vld [vmem:[#allocation2 + $0x8] sm:$0xff]
        %v4785 = vld [vmem:[#allocation2 + $0x10] sm:$0xff]
        %v4786 = vld [vmem:[#allocation2 + $0x18] sm:$0xff]
        %v4787 = vld [vmem:[#allocation2 + $0x20] sm:$0xff]
        %v4788 = vld [vmem:[#allocation2 + $0x28] sm:$0xff]
        %v4789 = vld [vmem:[#allocation2 + $0x30] sm:$0xff]
        %v4790 = vld [vmem:[#allocation2 + $0x38] sm:$0xff]
        %v4791 = vld [vmem:[#allocation2 + $0x40] sm:$0xff]
        %v4792 = vld [vmem:[#allocation2 + $0x48] sm:$0xff]
        %v4793 = vld [vmem:[#allocation2 + $0x50] sm:$0xff]
        %v4794 = vld [vmem:[#allocation2 + $0x58] sm:$0xff]
        %v4795 = vld [vmem:[#allocation2 + $0x60] sm:$0xff]
        %v4796 = vld [vmem:[#allocation2 + $0x68] sm:$0xff]
        %v4797 = vld [vmem:[#allocation2 + $0x70] sm:$0xff]
        %v4798 = vld [vmem:[#allocation2 + $0x78] sm:$0xff]
        %v4799 = vld [vmem:[#allocation2 + $0x80] sm:$0xff]
        %v4800 = vld [vmem:[#allocation2 + $0x88] sm:$0xff]
        %v4801 = vld [vmem:[#allocation2 + $0x90] sm:$0xff]
        %v4802 = vld [vmem:[#allocation2 + $0x98] sm:$0xff]
        %v4803 = vld [vmem:[#allocation2 + $0xa0] sm:$0xff]
        %v4804 = vld [vmem:[#allocation2 + $0xa8] sm:$0xff]
        %v4805 = vld [vmem:[#allocation2 + $0xb0] sm:$0xff]
        %v4806 = vld [vmem:[#allocation2 + $0xb8] sm:$0xff]
        %v4807 = vld [vmem:[#allocation2 + $0xc0] sm:$0xff]
        %v4808 = vld [vmem:[#allocation2 + $0xc8] sm:$0xff]
        %v4809 = vld [vmem:[#allocation2 + $0xd0] sm:$0xff]
        %v4810 = vld [vmem:[#allocation2 + $0xd8] sm:$0xff]
        %v4811 = vld [vmem:[#allocation2 + $0xe0] sm:$0xff]
        %v4812 = vld [vmem:[#allocation2 + $0xe8] sm:$0xff]
        %v4813 = vld [vmem:[#allocation2 + $0xf0] sm:$0xff]
        %v4814 = vld [vmem:[#allocation2 + $0xf8] sm:$0xff]
        %s4815 = scalar_lea.vmem %s1337, 1024 [#allocation3]
        %v4816 = vld [vmem:[%s4815] sm:$0xf]
        %v4817 = vld [vmem:[%s4815 + $0x4] sm:$0xf]
        %v4818 = vld [vmem:[%s4815 + $0x8] sm:$0xf]
        %v4819 = vld [vmem:[%s4815 + $0xc] sm:$0xf]
        %v4820 = vld [vmem:[%s4815 + $0x10] sm:$0xf]
        %v4821 = vld [vmem:[%s4815 + $0x14] sm:$0xf]
        %v4822 = vld [vmem:[%s4815 + $0x18] sm:$0xf]
        %v4823 = vld [vmem:[%s4815 + $0x1c] sm:$0xf]
        %v4824 = vld [vmem:[%s4815 + $0x20] sm:$0xf]
        %v4825 = vld [vmem:[%s4815 + $0x24] sm:$0xf]
        %v4826 = vld [vmem:[%s4815 + $0x28] sm:$0xf]
        %v4827 = vld [vmem:[%s4815 + $0x2c] sm:$0xf]
        %v4828 = vld [vmem:[%s4815 + $0x30] sm:$0xf]
        %v4829 = vld [vmem:[%s4815 + $0x34] sm:$0xf]
        %v4830 = vld [vmem:[%s4815 + $0x38] sm:$0xf]
        %v4831 = vld [vmem:[%s4815 + $0x3c] sm:$0xf]
        %v4832 = vld [vmem:[%s4815 + $0x40] sm:$0xf]
        %v4833 = vld [vmem:[%s4815 + $0x44] sm:$0xf]
        %v4834 = vld [vmem:[%s4815 + $0x48] sm:$0xf]
        %v4835 = vld [vmem:[%s4815 + $0x4c] sm:$0xf]
        %v4836 = vld [vmem:[%s4815 + $0x50] sm:$0xf]
        %v4837 = vld [vmem:[%s4815 + $0x54] sm:$0xf]
        %v4838 = vld [vmem:[%s4815 + $0x58] sm:$0xf]
        %v4839 = vld [vmem:[%s4815 + $0x5c] sm:$0xf]
        %v4840 = vld [vmem:[%s4815 + $0x60] sm:$0xf]
        %v4841 = vld [vmem:[%s4815 + $0x64] sm:$0xf]
        %v4842 = vld [vmem:[%s4815 + $0x68] sm:$0xf]
        %v4843 = vld [vmem:[%s4815 + $0x6c] sm:$0xf]
        %v4844 = vld [vmem:[%s4815 + $0x70] sm:$0xf]
        %v4845 = vld [vmem:[%s4815 + $0x74] sm:$0xf]
        %v4846 = vld [vmem:[%s4815 + $0x78] sm:$0xf]
        %v4847 = vld [vmem:[%s4815 + $0x7c] sm:$0xf]
        %s4848 = scalar_lea.vmem %s1, 16
        %v4849 = vld [vmem:[%s4848] sm:$0x3]
        %v4882 = vunpack.c.l.b16 %v4816
        %v4883 = vunpack.c.l.b16 %v4817
        %v4884 = vunpack.c.l.b16 %v4818
        %v4885 = vunpack.c.l.b16 %v4819
        %v4886 = vunpack.c.l.b16 %v4820
        %v4887 = vunpack.c.l.b16 %v4821
        %v4888 = vunpack.c.l.b16 %v4822
        %v4889 = vunpack.c.l.b16 %v4823
        %v4890 = vunpack.c.l.b16 %v4824
        %v4891 = vunpack.c.l.b16 %v4825
        %v4892 = vunpack.c.l.b16 %v4826
        %v4893 = vunpack.c.l.b16 %v4827
        %v4894 = vunpack.c.l.b16 %v4828
        %v4895 = vunpack.c.l.b16 %v4829
        %v4896 = vunpack.c.l.b16 %v4830
        %v4897 = vunpack.c.l.b16 %v4831
        %v4898 = vunpack.c.l.b16 %v4832
        %v4899 = vunpack.c.l.b16 %v4833
        %v4900 = vunpack.c.l.b16 %v4834
        %v4901 = vunpack.c.l.b16 %v4835
        %v4902 = vunpack.c.l.b16 %v4836
        %v4903 = vunpack.c.l.b16 %v4837
        %v4904 = vunpack.c.l.b16 %v4838
        %v4905 = vunpack.c.l.b16 %v4839
        %v4906 = vunpack.c.l.b16 %v4840
        %v4907 = vunpack.c.l.b16 %v4841
        %v4908 = vunpack.c.l.b16 %v4842
        %v4909 = vunpack.c.l.b16 %v4843
        %v4910 = vunpack.c.l.b16 %v4844
        %v4911 = vunpack.c.l.b16 %v4845
        %v4912 = vunpack.c.l.b16 %v4846
        %v4913 = vunpack.c.l.b16 %v4847
        %v4914 = vpack.c.b16 %v4883, %v4882
        %v4915 = vpack.c.b16 %v4885, %v4884
        %v4916 = vpack.c.b16 %v4887, %v4886
        %v4917 = vpack.c.b16 %v4889, %v4888
        %v4918 = vpack.c.b16 %v4891, %v4890
        %v4919 = vpack.c.b16 %v4893, %v4892
        %v4920 = vpack.c.b16 %v4895, %v4894
        %v4921 = vpack.c.b16 %v4897, %v4896
        %v4922 = vpack.c.b16 %v4899, %v4898
        %v4923 = vpack.c.b16 %v4901, %v4900
        %v4924 = vpack.c.b16 %v4903, %v4902
        %v4925 = vpack.c.b16 %v4905, %v4904
        %v4926 = vpack.c.b16 %v4907, %v4906
        %v4927 = vpack.c.b16 %v4909, %v4908
        %v4928 = vpack.c.b16 %v4911, %v4910
        %v4929 = vpack.c.b16 %v4913, %v4912
        %v4931 = vsel %vm1544, %v4914, 0
        %v4934 = vsel %vm1544, %v4915, 0
        %v4937 = vsel %vm1544, %v4916, 0
        %v4940 = vsel %vm1544, %v4917, 0
        %v4943 = vsel %vm1544, %v4918, 0
        %v4946 = vsel %vm1544, %v4919, 0
        %v4949 = vsel %vm1544, %v4920, 0
        %v4952 = vsel %vm1544, %v4921, 0
        %v4955 = vsel %vm1544, %v4922, 0
        %v4958 = vsel %vm1544, %v4923, 0
        %v4961 = vsel %vm1544, %v4924, 0
        %v4964 = vsel %vm1544, %v4925, 0
        %v4967 = vsel %vm1544, %v4926, 0
        %v4970 = vsel %vm1544, %v4927, 0
        %v4973 = vsel %vm1544, %v4928, 0
        %v4976 = vsel %vm1544, %v4929, 0
        %v4979 = vsel %vm1593, %v4849, 0
        %4981 = vmatprep.subr.bf16.mxu0 0
        %4982 = vmatpush1.bf16.msra.mxu0 0
        %4983 = vmatprep.subr.bf16.mxu0 0
        %4984 = vmatpush1.bf16.msra.mxu0 0
        %4985 = vmatprep.subr.bf16.mxu0 0
        %4986 = vmatpush1.bf16.msra.mxu0 0
        %4987 = vmatprep.subr.bf16.mxu0 0
        %4988 = vmatpush1.bf16.msra.mxu0 0
        %4989 = vmatprep.subr.bf16.mxu0 0
        %4990 = vmatpush1.bf16.msra.mxu0 0
        %4991 = vmatprep.subr.bf16.mxu0 0
        %4992 = vmatpush1.bf16.msra.mxu0 0
        %4993 = vmatprep.subr.bf16.mxu0 0
        %4994 = vmatpush1.bf16.msra.mxu0 0
        %4995 = vmatprep.subr.bf16.mxu0 0
        %4996 = vmatpush1.bf16.msra.mxu0 %v4979
        %4997 = vmatprep.subr.bf16.mxu0 0
        %4998 = vmatpush2.bf16.msra.mxu0 0
        %4999 = vmatprep.subr.bf16.mxu0 0
        %5000 = vmatpush2.bf16.msra.mxu0 0
        %5001 = vmatprep.subr.bf16.mxu0 0
        %5002 = vmatpush2.bf16.msra.mxu0 0
        %5003 = vmatprep.subr.bf16.mxu0 0
        %5004 = vmatpush2.bf16.msra.mxu0 0
        %5005 = vmatprep.subr.bf16.mxu0 0
        %5006 = vmatpush2.bf16.msra.mxu0 0
        %5007 = vmatprep.subr.bf16.mxu0 0
        %5008 = vmatpush2.bf16.msra.mxu0 0
        %5009 = vmatprep.subr.bf16.mxu0 0
        %5010 = vmatpush2.bf16.msra.mxu0 0
        %5011 = vmatprep.subr.bf16.mxu0 0
        %5012 = vmatpush2.bf16.msra.mxu0 0
        %5013 = vmatprep.mubr.bf16.mxu0 0
        %5014 = vmatmul.mubr.bf16.gmra.mxu0 %v4931
        %v5015 = vpop.f32.mrf.mxu0
        %v5016 = vadd.f32 0.0, %v5015
        %v5017 = vpop.f32.mrf.mxu0
        %v5018 = vpop.f32.mrf.mxu0
        %v5019 = vadd.f32 0.0, %v5018
        %v5020 = vpop.f32.mrf.mxu0
        %5021 = vmatprep.mubr.bf16.mxu0 0
        %5022 = vmatmul.mubr.bf16.gmra.mxu0 %v4934
        %v5023 = vpop.f32.mrf.mxu0
        %v5024 = vadd.f32 0.0, %v5023
        %v5025 = vpop.f32.mrf.mxu0
        %v5026 = vpop.f32.mrf.mxu0
        %v5027 = vadd.f32 0.0, %v5026
        %v5028 = vpop.f32.mrf.mxu0
        %5029 = vmatprep.mubr.bf16.mxu0 0
        %5030 = vmatmul.mubr.bf16.gmra.mxu0 %v4937
        %v5031 = vpop.f32.mrf.mxu0
        %v5032 = vadd.f32 0.0, %v5031
        %v5033 = vpop.f32.mrf.mxu0
        %v5034 = vpop.f32.mrf.mxu0
        %v5035 = vadd.f32 0.0, %v5034
        %v5036 = vpop.f32.mrf.mxu0
        %5037 = vmatprep.mubr.bf16.mxu0 0
        %5038 = vmatmul.mubr.bf16.gmra.mxu0 %v4940
        %v5039 = vpop.f32.mrf.mxu0
        %v5040 = vadd.f32 0.0, %v5039
        %v5041 = vpop.f32.mrf.mxu0
        %v5042 = vpop.f32.mrf.mxu0
        %v5043 = vadd.f32 0.0, %v5042
        %v5044 = vpop.f32.mrf.mxu0
        %5045 = vmatprep.mubr.bf16.mxu0 0
        %5046 = vmatmul.mubr.bf16.gmra.mxu0 %v4943
        %v5047 = vpop.f32.mrf.mxu0
        %v5048 = vadd.f32 0.0, %v5047
        %v5049 = vpop.f32.mrf.mxu0
        %v5050 = vpop.f32.mrf.mxu0
        %v5051 = vadd.f32 0.0, %v5050
        %v5052 = vpop.f32.mrf.mxu0
        %5053 = vmatprep.mubr.bf16.mxu0 0
        %5054 = vmatmul.mubr.bf16.gmra.mxu0 %v4946
        %v5055 = vpop.f32.mrf.mxu0
        %v5056 = vadd.f32 0.0, %v5055
        %v5057 = vpop.f32.mrf.mxu0
        %v5058 = vpop.f32.mrf.mxu0
        %v5059 = vadd.f32 0.0, %v5058
        %v5060 = vpop.f32.mrf.mxu0
        %5061 = vmatprep.mubr.bf16.mxu0 0
        %5062 = vmatmul.mubr.bf16.gmra.mxu0 %v4949
        %v5063 = vpop.f32.mrf.mxu0
        %v5064 = vadd.f32 0.0, %v5063
        %v5065 = vpop.f32.mrf.mxu0
        %v5066 = vpop.f32.mrf.mxu0
        %v5067 = vadd.f32 0.0, %v5066
        %v5068 = vpop.f32.mrf.mxu0
        %5069 = vmatprep.mubr.bf16.mxu0 0
        %5070 = vmatmul.mubr.bf16.gmra.mxu0 %v4952
        %v5071 = vpop.f32.mrf.mxu0
        %v5072 = vadd.f32 0.0, %v5071
        %v5073 = vpop.f32.mrf.mxu0
        %v5074 = vpop.f32.mrf.mxu0
        %v5075 = vadd.f32 0.0, %v5074
        %v5076 = vpop.f32.mrf.mxu0
        %5077 = vmatprep.mubr.bf16.mxu0 0
        %5078 = vmatmul.mubr.bf16.gmra.mxu0 %v4955
        %v5079 = vpop.f32.mrf.mxu0
        %v5080 = vadd.f32 0.0, %v5079
        %v5081 = vpop.f32.mrf.mxu0
        %v5082 = vpop.f32.mrf.mxu0
        %v5083 = vadd.f32 0.0, %v5082
        %v5084 = vpop.f32.mrf.mxu0
        %5085 = vmatprep.mubr.bf16.mxu0 0
        %5086 = vmatmul.mubr.bf16.gmra.mxu0 %v4958
        %v5087 = vpop.f32.mrf.mxu0
        %v5088 = vadd.f32 0.0, %v5087
        %v5089 = vpop.f32.mrf.mxu0
        %v5090 = vpop.f32.mrf.mxu0
        %v5091 = vadd.f32 0.0, %v5090
        %v5092 = vpop.f32.mrf.mxu0
        %5093 = vmatprep.mubr.bf16.mxu0 0
        %5094 = vmatmul.mubr.bf16.gmra.mxu0 %v4961
        %v5095 = vpop.f32.mrf.mxu0
        %v5096 = vadd.f32 0.0, %v5095
        %v5097 = vpop.f32.mrf.mxu0
        %v5098 = vpop.f32.mrf.mxu0
        %v5099 = vadd.f32 0.0, %v5098
        %v5100 = vpop.f32.mrf.mxu0
        %5101 = vmatprep.mubr.bf16.mxu0 0
        %5102 = vmatmul.mubr.bf16.gmra.mxu0 %v4964
        %v5103 = vpop.f32.mrf.mxu0
        %v5104 = vadd.f32 0.0, %v5103
        %v5105 = vpop.f32.mrf.mxu0
        %v5106 = vpop.f32.mrf.mxu0
        %v5107 = vadd.f32 0.0, %v5106
        %v5108 = vpop.f32.mrf.mxu0
        %5109 = vmatprep.mubr.bf16.mxu0 0
        %5110 = vmatmul.mubr.bf16.gmra.mxu0 %v4967
        %v5111 = vpop.f32.mrf.mxu0
        %v5112 = vadd.f32 0.0, %v5111
        %v5113 = vpop.f32.mrf.mxu0
        %v5114 = vpop.f32.mrf.mxu0
        %v5115 = vadd.f32 0.0, %v5114
        %v5116 = vpop.f32.mrf.mxu0
        %5117 = vmatprep.mubr.bf16.mxu0 0
        %5118 = vmatmul.mubr.bf16.gmra.mxu0 %v4970
        %v5119 = vpop.f32.mrf.mxu0
        %v5120 = vadd.f32 0.0, %v5119
        %v5121 = vpop.f32.mrf.mxu0
        %v5122 = vpop.f32.mrf.mxu0
        %v5123 = vadd.f32 0.0, %v5122
        %v5124 = vpop.f32.mrf.mxu0
        %5125 = vmatprep.mubr.bf16.mxu0 0
        %5126 = vmatmul.mubr.bf16.gmra.mxu0 %v4973
        %v5127 = vpop.f32.mrf.mxu0
        %v5128 = vadd.f32 0.0, %v5127
        %v5129 = vpop.f32.mrf.mxu0
        %v5130 = vpop.f32.mrf.mxu0
        %v5131 = vadd.f32 0.0, %v5130
        %v5132 = vpop.f32.mrf.mxu0
        %5133 = vmatprep.mubr.bf16.mxu0 0
        %5134 = vmatmul.mubr.bf16.gmra.mxu0 %v4976
        %v5135 = vpop.f32.mrf.mxu0
        %v5136 = vadd.f32 0.0, %v5135
        %v5137 = vpop.f32.mrf.mxu0
        %v5138 = vpop.f32.mrf.mxu0
        %v5139 = vadd.f32 0.0, %v5138
        %v5140 = vpop.f32.mrf.mxu0
        %5141 = vdwg.mxu0
        %v5142 = vadd.f32 %v4783, %v5016
        %v5143 = vadd.f32 %v4784, %v5019
        %v5144 = vadd.f32 %v4785, %v5024
        %v5145 = vadd.f32 %v4786, %v5027
        %v5146 = vadd.f32 %v4787, %v5032
        %v5147 = vadd.f32 %v4788, %v5035
        %v5148 = vadd.f32 %v4789, %v5040
        %v5149 = vadd.f32 %v4790, %v5043
        %v5150 = vadd.f32 %v4791, %v5048
        %v5151 = vadd.f32 %v4792, %v5051
        %v5152 = vadd.f32 %v4793, %v5056
        %v5153 = vadd.f32 %v4794, %v5059
        %v5154 = vadd.f32 %v4795, %v5064
        %v5155 = vadd.f32 %v4796, %v5067
        %v5156 = vadd.f32 %v4797, %v5072
        %v5157 = vadd.f32 %v4798, %v5075
        %v5158 = vadd.f32 %v4799, %v5080
        %v5159 = vadd.f32 %v4800, %v5083
        %v5160 = vadd.f32 %v4801, %v5088
        %v5161 = vadd.f32 %v4802, %v5091
        %v5162 = vadd.f32 %v4803, %v5096
        %v5163 = vadd.f32 %v4804, %v5099
        %v5164 = vadd.f32 %v4805, %v5104
        %v5165 = vadd.f32 %v4806, %v5107
        %v5166 = vadd.f32 %v4807, %v5112
        %v5167 = vadd.f32 %v4808, %v5115
        %v5168 = vadd.f32 %v4809, %v5120
        %v5169 = vadd.f32 %v4810, %v5123
        %v5170 = vadd.f32 %v4811, %v5128
        %v5171 = vadd.f32 %v4812, %v5131
        %v5172 = vadd.f32 %v4813, %v5136
        %v5173 = vadd.f32 %v4814, %v5139
        %5174 = vst.msk [vmem:[#allocation2] sm:$0xff] %vm1366, %v5142
        %5175 = vst.msk [vmem:[#allocation2 + $0x8] sm:$0xff] %vm1366, %v5143
        %5176 = vst.msk [vmem:[#allocation2 + $0x10] sm:$0xff] %vm1366, %v5144
        %5177 = vst.msk [vmem:[#allocation2 + $0x18] sm:$0xff] %vm1366, %v5145
        %5178 = vst.msk [vmem:[#allocation2 + $0x20] sm:$0xff] %vm1366, %v5146
        %5179 = vst.msk [vmem:[#allocation2 + $0x28] sm:$0xff] %vm1366, %v5147
        %5180 = vst.msk [vmem:[#allocation2 + $0x30] sm:$0xff] %vm1366, %v5148
        %5181 = vst.msk [vmem:[#allocation2 + $0x38] sm:$0xff] %vm1366, %v5149
        %5182 = vst.msk [vmem:[#allocation2 + $0x40] sm:$0xff] %vm1366, %v5150
        %5183 = vst.msk [vmem:[#allocation2 + $0x48] sm:$0xff] %vm1366, %v5151
        %5184 = vst.msk [vmem:[#allocation2 + $0x50] sm:$0xff] %vm1366, %v5152
        %5185 = vst.msk [vmem:[#allocation2 + $0x58] sm:$0xff] %vm1366, %v5153
        %5186 = vst.msk [vmem:[#allocation2 + $0x60] sm:$0xff] %vm1366, %v5154
        %5187 = vst.msk [vmem:[#allocation2 + $0x68] sm:$0xff] %vm1366, %v5155
        %5188 = vst.msk [vmem:[#allocation2 + $0x70] sm:$0xff] %vm1366, %v5156
        %5189 = vst.msk [vmem:[#allocation2 + $0x78] sm:$0xff] %vm1366, %v5157
        %5190 = vst.msk [vmem:[#allocation2 + $0x80] sm:$0xff] %vm1366, %v5158
        %5191 = vst.msk [vmem:[#allocation2 + $0x88] sm:$0xff] %vm1366, %v5159
        %5192 = vst.msk [vmem:[#allocation2 + $0x90] sm:$0xff] %vm1366, %v5160
        %5193 = vst.msk [vmem:[#allocation2 + $0x98] sm:$0xff] %vm1366, %v5161
        %5194 = vst.msk [vmem:[#allocation2 + $0xa0] sm:$0xff] %vm1366, %v5162
        %5195 = vst.msk [vmem:[#allocation2 + $0xa8] sm:$0xff] %vm1366, %v5163
        %5196 = vst.msk [vmem:[#allocation2 + $0xb0] sm:$0xff] %vm1366, %v5164
        %5197 = vst.msk [vmem:[#allocation2 + $0xb8] sm:$0xff] %vm1366, %v5165
        %5198 = vst.msk [vmem:[#allocation2 + $0xc0] sm:$0xff] %vm1366, %v5166
        %5199 = vst.msk [vmem:[#allocation2 + $0xc8] sm:$0xff] %vm1366, %v5167
        %5200 = vst.msk [vmem:[#allocation2 + $0xd0] sm:$0xff] %vm1366, %v5168
        %5201 = vst.msk [vmem:[#allocation2 + $0xd8] sm:$0xff] %vm1366, %v5169
        %5202 = vst.msk [vmem:[#allocation2 + $0xe0] sm:$0xff] %vm1366, %v5170
        %5203 = vst.msk [vmem:[#allocation2 + $0xe8] sm:$0xff] %vm1366, %v5171
        %5204 = vst.msk [vmem:[#allocation2 + $0xf0] sm:$0xff] %vm1366, %v5172
        %5205 = vst.msk [vmem:[#allocation2 + $0xf8] sm:$0xff] %vm1366, %v5173
        %v5206 = vld [vmem:[#allocation2] sm:$0xff]
        %v5207 = vld [vmem:[#allocation2 + $0x8] sm:$0xff]
        %v5208 = vld [vmem:[#allocation2 + $0x10] sm:$0xff]
        %v5209 = vld [vmem:[#allocation2 + $0x18] sm:$0xff]
        %v5210 = vld [vmem:[#allocation2 + $0x20] sm:$0xff]
        %v5211 = vld [vmem:[#allocation2 + $0x28] sm:$0xff]
        %v5212 = vld [vmem:[#allocation2 + $0x30] sm:$0xff]
        %v5213 = vld [vmem:[#allocation2 + $0x38] sm:$0xff]
        %v5214 = vld [vmem:[#allocation2 + $0x40] sm:$0xff]
        %v5215 = vld [vmem:[#allocation2 + $0x48] sm:$0xff]
        %v5216 = vld [vmem:[#allocation2 + $0x50] sm:$0xff]
        %v5217 = vld [vmem:[#allocation2 + $0x58] sm:$0xff]
        %v5218 = vld [vmem:[#allocation2 + $0x60] sm:$0xff]
        %v5219 = vld [vmem:[#allocation2 + $0x68] sm:$0xff]
        %v5220 = vld [vmem:[#allocation2 + $0x70] sm:$0xff]
        %v5221 = vld [vmem:[#allocation2 + $0x78] sm:$0xff]
        %v5222 = vld [vmem:[#allocation2 + $0x80] sm:$0xff]
        %v5223 = vld [vmem:[#allocation2 + $0x88] sm:$0xff]
        %v5224 = vld [vmem:[#allocation2 + $0x90] sm:$0xff]
        %v5225 = vld [vmem:[#allocation2 + $0x98] sm:$0xff]
        %v5226 = vld [vmem:[#allocation2 + $0xa0] sm:$0xff]
        %v5227 = vld [vmem:[#allocation2 + $0xa8] sm:$0xff]
        %v5228 = vld [vmem:[#allocation2 + $0xb0] sm:$0xff]
        %v5229 = vld [vmem:[#allocation2 + $0xb8] sm:$0xff]
        %v5230 = vld [vmem:[#allocation2 + $0xc0] sm:$0xff]
        %v5231 = vld [vmem:[#allocation2 + $0xc8] sm:$0xff]
        %v5232 = vld [vmem:[#allocation2 + $0xd0] sm:$0xff]
        %v5233 = vld [vmem:[#allocation2 + $0xd8] sm:$0xff]
        %v5234 = vld [vmem:[#allocation2 + $0xe0] sm:$0xff]
        %v5235 = vld [vmem:[#allocation2 + $0xe8] sm:$0xff]
        %v5236 = vld [vmem:[#allocation2 + $0xf0] sm:$0xff]
        %v5237 = vld [vmem:[#allocation2 + $0xf8] sm:$0xff]
        %v5238 = vld [vmem:[%s2] sm:$0x1]
        %v5240 = vlaneseq
        %v5241 = vshrl.u32 %v5240, 7
        %v5242 = vsub.s32 0, %v5241
        %v5243 = vrot.slane %v5238, %v5242
        %v5245 = vadd.f32 %v5206, %v5243
        %v5246 = vadd.f32 %v5207, %v5243
        %v5247 = vadd.f32 %v5208, %v5243
        %v5248 = vadd.f32 %v5209, %v5243
        %v5249 = vadd.f32 %v5210, %v5243
        %v5250 = vadd.f32 %v5211, %v5243
        %v5251 = vadd.f32 %v5212, %v5243
        %v5252 = vadd.f32 %v5213, %v5243
        %v5253 = vadd.f32 %v5214, %v5243
        %v5254 = vadd.f32 %v5215, %v5243
        %v5255 = vadd.f32 %v5216, %v5243
        %v5256 = vadd.f32 %v5217, %v5243
        %v5257 = vadd.f32 %v5218, %v5243
        %v5258 = vadd.f32 %v5219, %v5243
        %v5259 = vadd.f32 %v5220, %v5243
        %v5260 = vadd.f32 %v5221, %v5243
        %v5261 = vadd.f32 %v5222, %v5243
        %v5262 = vadd.f32 %v5223, %v5243
        %v5263 = vadd.f32 %v5224, %v5243
        %v5264 = vadd.f32 %v5225, %v5243
        %v5265 = vadd.f32 %v5226, %v5243
        %v5266 = vadd.f32 %v5227, %v5243
        %v5267 = vadd.f32 %v5228, %v5243
        %v5268 = vadd.f32 %v5229, %v5243
        %v5269 = vadd.f32 %v5230, %v5243
        %v5270 = vadd.f32 %v5231, %v5243
        %v5271 = vadd.f32 %v5232, %v5243
        %v5272 = vadd.f32 %v5233, %v5243
        %v5273 = vadd.f32 %v5234, %v5243
        %v5274 = vadd.f32 %v5235, %v5243
        %v5275 = vadd.f32 %v5236, %v5243
        %v5276 = vadd.f32 %v5237, %v5243
        %5277 = vst.msk [vmem:[%s1363] sm:$0xff] %vm1366, %v5245
        %5278 = vst.msk [vmem:[%s1363 + $0x8] sm:$0xff] %vm1366, %v5246
        %5279 = vst.msk [vmem:[%s1363 + $0x10] sm:$0xff] %vm1366, %v5247
        %5280 = vst.msk [vmem:[%s1363 + $0x18] sm:$0xff] %vm1366, %v5248
        %5281 = vst.msk [vmem:[%s1363 + $0x20] sm:$0xff] %vm1366, %v5249
        %5282 = vst.msk [vmem:[%s1363 + $0x28] sm:$0xff] %vm1366, %v5250
        %5283 = vst.msk [vmem:[%s1363 + $0x30] sm:$0xff] %vm1366, %v5251
        %5284 = vst.msk [vmem:[%s1363 + $0x38] sm:$0xff] %vm1366, %v5252
        %5285 = vst.msk [vmem:[%s1363 + $0x40] sm:$0xff] %vm1366, %v5253
        %5286 = vst.msk [vmem:[%s1363 + $0x48] sm:$0xff] %vm1366, %v5254
        %5287 = vst.msk [vmem:[%s1363 + $0x50] sm:$0xff] %vm1366, %v5255
        %5288 = vst.msk [vmem:[%s1363 + $0x58] sm:$0xff] %vm1366, %v5256
        %5289 = vst.msk [vmem:[%s1363 + $0x60] sm:$0xff] %vm1366, %v5257
        %5290 = vst.msk [vmem:[%s1363 + $0x68] sm:$0xff] %vm1366, %v5258
        %5291 = vst.msk [vmem:[%s1363 + $0x70] sm:$0xff] %vm1366, %v5259
        %5292 = vst.msk [vmem:[%s1363 + $0x78] sm:$0xff] %vm1366, %v5260
        %5293 = vst.msk [vmem:[%s1363 + $0x80] sm:$0xff] %vm1366, %v5261
        %5294 = vst.msk [vmem:[%s1363 + $0x88] sm:$0xff] %vm1366, %v5262
        %5295 = vst.msk [vmem:[%s1363 + $0x90] sm:$0xff] %vm1366, %v5263
        %5296 = vst.msk [vmem:[%s1363 + $0x98] sm:$0xff] %vm1366, %v5264
        %5297 = vst.msk [vmem:[%s1363 + $0xa0] sm:$0xff] %vm1366, %v5265
        %5298 = vst.msk [vmem:[%s1363 + $0xa8] sm:$0xff] %vm1366, %v5266
        %5299 = vst.msk [vmem:[%s1363 + $0xb0] sm:$0xff] %vm1366, %v5267
        %5300 = vst.msk [vmem:[%s1363 + $0xb8] sm:$0xff] %vm1366, %v5268
        %5301 = vst.msk [vmem:[%s1363 + $0xc0] sm:$0xff] %vm1366, %v5269
        %5302 = vst.msk [vmem:[%s1363 + $0xc8] sm:$0xff] %vm1366, %v5270
        %5303 = vst.msk [vmem:[%s1363 + $0xd0] sm:$0xff] %vm1366, %v5271
        %5304 = vst.msk [vmem:[%s1363 + $0xd8] sm:$0xff] %vm1366, %v5272
        %5305 = vst.msk [vmem:[%s1363 + $0xe0] sm:$0xff] %vm1366, %v5273
        %5306 = vst.msk [vmem:[%s1363 + $0xe8] sm:$0xff] %vm1366, %v5274
        %5307 = vst.msk [vmem:[%s1363 + $0xf0] sm:$0xff] %vm1366, %v5275
        %5308 = vst.msk [vmem:[%s1363 + $0xf8] sm:$0xff] %vm1366, %v5276
        %s5309 = smul.u32 32, %s14
        %p5310 = scmp.lt.s32.totalorder %s5309, 63
        %s5311 = scalar_select %p5310, %s5309, 63
        %s5312 = smul.addr %s5311, 8
        %s5313 = scalar_lea.vmem %s3, %s5312
        // Predicated region
        $region74: #{tpu_custom_call.1} parent=68 // pred_check
          %p5314 = pneg %p100
        $region75: #{tpu_custom_call.1} parent=68 // pred_check_branch
          %5316 = sbr.rel (%p5314) target = $region77
        $region76: #{tpu_custom_call.1} parent=68 // pred_region
          %s5317 = smul.u32 32, %s14
        $region77: #{tpu_custom_call.1} parent=68 // pred_fallthru
          _
      $region69: #{tpu_custom_call.1} parent=5 // pred_fallthru
        _
      %p5318 = scmp.le.s32.totalorder 2, %s9
      // Predicated region
      $region78: #{tpu_custom_call.1} parent=5 // pred_check
        %p5319 = pneg %p5318
      $region79: #{tpu_custom_call.1} parent=5 // pred_check_branch
        %5321 = sbr.rel (%p5319) target = $region81
      $region80: #{tpu_custom_call.1} parent=5 // pred_region
        %s5322 = ssub.s32 %s9, 2
        // Predicated region
        $region82: #{tpu_custom_call.1} parent=80 // pred_check
          %p5323 = pneg %p106
        $region83: #{tpu_custom_call.1} parent=80 // pred_check_branch
          %5325 = sbr.rel (%p5323) target = $region85
        $region84: #{tpu_custom_call.1} parent=80 // pred_region
          %s5326 = smul.u32 32, %s15
          %p5327 = scmp.lt.s32.totalorder %s5326, 63
          %s5328 = scalar_select %p5327, %s5326, 63
          %s5329 = smul.addr %s5328, 8
          %s5330 = scalar_lea.vmem %s3, %s5329
        $region85: #{tpu_custom_call.1} parent=80 // pred_fallthru
          _
      $region81: #{tpu_custom_call.1} parent=5 // pred_fallthru
        _
    $region6: #{tpu_custom_call.1} parent=1 // loop_footer
      %s13 = sadd.s32 1, %s9
    $region7: #{tpu_custom_call.1} parent=1 // loop_footer_branch
      %8 = sbr.rel target = $region3
    $region8: #{tpu_custom_call.1} parent=1 // loop_exit
      _

</llo_original>
